<compile_context>
chip_gen: v6e
topology: v6e:2x2x1
jax: 0.10.0
libtpu: 0.0.40
codegen_flags: <defaults>
</compile_context>

<pallas_src>
import functools

import numpy as np
import jax
import jax.numpy as jnp
from jax.experimental import pallas as pl
from jax.experimental.pallas import tpu as pltpu


# ----------------------------------------------------------------------------
# bilinear 2x upsample operators, align_corners=True
# ----------------------------------------------------------------------------
def _bilinear_matrix(n_in, n_out):
    """(n_out, n_in) 1-D bilinear interpolation matrix, align_corners=True."""
    w = np.zeros((n_out, n_in), dtype=np.float32)
    if n_in == 1:
        w[:, 0] = 1.0
        return w
    for i in range(n_out):
        src = i * (n_in - 1) / (n_out - 1)
        i0 = int(np.floor(src))
        i1 = min(i0 + 1, n_in - 1)
        frac = src - i0
        w[i, i0] += 1.0 - frac
        w[i, i1] += frac
    return w


# ----------------------------------------------------------------------------
# fused kernel: upsample(x1) + F.pad + concat([x2, x1]) + DoubleConv
# layout inside the kernel: (H, W*C) -- W and C flattened into the lane axis.
# ----------------------------------------------------------------------------
def _up_fused_kernel(x1_ref, x2_ref, wupw_ref, wh_ref,
                     w1a_ref, w1b_ref, s1_ref, b1_ref,
                     w2_ref, s2_ref, b2_ref,
                     o_ref,
                     x2p_ref, upp_ref, y1p_ref,
                     *, H1, W1, C1, C2, Cmid, Cout, Hs, Ws,
                     pad_top, pad_left):
    f32 = jnp.float32
    H2, W2 = 2 * H1, 2 * W1

    # Zero the halo-padded VMEM staging buffers.  Their zero borders realize
    # both the conv padding=1 halo and the module's F.pad of the upsampled x1,
    # so no jnp.pad / jnp.concatenate HBM round trips are needed.
    x2p_ref[...] = jnp.zeros_like(x2p_ref)
    upp_ref[...] = jnp.zeros_like(upp_ref)
    y1p_ref[...] = jnp.zeros_like(y1p_ref)

    # ---- bilinear 2x upsample of x1 (align_corners=True) --------------------
    # Lane-dense, no per-channel loop: column interpolation is one matmul
    # against a block-diagonal (W1*C1, W2*C1) operator, row interpolation is
    # (H2, H1) @ (H1, W2*C1).
    x1f = x1_ref[0].astype(f32)                                    # (H1, W1*C1)
    t = jnp.dot(x1f, wupw_ref[...], preferred_element_type=f32)    # (H1, W2*C1)
    up = jnp.dot(wh_ref[...], t, preferred_element_type=f32)       # (H2, W2*C1)

    # Place upsampled x1 in its zero buffer: +1 conv halo plus the module's
    # F.pad offsets (quirky diff_h/diff_w axis assignment preserved).
    r0 = 1 + pad_top
    c0 = (1 + pad_left) * C1
    upp_ref[r0:r0 + H2, c0:c0 + W2 * C1] = up.astype(upp_ref.dtype)

    # x2 in its zero (+1 halo) buffer.
    x2p_ref[1:1 + Hs, C2:C2 + Ws * C2] = x2_ref[0].astype(x2p_ref.dtype)

    # ---- conv1 (3x3, pad=1, no bias) over concat([x2, up(x1)]) + BN + ReLU ---
    # Channel concat is realized as two partial matmuls per tap (w1 split into
    # its x2-channel and x1-channel halves).  bf16 operands, f32 accumulate.
    acc1 = jnp.zeros((Hs, Ws * Cmid), f32)
    for dy in range(3):
        for dx in range(3):
            tap = dy * 3 + dx
            pa = x2p_ref[dy:dy + Hs, dx * C2:(dx + Ws) * C2]
            pb = upp_ref[dy:dy + Hs, dx * C1:(dx + Ws) * C1]
            acc1 = acc1 + jnp.dot(pa, w1a_ref[tap], preferred_element_type=f32)
            acc1 = acc1 + jnp.dot(pb, w1b_ref[tap], preferred_element_type=f32)
    y1 = jnp.maximum(acc1 * s1_ref[...] + b1_ref[...], 0.0)

    # Stage conv1 output (with halo) in VMEM for conv2 -- never touches HBM.
    y1p_ref[1:1 + Hs, Cmid:Cmid + Ws * Cmid] = y1.astype(y1p_ref.dtype)

    # ---- conv2 (3x3, pad=1, no bias) + BN + ReLU -----------------------------
    acc2 = jnp.zeros((Hs, Ws * Cout), f32)
    for dy in range(3):
        for dx in range(3):
            tap = dy * 3 + dx
            p = y1p_ref[dy:dy + Hs, dx * Cmid:(dx + Ws) * Cmid]
            acc2 = acc2 + jnp.dot(p, w2_ref[tap], preferred_element_type=f32)
    y2 = jnp.maximum(acc2 * s2_ref[...] + b2_ref[...], 0.0)

    # Lane-dense store: output block minor dim is Ws*Cout.
    o_ref[0] = y2.astype(o_ref.dtype)


# ----------------------------------------------------------------------------
# Up.forward wrapper (NCHW in / NCHW out, like the PyTorch module)
# ----------------------------------------------------------------------------
def up_forward(x1_nchw, x2_nchw, params):
    B, C1, H1, W1 = x1_nchw.shape
    Bx, C2, Hs, Ws = x2_nchw.shape
    assert B == Bx
    w1, w2 = params["w1"], params["w2"]          # (3,3,Cin,Cmid), (3,3,Cmid,Cout)
    Cin, Cmid = w1.shape[2], w1.shape[3]
    Cout = w2.shape[3]
    assert Cin == C1 + C2 and w2.shape[2] == Cmid

    H2, W2 = 2 * H1, 2 * W1
    # The reference module's F.pad pads the W axis with the H-difference pair
    # and the H axis with the W-difference pair (its diff_h/diff_w quirk) --
    # reproduced exactly.  (Both diffs are 0 in the demo.)
    diff_h = Hs - H2
    diff_w = Ws - W2
    pad_top, pad_bot = diff_w // 2, diff_w - diff_w // 2      # H axis
    pad_left, pad_right = diff_h // 2, diff_h - diff_h // 2   # W axis
    assert H2 + pad_top + pad_bot == Hs and W2 + pad_left + pad_right == Ws

    # NCHW -> NHWC with (W, C) flattened into one lane-dense minor dim (the
    # reshape after the transpose is a free row-major view).
    x1f = jnp.transpose(x1_nchw, (0, 2, 3, 1)).reshape(B, H1, W1 * C1)
    x2f = jnp.transpose(x2_nchw, (0, 2, 3, 1)).reshape(B, Hs, Ws * C2)

    # Upsample operators (align_corners=True).
    wh = jnp.asarray(_bilinear_matrix(H1, H2))                  # (H2, H1)
    ww = jnp.asarray(_bilinear_matrix(W1, W2))                  # (W2, W1)
    # block-diagonal column-interp operator on the flattened (W*C) layout
    wupw = jnp.einsum("vw,cd->wcvd", ww, jnp.eye(C1, dtype=jnp.float32))
    wupw = wupw.reshape(W1 * C1, W2 * C1)

    # Per-tap block-diagonal kron(I_W, w_tap) conv operators (bf16).
    def kron_taps(w_hwio, width):
        kh, kw, ci, co = w_hwio.shape
        w9 = w_hwio.reshape(kh * kw, ci, co).astype(jnp.float32)
        eye = jnp.eye(width, dtype=jnp.float32)
        k = jnp.einsum("wv,tio->twivo", eye, w9)
        return k.reshape(kh * kw, width * ci, width * co).astype(jnp.bfloat16)

    w1a = kron_taps(w1[:, :, :C2, :], Ws)   # x2 channels come first in concat
    w1b = kron_taps(w1[:, :, C2:, :], Ws)   # then the upsampled-x1 channels
    w2k = kron_taps(w2, Ws)

    # Folded BN scale/shift, tiled across W to broadcast over (W*C) lanes.
    s1 = jnp.tile(params["scale1"], Ws).reshape(1, Ws * Cmid).astype(jnp.float32)
    b1 = jnp.tile(params["bias1"], Ws).reshape(1, Ws * Cmid).astype(jnp.float32)
    s2 = jnp.tile(params["scale2"], Ws).reshape(1, Ws * Cout).astype(jnp.float32)
    b2 = jnp.tile(params["bias2"], Ws).reshape(1, Ws * Cout).astype(jnp.float32)

    kernel = functools.partial(
        _up_fused_kernel,
        H1=H1, W1=W1, C1=C1, C2=C2, Cmid=Cmid, Cout=Cout, Hs=Hs, Ws=Ws,
        pad_top=pad_top, pad_left=pad_left)

    out_flat = pl.pallas_call(
        kernel,
        out_shape=jax.ShapeDtypeStruct((B, Hs, Ws * Cout), x2_nchw.dtype),
        grid=(B,),
        in_specs=[
            pl.BlockSpec((1, H1, W1 * C1), lambda b: (b, 0, 0)),
            pl.BlockSpec((1, Hs, Ws * C2), lambda b: (b, 0, 0)),
            pl.BlockSpec((W1 * C1, W2 * C1), lambda b: (0, 0)),
            pl.BlockSpec((H2, H1), lambda b: (0, 0)),
            pl.BlockSpec((9, Ws * C2, Ws * Cmid), lambda b: (0, 0, 0)),
            pl.BlockSpec((9, Ws * C1, Ws * Cmid), lambda b: (0, 0, 0)),
            pl.BlockSpec((1, Ws * Cmid), lambda b: (0, 0)),
            pl.BlockSpec((1, Ws * Cmid), lambda b: (0, 0)),
            pl.BlockSpec((9, Ws * Cmid, Ws * Cout), lambda b: (0, 0, 0)),
            pl.BlockSpec((1, Ws * Cout), lambda b: (0, 0)),
            pl.BlockSpec((1, Ws * Cout), lambda b: (0, 0)),
        ],
        out_specs=pl.BlockSpec((1, Hs, Ws * Cout), lambda b: (b, 0, 0)),
        scratch_shapes=[
            pltpu.VMEM((Hs + 2, (Ws + 2) * C2), jnp.bfloat16),   # padded x2
            pltpu.VMEM((Hs + 2, (Ws + 2) * C1), jnp.bfloat16),   # padded up(x1)
            pltpu.VMEM((Hs + 2, (Ws + 2) * Cmid), jnp.bfloat16), # padded conv1 out
        ],
        compiler_params=pltpu.CompilerParams(
            dimension_semantics=("parallel",)),
    )(x1f, x2f, wupw, wh, w1a, w1b, s1, b1, w2k, s2, b2)

    # (B, Hs, Ws*Cout) -> NCHW (free view + one transpose).
    return jnp.transpose(out_flat.reshape(B, Hs, Ws, Cout), (0, 3, 1, 2))


# ----------------------------------------------------------------------------
# pure-JAX reference (f32) for a sanity check
# ----------------------------------------------------------------------------
def _reference_up_forward(x1, x2, params):
    B, C1, H1, W1 = x1.shape
    H2, W2 = 2 * H1, 2 * W1
    wh = jnp.asarray(_bilinear_matrix(H1, H2))
    ww = jnp.asarray(_bilinear_matrix(W1, W2))
    x1u = jnp.einsum("Hh,bchw,Ww->bcHW", wh, x1, ww,
                     precision=jax.lax.Precision.HIGHEST)
    diff_h = x2.shape[2] - x1u.shape[2]
    diff_w = x2.shape[3] - x1u.shape[3]
    x1u = jnp.pad(x1u, ((0, 0), (0, 0),
                        (diff_w // 2, diff_w - diff_w // 2),
                        (diff_h // 2, diff_h - diff_h // 2)))
    x = jnp.concatenate([x2, x1u], axis=1)

    def conv_bn_relu(xx, w_hwio, s, b):
        w_oihw = jnp.transpose(w_hwio, (3, 2, 0, 1))
        y = jax.lax.conv_general_dilated(
            xx, w_oihw, window_strides=(1, 1), padding="SAME",
            dimension_numbers=("NCHW", "OIHW", "NCHW"))
        return jnp.maximum(y * s[None, :, None, None] + b[None, :, None, None], 0.0)

    y = conv_bn_relu(x, params["w1"], params["scale1"], params["bias1"])
    return conv_bn_relu(y, params["w2"], params["scale2"], params["bias2"])


# ----------------------------------------------------------------------------
if __name__ == "__main__":
    key = jax.random.PRNGKey(0)
    ks = jax.random.split(key, 4)

    # Up(in_channels=8, out_channels=4); mid_channels = in_channels // 2 = 4
    in_channels, out_channels = 8, 4
    mid_channels = in_channels // 2
    B, H, W = 2, 16, 16                     # x1 spatial; x2 is the 2x skip
    c1 = in_channels // 2                   # channels of x1
    c2 = in_channels - c1                   # channels of x2 (c1 + c2 = in_channels)

    x1 = jax.random.normal(ks[0], (B, c1, H, W), jnp.float32)            # NCHW
    x2 = jax.random.normal(ks[1], (B, c2, 2 * H, 2 * W), jnp.float32)    # NCHW

    # Conv weights stored as (3, 3, Cin, Cout) (PyTorch: (Cout, Cin, 3, 3)).
    w1 = 0.1 * jax.random.normal(ks[2], (3, 3, in_channels, mid_channels), jnp.float32)
    w2 = 0.1 * jax.random.normal(ks[3], (3, 3, mid_channels, out_channels), jnp.float32)

    eps = 1e-5

    def bn_fold(c):
        gamma = 1.0 + 0.1 * jnp.arange(c, dtype=jnp.float32)
        beta = 0.05 * jnp.arange(c, dtype=jnp.float32)
        mean = 0.01 * jnp.arange(c, dtype=jnp.float32)
        var = 1.0 + 0.02 * jnp.arange(c, dtype=jnp.float32)
        scale = gamma / jnp.sqrt(var + eps)
        bias = beta - mean * scale
        return scale, bias

    scale1, bias1 = bn_fold(mid_channels)
    scale2, bias2 = bn_fold(out_channels)

    params = dict(w1=w1, scale1=scale1, bias1=bias1,
                  w2=w2, scale2=scale2, bias2=bias2)

    out = jax.block_until_ready(up_forward(x1, x2, params))
    assert out.shape == (B, out_channels, 2 * H, 2 * W), out.shape

    ref = jax.block_until_ready(_reference_up_forward(x1, x2, params))
    max_err = float(jnp.max(jnp.abs(out - ref)))
    assert max_err < 5e-2, f"max abs error vs reference: {max_err}"

    print("KERNEL_OK")
</pallas_src>

<mosaic_0001>
module attributes {stable_mosaic.version = 11 : i64} {
  func.func @_up_fused_kernel(%arg0: i32, %arg1: memref<1x16x64xf32, #tpu.memory_space<vmem>>, %arg2: memref<1x32x128xf32, #tpu.memory_space<vmem>>, %arg3: memref<64x128xf32, #tpu.memory_space<vmem>>, %arg4: memref<32x16xf32, #tpu.memory_space<vmem>>, %arg5: memref<9x128x128xbf16, #tpu.memory_space<vmem>>, %arg6: memref<9x128x128xbf16, #tpu.memory_space<vmem>>, %arg7: memref<1x128xf32, #tpu.memory_space<vmem>>, %arg8: memref<1x128xf32, #tpu.memory_space<vmem>>, %arg9: memref<9x128x128xbf16, #tpu.memory_space<vmem>>, %arg10: memref<1x128xf32, #tpu.memory_space<vmem>>, %arg11: memref<1x128xf32, #tpu.memory_space<vmem>>, %arg12: memref<1x32x128xf32, #tpu.memory_space<vmem>>, %arg13: memref<34x136xbf16, #tpu.memory_space<vmem>>, %arg14: memref<34x136xbf16, #tpu.memory_space<vmem>>, %arg15: memref<34x136xbf16, #tpu.memory_space<vmem>>) attributes {dimension_semantics = [#tpu.dimension_semantics<parallel>], iteration_bounds = array<i64: 2>, scalar_prefetch = 0 : i64, scratch_operands = 3 : i64, tpu.core_type = #tpu.core_type<tc>, window_params = [{transform_indices = @transform_0, window_bounds = array<i64: 1, 16, 64>}, {transform_indices = @transform_1, window_bounds = array<i64: 1, 32, 128>}, {pipeline_mode = #tpu.pipeline_mode<synchronous>, transform_indices = @transform_2, window_bounds = array<i64: 64, 128>}, {pipeline_mode = #tpu.pipeline_mode<synchronous>, transform_indices = @transform_3, window_bounds = array<i64: 32, 16>}, {pipeline_mode = #tpu.pipeline_mode<synchronous>, transform_indices = @transform_4, window_bounds = array<i64: 9, 128, 128>}, {pipeline_mode = #tpu.pipeline_mode<synchronous>, transform_indices = @transform_5, window_bounds = array<i64: 9, 128, 128>}, {pipeline_mode = #tpu.pipeline_mode<synchronous>, transform_indices = @transform_6, window_bounds = array<i64: 1, 128>}, {pipeline_mode = #tpu.pipeline_mode<synchronous>, transform_indices = @transform_7, window_bounds = array<i64: 1, 128>}, {pipeline_mode = #tpu.pipeline_mode<synchronous>, transform_indices = @transform_8, window_bounds = array<i64: 9, 128, 128>}, {pipeline_mode = #tpu.pipeline_mode<synchronous>, transform_indices = @transform_9, window_bounds = array<i64: 1, 128>}, {pipeline_mode = #tpu.pipeline_mode<synchronous>, transform_indices = @transform_10, window_bounds = array<i64: 1, 128>}, {transform_indices = @transform_11, window_bounds = array<i64: 1, 32, 128>}]} {
    %cst = arith.constant 0.000000e+00 : bf16
    %0 = vector.broadcast %cst : bf16 to vector<34x136xbf16>
    %c0 = arith.constant 0 : index
    %c0_0 = arith.constant 0 : index
    %1 = vector.load %arg13[%c0, %c0_0] : memref<34x136xbf16, #tpu.memory_space<vmem>>, vector<34x136xbf16>
    tpu.vector_store %arg13[%c0, %c0_0], %0 {strides = array<i32>} : memref<34x136xbf16, #tpu.memory_space<vmem>>, vector<34x136xbf16>,
    %cst_1 = arith.constant 0.000000e+00 : bf16
    %2 = vector.broadcast %cst_1 : bf16 to vector<34x136xbf16>
    %c0_2 = arith.constant 0 : index
    %c0_3 = arith.constant 0 : index
    %3 = vector.load %arg14[%c0_2, %c0_3] : memref<34x136xbf16, #tpu.memory_space<vmem>>, vector<34x136xbf16>
    tpu.vector_store %arg14[%c0_2, %c0_3], %2 {strides = array<i32>} : memref<34x136xbf16, #tpu.memory_space<vmem>>, vector<34x136xbf16>,
    %cst_4 = arith.constant 0.000000e+00 : bf16
    %4 = vector.broadcast %cst_4 : bf16 to vector<34x136xbf16>
    %c0_5 = arith.constant 0 : index
    %c0_6 = arith.constant 0 : index
    %5 = vector.load %arg15[%c0_5, %c0_6] : memref<34x136xbf16, #tpu.memory_space<vmem>>, vector<34x136xbf16>
    tpu.vector_store %arg15[%c0_5, %c0_6], %4 {strides = array<i32>} : memref<34x136xbf16, #tpu.memory_space<vmem>>, vector<34x136xbf16>,
    %c0_7 = arith.constant 0 : index
    %c0_8 = arith.constant 0 : index
    %c0_9 = arith.constant 0 : index
    %6 = vector.load %arg1[%c0_7, %c0_8, %c0_9] : memref<1x16x64xf32, #tpu.memory_space<vmem>>, vector<1x16x64xf32>
    %7 = vector.shape_cast %6 : vector<1x16x64xf32> to vector<16x64xf32>
    %c0_10 = arith.constant 0 : index
    %c0_11 = arith.constant 0 : index
    %8 = vector.load %arg3[%c0_10, %c0_11] : memref<64x128xf32, #tpu.memory_space<vmem>>, vector<64x128xf32>
    %cst_12 = arith.constant dense<0.000000e+00> : vector<16x128xf32>
    %9 = tpu.matmul %7, %8, %cst_12 {dimension_numbers = #tpu.dot_dimension_numbers<[1], [0], [0], [1], [0, 0, 1, 1], [], []>} : vector<16x64xf32>, vector<64x128xf32>, vector<16x128xf32> -> vector<16x128xf32>
    %c0_13 = arith.constant 0 : index
    %c0_14 = arith.constant 0 : index
    %10 = vector.load %arg4[%c0_13, %c0_14] : memref<32x16xf32, #tpu.memory_space<vmem>>, vector<32x16xf32>
    %cst_15 = arith.constant dense<0.000000e+00> : vector<32x128xf32>
    %11 = tpu.matmul %10, %9, %cst_15 {dimension_numbers = #tpu.dot_dimension_numbers<[1], [0], [0], [1], [0, 0, 1, 1], [], []>} : vector<32x16xf32>, vector<16x128xf32>, vector<32x128xf32> -> vector<32x128xf32>
    %12 = arith.truncf %11 : vector<32x128xf32> to vector<32x128xbf16>
    %c1 = arith.constant 1 : index
    %c4 = arith.constant 4 : index
    %13 = vector.load %arg14[%c1, %c4] : memref<34x136xbf16, #tpu.memory_space<vmem>>, vector<32x128xbf16>
    tpu.vector_store %arg14[%c1, %c4], %12 {strides = array<i32>} : memref<34x136xbf16, #tpu.memory_space<vmem>>, vector<32x128xbf16>,
    %c0_16 = arith.constant 0 : index
    %c0_17 = arith.constant 0 : index
    %c0_18 = arith.constant 0 : index
    %14 = vector.load %arg2[%c0_16, %c0_17, %c0_18] : memref<1x32x128xf32, #tpu.memory_space<vmem>>, vector<1x32x128xf32>
    %15 = vector.shape_cast %14 : vector<1x32x128xf32> to vector<32x128xf32>
    %16 = arith.truncf %15 : vector<32x128xf32> to vector<32x128xbf16>
    %c1_19 = arith.constant 1 : index
    %c4_20 = arith.constant 4 : index
    %17 = vector.load %arg13[%c1_19, %c4_20] : memref<34x136xbf16, #tpu.memory_space<vmem>>, vector<32x128xbf16>
    tpu.vector_store %arg13[%c1_19, %c4_20], %16 {strides = array<i32>} : memref<34x136xbf16, #tpu.memory_space<vmem>>, vector<32x128xbf16>,
    %cst_21 = arith.constant 0.000000e+00 : f32
    %18 = vector.broadcast %cst_21 : f32 to vector<32x128xf32>
    %c0_22 = arith.constant 0 : index
    %c0_23 = arith.constant 0 : index
    %19 = vector.load %arg13[%c0_22, %c0_23] : memref<34x136xbf16, #tpu.memory_space<vmem>>, vector<32x128xbf16>
    %c0_24 = arith.constant 0 : index
    %c0_25 = arith.constant 0 : index
    %20 = vector.load %arg14[%c0_24, %c0_25] : memref<34x136xbf16, #tpu.memory_space<vmem>>, vector<32x128xbf16>
    %c0_26 = arith.constant 0 : index
    %c0_27 = arith.constant 0 : index
    %c0_28 = arith.constant 0 : index
    %21 = vector.load %arg5[%c0_26, %c0_27, %c0_28] : memref<9x128x128xbf16, #tpu.memory_space<vmem>>, vector<1x128x128xbf16>
    %22 = vector.shape_cast %21 : vector<1x128x128xbf16> to vector<128x128xbf16>
    %cst_29 = arith.constant dense<0.000000e+00> : vector<32x128xf32>
    %23 = tpu.matmul %19, %22, %cst_29 {dimension_numbers = #tpu.dot_dimension_numbers<[1], [0], [0], [1], [0, 0, 1, 1], [], []>} : vector<32x128xbf16>, vector<128x128xbf16>, vector<32x128xf32> -> vector<32x128xf32>
    %24 = arith.addf %18, %23 : vector<32x128xf32>
    %c0_30 = arith.constant 0 : index
    %c0_31 = arith.constant 0 : index
    %c0_32 = arith.constant 0 : index
    %25 = vector.load %arg6[%c0_30, %c0_31, %c0_32] : memref<9x128x128xbf16, #tpu.memory_space<vmem>>, vector<1x128x128xbf16>
    %26 = vector.shape_cast %25 : vector<1x128x128xbf16> to vector<128x128xbf16>
    %cst_33 = arith.constant dense<0.000000e+00> : vector<32x128xf32>
    %27 = tpu.matmul %20, %26, %cst_33 {dimension_numbers = #tpu.dot_dimension_numbers<[1], [0], [0], [1], [0, 0, 1, 1], [], []>} : vector<32x128xbf16>, vector<128x128xbf16>, vector<32x128xf32> -> vector<32x128xf32>
    %28 = arith.addf %24, %27 : vector<32x128xf32>
    %c0_34 = arith.constant 0 : index
    %c4_35 = arith.constant 4 : index
    %29 = vector.load %arg13[%c0_34, %c4_35] : memref<34x136xbf16, #tpu.memory_space<vmem>>, vector<32x128xbf16>
    %c0_36 = arith.constant 0 : index
    %c4_37 = arith.constant 4 : index
    %30 = vector.load %arg14[%c0_36, %c4_37] : memref<34x136xbf16, #tpu.memory_space<vmem>>, vector<32x128xbf16>
    %c1_38 = arith.constant 1 : index
    %c0_39 = arith.constant 0 : index
    %c0_40 = arith.constant 0 : index
    %31 = vector.load %arg5[%c1_38, %c0_39, %c0_40] : memref<9x128x128xbf16, #tpu.memory_space<vmem>>, vector<1x128x128xbf16>
    %32 = vector.shape_cast %31 : vector<1x128x128xbf16> to vector<128x128xbf16>
    %cst_41 = arith.constant dense<0.000000e+00> : vector<32x128xf32>
    %33 = tpu.matmul %29, %32, %cst_41 {dimension_numbers = #tpu.dot_dimension_numbers<[1], [0], [0], [1], [0, 0, 1, 1], [], []>} : vector<32x128xbf16>, vector<128x128xbf16>, vector<32x128xf32> -> vector<32x128xf32>
    %34 = arith.addf %28, %33 : vector<32x128xf32>
    %c1_42 = arith.constant 1 : index
    %c0_43 = arith.constant 0 : index
    %c0_44 = arith.constant 0 : index
    %35 = vector.load %arg6[%c1_42, %c0_43, %c0_44] : memref<9x128x128xbf16, #tpu.memory_space<vmem>>, vector<1x128x128xbf16>
    %36 = vector.shape_cast %35 : vector<1x128x128xbf16> to vector<128x128xbf16>
    %cst_45 = arith.constant dense<0.000000e+00> : vector<32x128xf32>
    %37 = tpu.matmul %30, %36, %cst_45 {dimension_numbers = #tpu.dot_dimension_numbers<[1], [0], [0], [1], [0, 0, 1, 1], [], []>} : vector<32x128xbf16>, vector<128x128xbf16>, vector<32x128xf32> -> vector<32x128xf32>
    %38 = arith.addf %34, %37 : vector<32x128xf32>
    %c0_46 = arith.constant 0 : index
    %c8 = arith.constant 8 : index
    %39 = vector.load %arg13[%c0_46, %c8] : memref<34x136xbf16, #tpu.memory_space<vmem>>, vector<32x128xbf16>
    %c0_47 = arith.constant 0 : index
    %c8_48 = arith.constant 8 : index
    %40 = vector.load %arg14[%c0_47, %c8_48] : memref<34x136xbf16, #tpu.memory_space<vmem>>, vector<32x128xbf16>
    %c2 = arith.constant 2 : index
    %c0_49 = arith.constant 0 : index
    %c0_50 = arith.constant 0 : index
    %41 = vector.load %arg5[%c2, %c0_49, %c0_50] : memref<9x128x128xbf16, #tpu.memory_space<vmem>>, vector<1x128x128xbf16>
    %42 = vector.shape_cast %41 : vector<1x128x128xbf16> to vector<128x128xbf16>
    %cst_51 = arith.constant dense<0.000000e+00> : vector<32x128xf32>
    %43 = tpu.matmul %39, %42, %cst_51 {dimension_numbers = #tpu.dot_dimension_numbers<[1], [0], [0], [1], [0, 0, 1, 1], [], []>} : vector<32x128xbf16>, vector<128x128xbf16>, vector<32x128xf32> -> vector<32x128xf32>
    %44 = arith.addf %38, %43 : vector<32x128xf32>
    %c2_52 = arith.constant 2 : index
    %c0_53 = arith.constant 0 : index
    %c0_54 = arith.constant 0 : index
    %45 = vector.load %arg6[%c2_52, %c0_53, %c0_54] : memref<9x128x128xbf16, #tpu.memory_space<vmem>>, vector<1x128x128xbf16>
    %46 = vector.shape_cast %45 : vector<1x128x128xbf16> to vector<128x128xbf16>
    %cst_55 = arith.constant dense<0.000000e+00> : vector<32x128xf32>
    %47 = tpu.matmul %40, %46, %cst_55 {dimension_numbers = #tpu.dot_dimension_numbers<[1], [0], [0], [1], [0, 0, 1, 1], [], []>} : vector<32x128xbf16>, vector<128x128xbf16>, vector<32x128xf32> -> vector<32x128xf32>
    %48 = arith.addf %44, %47 : vector<32x128xf32>
    %c1_56 = arith.constant 1 : index
    %c0_57 = arith.constant 0 : index
    %49 = vector.load %arg13[%c1_56, %c0_57] : memref<34x136xbf16, #tpu.memory_space<vmem>>, vector<32x128xbf16>
    %c1_58 = arith.constant 1 : index
    %c0_59 = arith.constant 0 : index
    %50 = vector.load %arg14[%c1_58, %c0_59] : memref<34x136xbf16, #tpu.memory_space<vmem>>, vector<32x128xbf16>
    %c3 = arith.constant 3 : index
    %c0_60 = arith.constant 0 : index
    %c0_61 = arith.constant 0 : index
    %51 = vector.load %arg5[%c3, %c0_60, %c0_61] : memref<9x128x128xbf16, #tpu.memory_space<vmem>>, vector<1x128x128xbf16>
    %52 = vector.shape_cast %51 : vector<1x128x128xbf16> to vector<128x128xbf16>
    %cst_62 = arith.constant dense<0.000000e+00> : vector<32x128xf32>
    %53 = tpu.matmul %49, %52, %cst_62 {dimension_numbers = #tpu.dot_dimension_numbers<[1], [0], [0], [1], [0, 0, 1, 1], [], []>} : vector<32x128xbf16>, vector<128x128xbf16>, vector<32x128xf32> -> vector<32x128xf32>
    %54 = arith.addf %48, %53 : vector<32x128xf32>
    %c3_63 = arith.constant 3 : index
    %c0_64 = arith.constant 0 : index
    %c0_65 = arith.constant 0 : index
    %55 = vector.load %arg6[%c3_63, %c0_64, %c0_65] : memref<9x128x128xbf16, #tpu.memory_space<vmem>>, vector<1x128x128xbf16>
    %56 = vector.shape_cast %55 : vector<1x128x128xbf16> to vector<128x128xbf16>
    %cst_66 = arith.constant dense<0.000000e+00> : vector<32x128xf32>
    %57 = tpu.matmul %50, %56, %cst_66 {dimension_numbers = #tpu.dot_dimension_numbers<[1], [0], [0], [1], [0, 0, 1, 1], [], []>} : vector<32x128xbf16>, vector<128x128xbf16>, vector<32x128xf32> -> vector<32x128xf32>
    %58 = arith.addf %54, %57 : vector<32x128xf32>
    %c1_67 = arith.constant 1 : index
    %c4_68 = arith.constant 4 : index
    %59 = vector.load %arg13[%c1_67, %c4_68] : memref<34x136xbf16, #tpu.memory_space<vmem>>, vector<32x128xbf16>
    %c1_69 = arith.constant 1 : index
    %c4_70 = arith.constant 4 : index
    %60 = vector.load %arg14[%c1_69, %c4_70] : memref<34x136xbf16, #tpu.memory_space<vmem>>, vector<32x128xbf16>
    %c4_71 = arith.constant 4 : index
    %c0_72 = arith.constant 0 : index
    %c0_73 = arith.constant 0 : index
    %61 = vector.load %arg5[%c4_71, %c0_72, %c0_73] : memref<9x128x128xbf16, #tpu.memory_space<vmem>>, vector<1x128x128xbf16>
    %62 = vector.shape_cast %61 : vector<1x128x128xbf16> to vector<128x128xbf16>
    %cst_74 = arith.constant dense<0.000000e+00> : vector<32x128xf32>
    %63 = tpu.matmul %59, %62, %cst_74 {dimension_numbers = #tpu.dot_dimension_numbers<[1], [0], [0], [1], [0, 0, 1, 1], [], []>} : vector<32x128xbf16>, vector<128x128xbf16>, vector<32x128xf32> -> vector<32x128xf32>
    %64 = arith.addf %58, %63 : vector<32x128xf32>
    %c4_75 = arith.constant 4 : index
    %c0_76 = arith.constant 0 : index
    %c0_77 = arith.constant 0 : index
    %65 = vector.load %arg6[%c4_75, %c0_76, %c0_77] : memref<9x128x128xbf16, #tpu.memory_space<vmem>>, vector<1x128x128xbf16>
    %66 = vector.shape_cast %65 : vector<1x128x128xbf16> to vector<128x128xbf16>
    %cst_78 = arith.constant dense<0.000000e+00> : vector<32x128xf32>
    %67 = tpu.matmul %60, %66, %cst_78 {dimension_numbers = #tpu.dot_dimension_numbers<[1], [0], [0], [1], [0, 0, 1, 1], [], []>} : vector<32x128xbf16>, vector<128x128xbf16>, vector<32x128xf32> -> vector<32x128xf32>
    %68 = arith.addf %64, %67 : vector<32x128xf32>
    %c1_79 = arith.constant 1 : index
    %c8_80 = arith.constant 8 : index
    %69 = vector.load %arg13[%c1_79, %c8_80] : memref<34x136xbf16, #tpu.memory_space<vmem>>, vector<32x128xbf16>
    %c1_81 = arith.constant 1 : index
    %c8_82 = arith.constant 8 : index
    %70 = vector.load %arg14[%c1_81, %c8_82] : memref<34x136xbf16, #tpu.memory_space<vmem>>, vector<32x128xbf16>
    %c5 = arith.constant 5 : index
    %c0_83 = arith.constant 0 : index
    %c0_84 = arith.constant 0 : index
    %71 = vector.load %arg5[%c5, %c0_83, %c0_84] : memref<9x128x128xbf16, #tpu.memory_space<vmem>>, vector<1x128x128xbf16>
    %72 = vector.shape_cast %71 : vector<1x128x128xbf16> to vector<128x128xbf16>
    %cst_85 = arith.constant dense<0.000000e+00> : vector<32x128xf32>
    %73 = tpu.matmul %69, %72, %cst_85 {dimension_numbers = #tpu.dot_dimension_numbers<[1], [0], [0], [1], [0, 0, 1, 1], [], []>} : vector<32x128xbf16>, vector<128x128xbf16>, vector<32x128xf32> -> vector<32x128xf32>
    %74 = arith.addf %68, %73 : vector<32x128xf32>
    %c5_86 = arith.constant 5 : index
    %c0_87 = arith.constant 0 : index
    %c0_88 = arith.constant 0 : index
    %75 = vector.load %arg6[%c5_86, %c0_87, %c0_88] : memref<9x128x128xbf16, #tpu.memory_space<vmem>>, vector<1x128x128xbf16>
    %76 = vector.shape_cast %75 : vector<1x128x128xbf16> to vector<128x128xbf16>
    %cst_89 = arith.constant dense<0.000000e+00> : vector<32x128xf32>
    %77 = tpu.matmul %70, %76, %cst_89 {dimension_numbers = #tpu.dot_dimension_numbers<[1], [0], [0], [1], [0, 0, 1, 1], [], []>} : vector<32x128xbf16>, vector<128x128xbf16>, vector<32x128xf32> -> vector<32x128xf32>
    %78 = arith.addf %74, %77 : vector<32x128xf32>
    %c2_90 = arith.constant 2 : index
    %c0_91 = arith.constant 0 : index
    %79 = vector.load %arg13[%c2_90, %c0_91] : memref<34x136xbf16, #tpu.memory_space<vmem>>, vector<32x128xbf16>
    %c2_92 = arith.constant 2 : index
    %c0_93 = arith.constant 0 : index
    %80 = vector.load %arg14[%c2_92, %c0_93] : memref<34x136xbf16, #tpu.memory_space<vmem>>, vector<32x128xbf16>
    %c6 = arith.constant 6 : index
    %c0_94 = arith.constant 0 : index
    %c0_95 = arith.constant 0 : index
    %81 = vector.load %arg5[%c6, %c0_94, %c0_95] : memref<9x128x128xbf16, #tpu.memory_space<vmem>>, vector<1x128x128xbf16>
    %82 = vector.shape_cast %81 : vector<1x128x128xbf16> to vector<128x128xbf16>
    %cst_96 = arith.constant dense<0.000000e+00> : vector<32x128xf32>
    %83 = tpu.matmul %79, %82, %cst_96 {dimension_numbers = #tpu.dot_dimension_numbers<[1], [0], [0], [1], [0, 0, 1, 1], [], []>} : vector<32x128xbf16>, vector<128x128xbf16>, vector<32x128xf32> -> vector<32x128xf32>
    %84 = arith.addf %78, %83 : vector<32x128xf32>
    %c6_97 = arith.constant 6 : index
    %c0_98 = arith.constant 0 : index
    %c0_99 = arith.constant 0 : index
    %85 = vector.load %arg6[%c6_97, %c0_98, %c0_99] : memref<9x128x128xbf16, #tpu.memory_space<vmem>>, vector<1x128x128xbf16>
    %86 = vector.shape_cast %85 : vector<1x128x128xbf16> to vector<128x128xbf16>
    %cst_100 = arith.constant dense<0.000000e+00> : vector<32x128xf32>
    %87 = tpu.matmul %80, %86, %cst_100 {dimension_numbers = #tpu.dot_dimension_numbers<[1], [0], [0], [1], [0, 0, 1, 1], [], []>} : vector<32x128xbf16>, vector<128x128xbf16>, vector<32x128xf32> -> vector<32x128xf32>
    %88 = arith.addf %84, %87 : vector<32x128xf32>
    %c2_101 = arith.constant 2 : index
    %c4_102 = arith.constant 4 : index
    %89 = vector.load %arg13[%c2_101, %c4_102] : memref<34x136xbf16, #tpu.memory_space<vmem>>, vector<32x128xbf16>
    %c2_103 = arith.constant 2 : index
    %c4_104 = arith.constant 4 : index
    %90 = vector.load %arg14[%c2_103, %c4_104] : memref<34x136xbf16, #tpu.memory_space<vmem>>, vector<32x128xbf16>
    %c7 = arith.constant 7 : index
    %c0_105 = arith.constant 0 : index
    %c0_106 = arith.constant 0 : index
    %91 = vector.load %arg5[%c7, %c0_105, %c0_106] : memref<9x128x128xbf16, #tpu.memory_space<vmem>>, vector<1x128x128xbf16>
    %92 = vector.shape_cast %91 : vector<1x128x128xbf16> to vector<128x128xbf16>
    %cst_107 = arith.constant dense<0.000000e+00> : vector<32x128xf32>
    %93 = tpu.matmul %89, %92, %cst_107 {dimension_numbers = #tpu.dot_dimension_numbers<[1], [0], [0], [1], [0, 0, 1, 1], [], []>} : vector<32x128xbf16>, vector<128x128xbf16>, vector<32x128xf32> -> vector<32x128xf32>
    %94 = arith.addf %88, %93 : vector<32x128xf32>
    %c7_108 = arith.constant 7 : index
    %c0_109 = arith.constant 0 : index
    %c0_110 = arith.constant 0 : index
    %95 = vector.load %arg6[%c7_108, %c0_109, %c0_110] : memref<9x128x128xbf16, #tpu.memory_space<vmem>>, vector<1x128x128xbf16>
    %96 = vector.shape_cast %95 : vector<1x128x128xbf16> to vector<128x128xbf16>
    %cst_111 = arith.constant dense<0.000000e+00> : vector<32x128xf32>
    %97 = tpu.matmul %90, %96, %cst_111 {dimension_numbers = #tpu.dot_dimension_numbers<[1], [0], [0], [1], [0, 0, 1, 1], [], []>} : vector<32x128xbf16>, vector<128x128xbf16>, vector<32x128xf32> -> vector<32x128xf32>
    %98 = arith.addf %94, %97 : vector<32x128xf32>
    %c2_112 = arith.constant 2 : index
    %c8_113 = arith.constant 8 : index
    %99 = vector.load %arg13[%c2_112, %c8_113] : memref<34x136xbf16, #tpu.memory_space<vmem>>, vector<32x128xbf16>
    %c2_114 = arith.constant 2 : index
    %c8_115 = arith.constant 8 : index
    %100 = vector.load %arg14[%c2_114, %c8_115] : memref<34x136xbf16, #tpu.memory_space<vmem>>, vector<32x128xbf16>
    %c8_116 = arith.constant 8 : index
    %c0_117 = arith.constant 0 : index
    %c0_118 = arith.constant 0 : index
    %101 = vector.load %arg5[%c8_116, %c0_117, %c0_118] : memref<9x128x128xbf16, #tpu.memory_space<vmem>>, vector<1x128x128xbf16>
    %102 = vector.shape_cast %101 : vector<1x128x128xbf16> to vector<128x128xbf16>
    %cst_119 = arith.constant dense<0.000000e+00> : vector<32x128xf32>
    %103 = tpu.matmul %99, %102, %cst_119 {dimension_numbers = #tpu.dot_dimension_numbers<[1], [0], [0], [1], [0, 0, 1, 1], [], []>} : vector<32x128xbf16>, vector<128x128xbf16>, vector<32x128xf32> -> vector<32x128xf32>
    %104 = arith.addf %98, %103 : vector<32x128xf32>
    %c8_120 = arith.constant 8 : index
    %c0_121 = arith.constant 0 : index
    %c0_122 = arith.constant 0 : index
    %105 = vector.load %arg6[%c8_120, %c0_121, %c0_122] : memref<9x128x128xbf16, #tpu.memory_space<vmem>>, vector<1x128x128xbf16>
    %106 = vector.shape_cast %105 : vector<1x128x128xbf16> to vector<128x128xbf16>
    %cst_123 = arith.constant dense<0.000000e+00> : vector<32x128xf32>
    %107 = tpu.matmul %100, %106, %cst_123 {dimension_numbers = #tpu.dot_dimension_numbers<[1], [0], [0], [1], [0, 0, 1, 1], [], []>} : vector<32x128xbf16>, vector<128x128xbf16>, vector<32x128xf32> -> vector<32x128xf32>
    %108 = arith.addf %104, %107 : vector<32x128xf32>
    %c0_124 = arith.constant 0 : index
    %c0_125 = arith.constant 0 : index
    %109 = vector.load %arg7[%c0_124, %c0_125] : memref<1x128xf32, #tpu.memory_space<vmem>>, vector<1x128xf32>
    %110 = vector.broadcast %109 : vector<1x128xf32> to vector<32x128xf32>
    %111 = arith.mulf %108, %110 : vector<32x128xf32>
    %c0_126 = arith.constant 0 : index
    %c0_127 = arith.constant 0 : index
    %112 = vector.load %arg8[%c0_126, %c0_127] : memref<1x128xf32, #tpu.memory_space<vmem>>, vector<1x128xf32>
    %113 = vector.broadcast %112 : vector<1x128xf32> to vector<32x128xf32>
    %114 = arith.addf %111, %113 : vector<32x128xf32>
    %cst_128 = arith.constant 0.000000e+00 : f32
    %115 = vector.broadcast %cst_128 : f32 to vector<32x128xf32>
    %116 = arith.maximumf %114, %115 : vector<32x128xf32>
    %117 = arith.truncf %116 : vector<32x128xf32> to vector<32x128xbf16>
    %c1_129 = arith.constant 1 : index
    %c4_130 = arith.constant 4 : index
    %118 = vector.load %arg15[%c1_129, %c4_130] : memref<34x136xbf16, #tpu.memory_space<vmem>>, vector<32x128xbf16>
    tpu.vector_store %arg15[%c1_129, %c4_130], %117 {strides = array<i32>} : memref<34x136xbf16, #tpu.memory_space<vmem>>, vector<32x128xbf16>,
    %cst_131 = arith.constant 0.000000e+00 : f32
    %119 = vector.broadcast %cst_131 : f32 to vector<32x128xf32>
    %c0_132 = arith.constant 0 : index
    %c0_133 = arith.constant 0 : index
    %120 = vector.load %arg15[%c0_132, %c0_133] : memref<34x136xbf16, #tpu.memory_space<vmem>>, vector<32x128xbf16>
    %c0_134 = arith.constant 0 : index
    %c0_135 = arith.constant 0 : index
    %c0_136 = arith.constant 0 : index
    %121 = vector.load %arg9[%c0_134, %c0_135, %c0_136] : memref<9x128x128xbf16, #tpu.memory_space<vmem>>, vector<1x128x128xbf16>
    %122 = vector.shape_cast %121 : vector<1x128x128xbf16> to vector<128x128xbf16>
    %cst_137 = arith.constant dense<0.000000e+00> : vector<32x128xf32>
    %123 = tpu.matmul %120, %122, %cst_137 {dimension_numbers = #tpu.dot_dimension_numbers<[1], [0], [0], [1], [0, 0, 1, 1], [], []>} : vector<32x128xbf16>, vector<128x128xbf16>, vector<32x128xf32> -> vector<32x128xf32>
    %124 = arith.addf %119, %123 : vector<32x128xf32>
    %c0_138 = arith.constant 0 : index
    %c4_139 = arith.constant 4 : index
    %125 = vector.load %arg15[%c0_138, %c4_139] : memref<34x136xbf16, #tpu.memory_space<vmem>>, vector<32x128xbf16>
    %c1_140 = arith.constant 1 : index
    %c0_141 = arith.constant 0 : index
    %c0_142 = arith.constant 0 : index
    %126 = vector.load %arg9[%c1_140, %c0_141, %c0_142] : memref<9x128x128xbf16, #tpu.memory_space<vmem>>, vector<1x128x128xbf16>
    %127 = vector.shape_cast %126 : vector<1x128x128xbf16> to vector<128x128xbf16>
    %cst_143 = arith.constant dense<0.000000e+00> : vector<32x128xf32>
    %128 = tpu.matmul %125, %127, %cst_143 {dimension_numbers = #tpu.dot_dimension_numbers<[1], [0], [0], [1], [0, 0, 1, 1], [], []>} : vector<32x128xbf16>, vector<128x128xbf16>, vector<32x128xf32> -> vector<32x128xf32>
    %129 = arith.addf %124, %128 : vector<32x128xf32>
    %c0_144 = arith.constant 0 : index
    %c8_145 = arith.constant 8 : index
    %130 = vector.load %arg15[%c0_144, %c8_145] : memref<34x136xbf16, #tpu.memory_space<vmem>>, vector<32x128xbf16>
    %c2_146 = arith.constant 2 : index
    %c0_147 = arith.constant 0 : index
    %c0_148 = arith.constant 0 : index
    %131 = vector.load %arg9[%c2_146, %c0_147, %c0_148] : memref<9x128x128xbf16, #tpu.memory_space<vmem>>, vector<1x128x128xbf16>
    %132 = vector.shape_cast %131 : vector<1x128x128xbf16> to vector<128x128xbf16>
    %cst_149 = arith.constant dense<0.000000e+00> : vector<32x128xf32>
    %133 = tpu.matmul %130, %132, %cst_149 {dimension_numbers = #tpu.dot_dimension_numbers<[1], [0], [0], [1], [0, 0, 1, 1], [], []>} : vector<32x128xbf16>, vector<128x128xbf16>, vector<32x128xf32> -> vector<32x128xf32>
    %134 = arith.addf %129, %133 : vector<32x128xf32>
    %c1_150 = arith.constant 1 : index
    %c0_151 = arith.constant 0 : index
    %135 = vector.load %arg15[%c1_150, %c0_151] : memref<34x136xbf16, #tpu.memory_space<vmem>>, vector<32x128xbf16>
    %c3_152 = arith.constant 3 : index
    %c0_153 = arith.constant 0 : index
    %c0_154 = arith.constant 0 : index
    %136 = vector.load %arg9[%c3_152, %c0_153, %c0_154] : memref<9x128x128xbf16, #tpu.memory_space<vmem>>, vector<1x128x128xbf16>
    %137 = vector.shape_cast %136 : vector<1x128x128xbf16> to vector<128x128xbf16>
    %cst_155 = arith.constant dense<0.000000e+00> : vector<32x128xf32>
    %138 = tpu.matmul %135, %137, %cst_155 {dimension_numbers = #tpu.dot_dimension_numbers<[1], [0], [0], [1], [0, 0, 1, 1], [], []>} : vector<32x128xbf16>, vector<128x128xbf16>, vector<32x128xf32> -> vector<32x128xf32>
    %139 = arith.addf %134, %138 : vector<32x128xf32>
    %c1_156 = arith.constant 1 : index
    %c4_157 = arith.constant 4 : index
    %140 = vector.load %arg15[%c1_156, %c4_157] : memref<34x136xbf16, #tpu.memory_space<vmem>>, vector<32x128xbf16>
    %c4_158 = arith.constant 4 : index
    %c0_159 = arith.constant 0 : index
    %c0_160 = arith.constant 0 : index
    %141 = vector.load %arg9[%c4_158, %c0_159, %c0_160] : memref<9x128x128xbf16, #tpu.memory_space<vmem>>, vector<1x128x128xbf16>
    %142 = vector.shape_cast %141 : vector<1x128x128xbf16> to vector<128x128xbf16>
    %cst_161 = arith.constant dense<0.000000e+00> : vector<32x128xf32>
    %143 = tpu.matmul %140, %142, %cst_161 {dimension_numbers = #tpu.dot_dimension_numbers<[1], [0], [0], [1], [0, 0, 1, 1], [], []>} : vector<32x128xbf16>, vector<128x128xbf16>, vector<32x128xf32> -> vector<32x128xf32>
    %144 = arith.addf %139, %143 : vector<32x128xf32>
    %c1_162 = arith.constant 1 : index
    %c8_163 = arith.constant 8 : index
    %145 = vector.load %arg15[%c1_162, %c8_163] : memref<34x136xbf16, #tpu.memory_space<vmem>>, vector<32x128xbf16>
    %c5_164 = arith.constant 5 : index
    %c0_165 = arith.constant 0 : index
    %c0_166 = arith.constant 0 : index
    %146 = vector.load %arg9[%c5_164, %c0_165, %c0_166] : memref<9x128x128xbf16, #tpu.memory_space<vmem>>, vector<1x128x128xbf16>
    %147 = vector.shape_cast %146 : vector<1x128x128xbf16> to vector<128x128xbf16>
    %cst_167 = arith.constant dense<0.000000e+00> : vector<32x128xf32>
    %148 = tpu.matmul %145, %147, %cst_167 {dimension_numbers = #tpu.dot_dimension_numbers<[1], [0], [0], [1], [0, 0, 1, 1], [], []>} : vector<32x128xbf16>, vector<128x128xbf16>, vector<32x128xf32> -> vector<32x128xf32>
    %149 = arith.addf %144, %148 : vector<32x128xf32>
    %c2_168 = arith.constant 2 : index
    %c0_169 = arith.constant 0 : index
    %150 = vector.load %arg15[%c2_168, %c0_169] : memref<34x136xbf16, #tpu.memory_space<vmem>>, vector<32x128xbf16>
    %c6_170 = arith.constant 6 : index
    %c0_171 = arith.constant 0 : index
    %c0_172 = arith.constant 0 : index
    %151 = vector.load %arg9[%c6_170, %c0_171, %c0_172] : memref<9x128x128xbf16, #tpu.memory_space<vmem>>, vector<1x128x128xbf16>
    %152 = vector.shape_cast %151 : vector<1x128x128xbf16> to vector<128x128xbf16>
    %cst_173 = arith.constant dense<0.000000e+00> : vector<32x128xf32>
    %153 = tpu.matmul %150, %152, %cst_173 {dimension_numbers = #tpu.dot_dimension_numbers<[1], [0], [0], [1], [0, 0, 1, 1], [], []>} : vector<32x128xbf16>, vector<128x128xbf16>, vector<32x128xf32> -> vector<32x128xf32>
    %154 = arith.addf %149, %153 : vector<32x128xf32>
    %c2_174 = arith.constant 2 : index
    %c4_175 = arith.constant 4 : index
    %155 = vector.load %arg15[%c2_174, %c4_175] : memref<34x136xbf16, #tpu.memory_space<vmem>>, vector<32x128xbf16>
    %c7_176 = arith.constant 7 : index
    %c0_177 = arith.constant 0 : index
    %c0_178 = arith.constant 0 : index
    %156 = vector.load %arg9[%c7_176, %c0_177, %c0_178] : memref<9x128x128xbf16, #tpu.memory_space<vmem>>, vector<1x128x128xbf16>
    %157 = vector.shape_cast %156 : vector<1x128x128xbf16> to vector<128x128xbf16>
    %cst_179 = arith.constant dense<0.000000e+00> : vector<32x128xf32>
    %158 = tpu.matmul %155, %157, %cst_179 {dimension_numbers = #tpu.dot_dimension_numbers<[1], [0], [0], [1], [0, 0, 1, 1], [], []>} : vector<32x128xbf16>, vector<128x128xbf16>, vector<32x128xf32> -> vector<32x128xf32>
    %159 = arith.addf %154, %158 : vector<32x128xf32>
    %c2_180 = arith.constant 2 : index
    %c8_181 = arith.constant 8 : index
    %160 = vector.load %arg15[%c2_180, %c8_181] : memref<34x136xbf16, #tpu.memory_space<vmem>>, vector<32x128xbf16>
    %c8_182 = arith.constant 8 : index
    %c0_183 = arith.constant 0 : index
    %c0_184 = arith.constant 0 : index
    %161 = vector.load %arg9[%c8_182, %c0_183, %c0_184] : memref<9x128x128xbf16, #tpu.memory_space<vmem>>, vector<1x128x128xbf16>
    %162 = vector.shape_cast %161 : vector<1x128x128xbf16> to vector<128x128xbf16>
    %cst_185 = arith.constant dense<0.000000e+00> : vector<32x128xf32>
    %163 = tpu.matmul %160, %162, %cst_185 {dimension_numbers = #tpu.dot_dimension_numbers<[1], [0], [0], [1], [0, 0, 1, 1], [], []>} : vector<32x128xbf16>, vector<128x128xbf16>, vector<32x128xf32> -> vector<32x128xf32>
    %164 = arith.addf %159, %163 : vector<32x128xf32>
    %c0_186 = arith.constant 0 : index
    %c0_187 = arith.constant 0 : index
    %165 = vector.load %arg10[%c0_186, %c0_187] : memref<1x128xf32, #tpu.memory_space<vmem>>, vector<1x128xf32>
    %166 = vector.broadcast %165 : vector<1x128xf32> to vector<32x128xf32>
    %167 = arith.mulf %164, %166 : vector<32x128xf32>
    %c0_188 = arith.constant 0 : index
    %c0_189 = arith.constant 0 : index
    %168 = vector.load %arg11[%c0_188, %c0_189] : memref<1x128xf32, #tpu.memory_space<vmem>>, vector<1x128xf32>
    %169 = vector.broadcast %168 : vector<1x128xf32> to vector<32x128xf32>
    %170 = arith.addf %167, %169 : vector<32x128xf32>
    %cst_190 = arith.constant 0.000000e+00 : f32
    %171 = vector.broadcast %cst_190 : f32 to vector<32x128xf32>
    %172 = arith.maximumf %170, %171 : vector<32x128xf32>
    %c0_191 = arith.constant 0 : index
    %c0_192 = arith.constant 0 : index
    %c0_193 = arith.constant 0 : index
    %173 = vector.load %arg12[%c0_191, %c0_192, %c0_193] : memref<1x32x128xf32, #tpu.memory_space<vmem>>, vector<1x32x128xf32>
    %174 = vector.shape_cast %173 : vector<1x32x128xf32> to vector<32x128xf32>
    %175 = vector.shape_cast %172 : vector<32x128xf32> to vector<1x32x128xf32>
    tpu.vector_store %arg12[%c0_191, %c0_192, %c0_193], %175 {strides = array<i32>} : memref<1x32x128xf32, #tpu.memory_space<vmem>>, vector<1x32x128xf32>,
    return
  }
  func.func @transform_0(%arg0: i32) -> (i32, i32, i32) {
    %c0_i32 = arith.constant 0 : i32
    %c0_i32_0 = arith.constant 0 : i32
    %c0_i32_1 = arith.constant 0 : i32
    return %arg0, %c0_i32, %c0_i32_0 : i32, i32, i32
  }
  func.func @transform_1(%arg0: i32) -> (i32, i32, i32) {
    %c0_i32 = arith.constant 0 : i32
    %c0_i32_0 = arith.constant 0 : i32
    %c0_i32_1 = arith.constant 0 : i32
    return %arg0, %c0_i32, %c0_i32_0 : i32, i32, i32
  }
  func.func @transform_2(%arg0: i32) -> (i32, i32) {
    %c0_i32 = arith.constant 0 : i32
    %c0_i32_0 = arith.constant 0 : i32
    %c0_i32_1 = arith.constant 0 : i32
    return %c0_i32, %c0_i32_0 : i32, i32
  }
  func.func @transform_3(%arg0: i32) -> (i32, i32) {
    %c0_i32 = arith.constant 0 : i32
    %c0_i32_0 = arith.constant 0 : i32
    %c0_i32_1 = arith.constant 0 : i32
    return %c0_i32, %c0_i32_0 : i32, i32
  }
  func.func @transform_4(%arg0: i32) -> (i32, i32, i32) {
    %c0_i32 = arith.constant 0 : i32
    %c0_i32_0 = arith.constant 0 : i32
    %c0_i32_1 = arith.constant 0 : i32
    %c0_i32_2 = arith.constant 0 : i32
    return %c0_i32, %c0_i32_0, %c0_i32_1 : i32, i32, i32
  }
  func.func @transform_5(%arg0: i32) -> (i32, i32, i32) {
    %c0_i32 = arith.constant 0 : i32
    %c0_i32_0 = arith.constant 0 : i32
    %c0_i32_1 = arith.constant 0 : i32
    %c0_i32_2 = arith.constant 0 : i32
    return %c0_i32, %c0_i32_0, %c0_i32_1 : i32, i32, i32
  }
  func.func @transform_6(%arg0: i32) -> (i32, i32) {
    %c0_i32 = arith.constant 0 : i32
    %c0_i32_0 = arith.constant 0 : i32
    %c0_i32_1 = arith.constant 0 : i32
    return %c0_i32, %c0_i32_0 : i32, i32
  }
  func.func @transform_7(%arg0: i32) -> (i32, i32) {
    %c0_i32 = arith.constant 0 : i32
    %c0_i32_0 = arith.constant 0 : i32
    %c0_i32_1 = arith.constant 0 : i32
    return %c0_i32, %c0_i32_0 : i32, i32
  }
  func.func @transform_8(%arg0: i32) -> (i32, i32, i32) {
    %c0_i32 = arith.constant 0 : i32
    %c0_i32_0 = arith.constant 0 : i32
    %c0_i32_1 = arith.constant 0 : i32
    %c0_i32_2 = arith.constant 0 : i32
    return %c0_i32, %c0_i32_0, %c0_i32_1 : i32, i32, i32
  }
  func.func @transform_9(%arg0: i32) -> (i32, i32) {
    %c0_i32 = arith.constant 0 : i32
    %c0_i32_0 = arith.constant 0 : i32
    %c0_i32_1 = arith.constant 0 : i32
    return %c0_i32, %c0_i32_0 : i32, i32
  }
  func.func @transform_10(%arg0: i32) -> (i32, i32) {
    %c0_i32 = arith.constant 0 : i32
    %c0_i32_0 = arith.constant 0 : i32
    %c0_i32_1 = arith.constant 0 : i32
    return %c0_i32, %c0_i32_0 : i32, i32
  }
  func.func @transform_11(%arg0: i32) -> (i32, i32, i32) {
    %c0_i32 = arith.constant 0 : i32
    %c0_i32_0 = arith.constant 0 : i32
    %c0_i32_1 = arith.constant 0 : i32
    return %arg0, %c0_i32, %c0_i32_0 : i32, i32, i32
  }
}

</mosaic_0001>

<llo_original>
// kernel: tpu_custom_call.1
$region0: #{tpu_custom_call.1}
  #allocation0 [shape = 'u32[]', space=smem, size = 0x4, offset = 0x4, fixed_abs, tag = 'smem constant byte address 0x4 - core index']
  #allocation1 [shape = 'u32[144,128]{1,0:T(1,128)}', space=vmem, size = 0x12000, scoped, tag = 'internal scratch']
  #allocation2 [shape = 'bf16[34,136]{1,0:T(8,128)(2,1)}', space=vmem, size = 0x5000, scoped, tag = 'scratch operand']
  #allocation3 [shape = 'bf16[34,136]{1,0:T(8,128)(2,1)}', space=vmem, size = 0x5000, scoped, tag = 'scratch operand']
  #allocation4 [shape = 'bf16[34,136]{1,0:T(8,128)(2,1)}', space=vmem, size = 0x5000, scoped, tag = 'scratch operand']
  %s0 = inlined_call_operand.vmem [shape: f32[2,16,64], index: 0, kind: input, shape index: {}]
  %s1 = inlined_call_operand.hbm [shape: f32[2,32,128], index: 1, kind: input, shape index: {}]
  %s2 = inlined_call_operand.hbm [shape: f32[64,128], index: 2, kind: input, shape index: {}]
  %s3 = inlined_call_operand.vmem [shape: f32[32,16], index: 3, kind: input, shape index: {}]
  %s4 = inlined_call_operand.hbm [shape: bf16[9,128,128], index: 4, kind: input, shape index: {}]
  %s5 = inlined_call_operand.hbm [shape: bf16[9,128,128], index: 5, kind: input, shape index: {}]
  %s6 = inlined_call_operand.vmem [shape: f32[1,128], index: 6, kind: input, shape index: {}]
  %s7 = inlined_call_operand.vmem [shape: f32[1,128], index: 7, kind: input, shape index: {}]
  %s8 = inlined_call_operand.hbm [shape: bf16[9,128,128], index: 8, kind: input, shape index: {}]
  %s9 = inlined_call_operand.vmem [shape: f32[1,128], index: 9, kind: input, shape index: {}]
  %s10 = inlined_call_operand.vmem [shape: f32[1,128], index: 10, kind: input, shape index: {}]
  %s11 = inlined_call_operand.hbm [shape: f32[2,32,128], index: 11, kind: output, shape index: {}]
  %s12 = sld [smem:[#allocation0]]
  $region97: #{tpu_custom_call.1} parent=0
    _
  %s14 = ssub.s32 1, %s12
  %s15 = scalar_select 0, %s14, %s12
  $region1: #{tpu_custom_call.1} parent=0
    #allocation5 [shape = 'u8[32768]{0}', space=vmem, size = 0x8000, scoped, tag = 'input window, operand 1']
    #allocation6 [shape = 's32[2]{0}', space=sflag, size = 0x8, scoped, tag = 'scoped memory for tpu_custom_call.1']
    #allocation7 [shape = 's32[2]{0}', space=sflag, size = 0x8, scoped, tag = 'scoped memory for tpu_custom_call.1']
    #allocation8 [shape = 'u8[32768]{0}', space=vmem, size = 0x8000, scoped, tag = 'input window, operand 2, single buffered']
    #allocation9 [shape = 's32[1]{0}', space=sflag, size = 0x4, scoped, tag = 'scoped memory for tpu_custom_call.1']
    #allocation10 [shape = 'u8[294912]{0}', space=vmem, size = 0x48000, scoped, tag = 'input window, operand 4, single buffered']
    #allocation11 [shape = 'u8[294912]{0}', space=vmem, size = 0x48000, scoped, tag = 'input window, operand 5, single buffered']
    #allocation12 [shape = 's32[1]{0}', space=sflag, size = 0x4, scoped, tag = 'scoped memory for tpu_custom_call.1']
    #allocation13 [shape = 'u8[294912]{0}', space=vmem, size = 0x48000, scoped, tag = 'input window, operand 8, single buffered']
    #allocation14 [shape = 'u8[32768]{0}', space=vmem, size = 0x8000, scoped, tag = 'output window, operand 0']
    %16 = vsyncpa [#allocation6], 0
    %s17 = scalar_lea.sflag [#allocation6], 1
    %18 = vsyncpa %s17, 0
    %19 = vsyncpa [#allocation9], 0
    %20 = vsyncpa [#allocation12], 0
    %21 = vsyncpa [#allocation7], 0
    %s22 = scalar_lea.sflag [#allocation7], 1
    %23 = vsyncpa %s22, 0
    loop: start=0, step=1, limit=4
    $region2: #{tpu_custom_call.1} parent=1 // loop_pre_header
      _
    $region3: #{tpu_custom_call.1} parent=1 // loop_header
      %s25 = sphi 0, %s29
      %p26 = scmp.ge.s32.totalorder %s25, 4
      %s35 = sphi 0, %s37
      %s38 = sphi 0, %s35
      %s39 = sphi 0, %s38
      %s55 = sphi 0, %s39
      %s61 = sphi 0, %s63
      %s64 = sphi 0, %s61
      %s65 = sphi 0, %s64
      %s81 = sphi 0, %s65
      %s85 = sphi 0, %s85
      %s87 = sphi 0, %s85
      %s88 = sphi 0, %s87
      %s102 = sphi 0, %s88
      %s106 = sphi 0, %s106
      %s108 = sphi 0, %s106
      %s109 = sphi 0, %s108
      %s123 = sphi 0, %s109
      %s127 = sphi 0, %s127
      %s129 = sphi 0, %s127
      %s130 = sphi 0, %s129
      %s144 = sphi 0, %s130
      %s148 = sphi 0, %s148
      %s150 = sphi 0, %s148
      %s151 = sphi 0, %s150
      %s165 = sphi 0, %s151
      %s169 = sphi 0, %s169
      %s171 = sphi 0, %s169
      %s172 = sphi 0, %s171
      %s186 = sphi 0, %s172
      %s190 = sphi 0, %s190
      %s192 = sphi 0, %s190
      %s193 = sphi 0, %s192
      %s207 = sphi 0, %s193
      %s211 = sphi 0, %s211
      %s213 = sphi 0, %s211
      %s214 = sphi 0, %s213
      %s228 = sphi 0, %s214
      %s232 = sphi 0, %s232
      %s234 = sphi 0, %s232
      %s235 = sphi 0, %s234
      %s249 = sphi 0, %s235
      %s253 = sphi 0, %s253
      %s255 = sphi 0, %s253
      %s256 = sphi 0, %s255
      %s270 = sphi 0, %s256
      %s276 = sphi 0, %s278
      %s279 = sphi 0, %s276
      %s280 = sphi 0, %s279
      %s296 = sphi 0, %s280
    $region4: #{tpu_custom_call.1} parent=1 // loop_header_branch
      %28 = sbr.rel (%p26) target = $region8
    $region5: #{tpu_custom_call.1} parent=1 // loop_body
      %s30 = ssub.s32 %s25, 1
      %s31 = ssub.s32 %s25, 2
      %s32 = sadd.s32 %s25, 1
      %s33 = ssub.s32 %s25, %s32
      %p34 = scmp.eq.s32.totalorder %s33, 0
      %s36 = sadd.s32 %s35, 1
      %s37 = scalar_select %p34, %s35, %s36
      %p40 = pneg %p34
      %p41 = scmp.eq.s32.totalorder %s25, 1
      %p42 = por %p40, %p41
      %p43 = scmp.ne.s32.totalorder %s35, %s38
      %p44 = scmp.eq.s32.totalorder %s25, 0
      %p45 = por %p43, %p44
      %p46 = scmp.ne.s32.totalorder %s35, %s38
      %p47 = scmp.eq.s32.totalorder %s30, 1
      %p48 = por %p46, %p47
      %p49 = scmp.ne.s32.totalorder %s38, %s39
      %p50 = scmp.eq.s32.totalorder %s30, 0
      %p51 = por %p49, %p50
      %p52 = scmp.ne.s32.totalorder %s38, %s39
      %p53 = scmp.eq.s32.totalorder %s31, 1
      %p54 = por %p52, %p53
      %p56 = scmp.ne.s32.totalorder %s39, %s55
      %p57 = scmp.eq.s32.totalorder %s31, 0
      %p58 = por %p56, %p57
      %s59 = ssub.s32 %s25, %s32
      %p60 = scmp.eq.s32.totalorder %s59, 0
      %s62 = sadd.s32 %s61, 1
      %s63 = scalar_select %p60, %s61, %s62
      %p66 = pneg %p60
      %p67 = scmp.eq.s32.totalorder %s25, 1
      %p68 = por %p66, %p67
      %p69 = scmp.ne.s32.totalorder %s61, %s64
      %p70 = scmp.eq.s32.totalorder %s25, 0
      %p71 = por %p69, %p70
      %p72 = scmp.ne.s32.totalorder %s61, %s64
      %p73 = scmp.eq.s32.totalorder %s30, 1
      %p74 = por %p72, %p73
      %p75 = scmp.ne.s32.totalorder %s64, %s65
      %p76 = scmp.eq.s32.totalorder %s30, 0
      %p77 = por %p75, %p76
      %p78 = scmp.ne.s32.totalorder %s64, %s65
      %p79 = scmp.eq.s32.totalorder %s31, 1
      %p80 = por %p78, %p79
      %p82 = scmp.ne.s32.totalorder %s65, %s81
      %p83 = scmp.eq.s32.totalorder %s31, 0
      %p84 = por %p82, %p83
      %s86 = sadd.s32 %s85, 1
      %p89 = scmp.eq.s32.totalorder %s25, 1
      %p90 = scmp.ne.s32.totalorder %s85, %s87
      %p91 = scmp.eq.s32.totalorder %s25, 0
      %p92 = por %p90, %p91
      %p93 = scmp.ne.s32.totalorder %s85, %s87
      %p94 = scmp.eq.s32.totalorder %s30, 1
      %p95 = por %p93, %p94
      %p96 = scmp.ne.s32.totalorder %s87, %s88
      %p97 = scmp.eq.s32.totalorder %s30, 0
      %p98 = por %p96, %p97
      %p99 = scmp.ne.s32.totalorder %s87, %s88
      %p100 = scmp.eq.s32.totalorder %s31, 1
      %p101 = por %p99, %p100
      %p103 = scmp.ne.s32.totalorder %s88, %s102
      %p104 = scmp.eq.s32.totalorder %s31, 0
      %p105 = por %p103, %p104
      %s107 = sadd.s32 %s106, 1
      %p110 = scmp.eq.s32.totalorder %s25, 1
      %p111 = scmp.ne.s32.totalorder %s106, %s108
      %p112 = scmp.eq.s32.totalorder %s25, 0
      %p113 = por %p111, %p112
      %p114 = scmp.ne.s32.totalorder %s106, %s108
      %p115 = scmp.eq.s32.totalorder %s30, 1
      %p116 = por %p114, %p115
      %p117 = scmp.ne.s32.totalorder %s108, %s109
      %p118 = scmp.eq.s32.totalorder %s30, 0
      %p119 = por %p117, %p118
      %p120 = scmp.ne.s32.totalorder %s108, %s109
      %p121 = scmp.eq.s32.totalorder %s31, 1
      %p122 = por %p120, %p121
      %p124 = scmp.ne.s32.totalorder %s109, %s123
      %p125 = scmp.eq.s32.totalorder %s31, 0
      %p126 = por %p124, %p125
      %s128 = sadd.s32 %s127, 1
      %p131 = scmp.eq.s32.totalorder %s25, 1
      %p132 = scmp.ne.s32.totalorder %s127, %s129
      %p133 = scmp.eq.s32.totalorder %s25, 0
      %p134 = por %p132, %p133
      %p135 = scmp.ne.s32.totalorder %s127, %s129
      %p136 = scmp.eq.s32.totalorder %s30, 1
      %p137 = por %p135, %p136
      %p138 = scmp.ne.s32.totalorder %s129, %s130
      %p139 = scmp.eq.s32.totalorder %s30, 0
      %p140 = por %p138, %p139
      %p141 = scmp.ne.s32.totalorder %s129, %s130
      %p142 = scmp.eq.s32.totalorder %s31, 1
      %p143 = por %p141, %p142
      %p145 = scmp.ne.s32.totalorder %s130, %s144
      %p146 = scmp.eq.s32.totalorder %s31, 0
      %p147 = por %p145, %p146
      %s149 = sadd.s32 %s148, 1
      %p152 = scmp.eq.s32.totalorder %s25, 1
      %p153 = scmp.ne.s32.totalorder %s148, %s150
      %p154 = scmp.eq.s32.totalorder %s25, 0
      %p155 = por %p153, %p154
      %p156 = scmp.ne.s32.totalorder %s148, %s150
      %p157 = scmp.eq.s32.totalorder %s30, 1
      %p158 = por %p156, %p157
      %p159 = scmp.ne.s32.totalorder %s150, %s151
      %p160 = scmp.eq.s32.totalorder %s30, 0
      %p161 = por %p159, %p160
      %p162 = scmp.ne.s32.totalorder %s150, %s151
      %p163 = scmp.eq.s32.totalorder %s31, 1
      %p164 = por %p162, %p163
      %p166 = scmp.ne.s32.totalorder %s151, %s165
      %p167 = scmp.eq.s32.totalorder %s31, 0
      %p168 = por %p166, %p167
      %s170 = sadd.s32 %s169, 1
      %p173 = scmp.eq.s32.totalorder %s25, 1
      %p174 = scmp.ne.s32.totalorder %s169, %s171
      %p175 = scmp.eq.s32.totalorder %s25, 0
      %p176 = por %p174, %p175
      %p177 = scmp.ne.s32.totalorder %s169, %s171
      %p178 = scmp.eq.s32.totalorder %s30, 1
      %p179 = por %p177, %p178
      %p180 = scmp.ne.s32.totalorder %s171, %s172
      %p181 = scmp.eq.s32.totalorder %s30, 0
      %p182 = por %p180, %p181
      %p183 = scmp.ne.s32.totalorder %s171, %s172
      %p184 = scmp.eq.s32.totalorder %s31, 1
      %p185 = por %p183, %p184
      %p187 = scmp.ne.s32.totalorder %s172, %s186
      %p188 = scmp.eq.s32.totalorder %s31, 0
      %p189 = por %p187, %p188
      %s191 = sadd.s32 %s190, 1
      %p194 = scmp.eq.s32.totalorder %s25, 1
      %p195 = scmp.ne.s32.totalorder %s190, %s192
      %p196 = scmp.eq.s32.totalorder %s25, 0
      %p197 = por %p195, %p196
      %p198 = scmp.ne.s32.totalorder %s190, %s192
      %p199 = scmp.eq.s32.totalorder %s30, 1
      %p200 = por %p198, %p199
      %p201 = scmp.ne.s32.totalorder %s192, %s193
      %p202 = scmp.eq.s32.totalorder %s30, 0
      %p203 = por %p201, %p202
      %p204 = scmp.ne.s32.totalorder %s192, %s193
      %p205 = scmp.eq.s32.totalorder %s31, 1
      %p206 = por %p204, %p205
      %p208 = scmp.ne.s32.totalorder %s193, %s207
      %p209 = scmp.eq.s32.totalorder %s31, 0
      %p210 = por %p208, %p209
      %s212 = sadd.s32 %s211, 1
      %p215 = scmp.eq.s32.totalorder %s25, 1
      %p216 = scmp.ne.s32.totalorder %s211, %s213
      %p217 = scmp.eq.s32.totalorder %s25, 0
      %p218 = por %p216, %p217
      %p219 = scmp.ne.s32.totalorder %s211, %s213
      %p220 = scmp.eq.s32.totalorder %s30, 1
      %p221 = por %p219, %p220
      %p222 = scmp.ne.s32.totalorder %s213, %s214
      %p223 = scmp.eq.s32.totalorder %s30, 0
      %p224 = por %p222, %p223
      %p225 = scmp.ne.s32.totalorder %s213, %s214
      %p226 = scmp.eq.s32.totalorder %s31, 1
      %p227 = por %p225, %p226
      %p229 = scmp.ne.s32.totalorder %s214, %s228
      %p230 = scmp.eq.s32.totalorder %s31, 0
      %p231 = por %p229, %p230
      %s233 = sadd.s32 %s232, 1
      %p236 = scmp.eq.s32.totalorder %s25, 1
      %p237 = scmp.ne.s32.totalorder %s232, %s234
      %p238 = scmp.eq.s32.totalorder %s25, 0
      %p239 = por %p237, %p238
      %p240 = scmp.ne.s32.totalorder %s232, %s234
      %p241 = scmp.eq.s32.totalorder %s30, 1
      %p242 = por %p240, %p241
      %p243 = scmp.ne.s32.totalorder %s234, %s235
      %p244 = scmp.eq.s32.totalorder %s30, 0
      %p245 = por %p243, %p244
      %p246 = scmp.ne.s32.totalorder %s234, %s235
      %p247 = scmp.eq.s32.totalorder %s31, 1
      %p248 = por %p246, %p247
      %p250 = scmp.ne.s32.totalorder %s235, %s249
      %p251 = scmp.eq.s32.totalorder %s31, 0
      %p252 = por %p250, %p251
      %s254 = sadd.s32 %s253, 1
      %p257 = scmp.eq.s32.totalorder %s25, 1
      %p258 = scmp.ne.s32.totalorder %s253, %s255
      %p259 = scmp.eq.s32.totalorder %s25, 0
      %p260 = por %p258, %p259
      %p261 = scmp.ne.s32.totalorder %s253, %s255
      %p262 = scmp.eq.s32.totalorder %s30, 1
      %p263 = por %p261, %p262
      %p264 = scmp.ne.s32.totalorder %s255, %s256
      %p265 = scmp.eq.s32.totalorder %s30, 0
      %p266 = por %p264, %p265
      %p267 = scmp.ne.s32.totalorder %s255, %s256
      %p268 = scmp.eq.s32.totalorder %s31, 1
      %p269 = por %p267, %p268
      %p271 = scmp.ne.s32.totalorder %s256, %s270
      %p272 = scmp.eq.s32.totalorder %s31, 0
      %p273 = por %p271, %p272
      %s274 = ssub.s32 %s25, %s32
      %p275 = scmp.eq.s32.totalorder %s274, 0
      %s277 = sadd.s32 %s276, 1
      %s278 = scalar_select %p275, %s276, %s277
      %p281 = pneg %p275
      %p282 = scmp.eq.s32.totalorder %s25, 1
      %p283 = por %p281, %p282
      %p284 = scmp.ne.s32.totalorder %s276, %s279
      %p285 = scmp.eq.s32.totalorder %s25, 0
      %p286 = por %p284, %p285
      %p287 = scmp.ne.s32.totalorder %s276, %s279
      %p288 = scmp.eq.s32.totalorder %s30, 1
      %p289 = por %p287, %p288
      %p290 = scmp.ne.s32.totalorder %s279, %s280
      %p291 = scmp.eq.s32.totalorder %s30, 0
      %p292 = por %p290, %p291
      %p293 = scmp.ne.s32.totalorder %s279, %s280
      %p294 = scmp.eq.s32.totalorder %s31, 1
      %p295 = por %p293, %p294
      %p297 = scmp.ne.s32.totalorder %s280, %s296
      %p298 = scmp.eq.s32.totalorder %s31, 0
      %p299 = por %p297, %p298
      %p300 = scmp.le.s32.totalorder 1, %s25
      %p301 = scmp.lt.s32.totalorder %s25, 3
      %p302 = pnand %p300, %p301
      %p303 = pneg %p302
      // Predicated region
      $region9: #{tpu_custom_call.1} parent=5 // pred_check
        _
      $region10: #{tpu_custom_call.1} parent=5 // pred_check_branch
        %305 = sbr.rel (%p302) target = $region12
      $region11: #{tpu_custom_call.1} parent=5 // pred_region
        %s306 = ssub.s32 %s25, 1
        // Predicated region
        $region13: #{tpu_custom_call.1} parent=11 // pred_check
          %p307 = pneg %p98
        $region14: #{tpu_custom_call.1} parent=11 // pred_check_branch
          %309 = sbr.rel (%p307) target = $region16
        $region15: #{tpu_custom_call.1} parent=11 // pred_region
          %s311 = ssub.s32 1024, 1024
          %312 = vsyncadd [#allocation9], %s311
          %s313 = sshll.u32 [#allocation8], 4
          %s314 = int_to_ptr.vmem [resolvable:$true] %s313
          %319 = dma.hbm_to_vmem [thread:$0]  %s2, 1024, %s314, [#allocation9], 128, 128, 8
        $region16: #{tpu_custom_call.1} parent=11 // pred_fallthru
          _
        // Predicated region
        $region17: #{tpu_custom_call.1} parent=11 // pred_check
          %p320 = pneg %p119
        $region18: #{tpu_custom_call.1} parent=11 // pred_check_branch
          %322 = sbr.rel (%p320) target = $region20
        $region19: #{tpu_custom_call.1} parent=11 // pred_region
          _
        $region20: #{tpu_custom_call.1} parent=11 // pred_fallthru
          _
        // Predicated region
        $region21: #{tpu_custom_call.1} parent=11 // pred_check
          %p323 = pneg %p140
        $region22: #{tpu_custom_call.1} parent=11 // pred_check_branch
          %325 = sbr.rel (%p323) target = $region24
        $region23: #{tpu_custom_call.1} parent=11 // pred_region
          %s327 = ssub.s32 9216, 9216
          %328 = vsyncadd [#allocation9], %s327
          %s329 = sshll.u32 [#allocation10], 4
          %s330 = int_to_ptr.vmem [resolvable:$true] %s329
          %335 = dma.hbm_to_vmem [thread:$0]  %s4, 9216, %s330, [#allocation9], 64, 64, 4
        $region24: #{tpu_custom_call.1} parent=11 // pred_fallthru
          _
        // Predicated region
        $region25: #{tpu_custom_call.1} parent=11 // pred_check
          %p336 = pneg %p161
        $region26: #{tpu_custom_call.1} parent=11 // pred_check_branch
          %338 = sbr.rel (%p336) target = $region28
        $region27: #{tpu_custom_call.1} parent=11 // pred_region
          %s340 = ssub.s32 9216, 9216
          %341 = vsyncadd [#allocation12], %s340
          %s342 = sshll.u32 [#allocation11], 4
          %s343 = int_to_ptr.vmem [resolvable:$true] %s342
          %348 = dma.hbm_to_vmem [thread:$0]  %s5, 9216, %s343, [#allocation12], 64, 64, 4
        $region28: #{tpu_custom_call.1} parent=11 // pred_fallthru
          _
        // Predicated region
        $region29: #{tpu_custom_call.1} parent=11 // pred_check
          %p349 = pneg %p182
        $region30: #{tpu_custom_call.1} parent=11 // pred_check_branch
          %351 = sbr.rel (%p349) target = $region32
        $region31: #{tpu_custom_call.1} parent=11 // pred_region
          _
        $region32: #{tpu_custom_call.1} parent=11 // pred_fallthru
          _
        // Predicated region
        $region33: #{tpu_custom_call.1} parent=11 // pred_check
          %p352 = pneg %p203
        $region34: #{tpu_custom_call.1} parent=11 // pred_check_branch
          %354 = sbr.rel (%p352) target = $region36
        $region35: #{tpu_custom_call.1} parent=11 // pred_region
          _
        $region36: #{tpu_custom_call.1} parent=11 // pred_fallthru
          _
        // Predicated region
        $region37: #{tpu_custom_call.1} parent=11 // pred_check
          %p355 = pneg %p224
        $region38: #{tpu_custom_call.1} parent=11 // pred_check_branch
          %357 = sbr.rel (%p355) target = $region40
        $region39: #{tpu_custom_call.1} parent=11 // pred_region
          %s359 = ssub.s32 9216, 9216
          %360 = vsyncadd [#allocation12], %s359
          %s361 = sshll.u32 [#allocation13], 4
          %s362 = int_to_ptr.vmem [resolvable:$true] %s361
          %367 = dma.hbm_to_vmem [thread:$0]  %s8, 9216, %s362, [#allocation12], 64, 64, 4
        $region40: #{tpu_custom_call.1} parent=11 // pred_fallthru
          _
        // Predicated region
        $region41: #{tpu_custom_call.1} parent=11 // pred_check
          %p368 = pneg %p245
        $region42: #{tpu_custom_call.1} parent=11 // pred_check_branch
          %370 = sbr.rel (%p368) target = $region44
        $region43: #{tpu_custom_call.1} parent=11 // pred_region
          _
        $region44: #{tpu_custom_call.1} parent=11 // pred_fallthru
          _
        // Predicated region
        $region45: #{tpu_custom_call.1} parent=11 // pred_check
          %p371 = pneg %p266
        $region46: #{tpu_custom_call.1} parent=11 // pred_check_branch
          %373 = sbr.rel (%p371) target = $region48
        $region47: #{tpu_custom_call.1} parent=11 // pred_region
          _
        $region48: #{tpu_custom_call.1} parent=11 // pred_fallthru
          _
      $region12: #{tpu_custom_call.1} parent=5 // pred_fallthru
        _
      %p374 = scmp.lt.s32.totalorder %s25, 2
      // Predicated region
      $region49: #{tpu_custom_call.1} parent=5 // pred_check
        %p375 = pneg %p374
      $region50: #{tpu_custom_call.1} parent=5 // pred_check_branch
        %377 = sbr.rel (%p375) target = $region52
      $region51: #{tpu_custom_call.1} parent=5 // pred_region
        // Predicated region
        $region53: #{tpu_custom_call.1} parent=51 // pred_check
          %p378 = pneg %p45
        $region54: #{tpu_custom_call.1} parent=51 // pred_check_branch
          %380 = sbr.rel (%p378) target = $region56
        $region55: #{tpu_custom_call.1} parent=51 // pred_region
          %p381 = scmp.lt.s32.totalorder %s25, 1
          %s382 = scalar_select %p381, %s25, 1
          %s383 = smul.addr %s382, 2
          %s384 = smul.addr %s383, 8
          %s385 = scalar_lea.vmem %s0, %s384
        $region56: #{tpu_custom_call.1} parent=51 // pred_fallthru
          _
        // Predicated region
        $region57: #{tpu_custom_call.1} parent=51 // pred_check
          %p386 = pneg %p71
        $region58: #{tpu_custom_call.1} parent=51 // pred_check_branch
          %388 = sbr.rel (%p386) target = $region60
        $region59: #{tpu_custom_call.1} parent=51 // pred_region
          %s389 = sand.u32 %s61, 1
          %s390 = scalar_lea.sflag [#allocation6], %s389
          %s391 = sand.u32 %s61, 1
          %s392 = smul.addr %s391, 32
          %s393 = scalar_lea.vmem [#allocation5], %s392
          %s395 = ssub.s32 512, 512
          %396 = vsyncadd %s390, %s395
          %s397 = smul.addr %s25, 4
          %s398 = smul.addr %s397, 128
          %s399 = scalar_lea.hbm %s1, %s398
          %s400 = sshll.u32 %s393, 4
          %s401 = int_to_ptr.vmem [resolvable:$true] %s400
          %406 = dma.hbm_to_vmem [thread:$0]  %s399, 512, %s401, %s390, 128, 128, 8
        $region60: #{tpu_custom_call.1} parent=51 // pred_fallthru
          _
      $region52: #{tpu_custom_call.1} parent=5 // pred_fallthru
        _
      %p407 = scmp.le.s32.totalorder 1, %s25
      %p408 = scmp.lt.s32.totalorder %s25, 3
      %p409 = pnand %p407, %p408
      %p410 = pneg %p409
      // Predicated region
      $region61: #{tpu_custom_call.1} parent=5 // pred_check
        _
      $region62: #{tpu_custom_call.1} parent=5 // pred_check_branch
        %412 = sbr.rel (%p409) target = $region64
      $region63: #{tpu_custom_call.1} parent=5 // pred_region
        %s413 = ssub.s32 %s25, 1
        %s414 = sand.u32 %s64, 1
        %s415 = scalar_lea.sflag [#allocation6], %s414
        %s416 = sand.u32 %s64, 1
        %s417 = smul.addr %s416, 32
        %s418 = scalar_lea.vmem [#allocation5], %s417
        // Predicated region
        $region65: #{tpu_custom_call.1} parent=63 // pred_check
          %p419 = pneg %p77
        $region66: #{tpu_custom_call.1} parent=63 // pred_check_branch
          %421 = sbr.rel (%p419) target = $region68
        $region67: #{tpu_custom_call.1} parent=63 // pred_region
          %422 = dma.done %s415, 512
        $region68: #{tpu_custom_call.1} parent=63 // pred_fallthru
          _
        // Predicated region
        $region69: #{tpu_custom_call.1} parent=63 // pred_check
          %p423 = pneg %p98
        $region70: #{tpu_custom_call.1} parent=63 // pred_check_branch
          %425 = sbr.rel (%p423) target = $region72
        $region71: #{tpu_custom_call.1} parent=63 // pred_region
          %426 = dma.done [#allocation9], 1024
        $region72: #{tpu_custom_call.1} parent=63 // pred_fallthru
          _
        // Predicated region
        $region73: #{tpu_custom_call.1} parent=63 // pred_check
          %p427 = pneg %p140
        $region74: #{tpu_custom_call.1} parent=63 // pred_check_branch
          %429 = sbr.rel (%p427) target = $region76
        $region75: #{tpu_custom_call.1} parent=63 // pred_region
          %430 = dma.done [#allocation9], 9216
        $region76: #{tpu_custom_call.1} parent=63 // pred_fallthru
          _
        // Predicated region
        $region77: #{tpu_custom_call.1} parent=63 // pred_check
          %p431 = pneg %p161
        $region78: #{tpu_custom_call.1} parent=63 // pred_check_branch
          %433 = sbr.rel (%p431) target = $region80
        $region79: #{tpu_custom_call.1} parent=63 // pred_region
          %434 = dma.done [#allocation12], 9216
        $region80: #{tpu_custom_call.1} parent=63 // pred_fallthru
          _
        // Predicated region
        $region81: #{tpu_custom_call.1} parent=63 // pred_check
          %p435 = pneg %p224
        $region82: #{tpu_custom_call.1} parent=63 // pred_check_branch
          %437 = sbr.rel (%p435) target = $region84
        $region83: #{tpu_custom_call.1} parent=63 // pred_region
          %438 = dma.done [#allocation12], 9216
        $region84: #{tpu_custom_call.1} parent=63 // pred_fallthru
          _
        %p439 = scmp.lt.s32.totalorder %s30, 1
        %s440 = scalar_select %p439, %s30, 1
        %s441 = smul.addr %s440, 2
        %s442 = smul.addr %s441, 8
        %s443 = scalar_lea.vmem %s0, %s442
        %p444 = pneg %p51
        %p445 = pneg %p48
        %s446 = sand.u32 %s64, 1
        %s447 = scalar_lea.sflag [#allocation6], %s446
        %s448 = sand.u32 %s64, 1
        %s449 = smul.addr %s448, 32
        %s450 = scalar_lea.vmem [#allocation5], %s449
        %p451 = pneg %p77
        %p452 = pneg %p74
        %p453 = pneg %p98
        %p454 = pneg %p95
        %p455 = pneg %p119
        %p456 = pneg %p116
        %p457 = pneg %p140
        %p458 = pneg %p137
        %p459 = pneg %p161
        %p460 = pneg %p158
        %p461 = pneg %p182
        %p462 = pneg %p179
        %p463 = pneg %p203
        %p464 = pneg %p200
        %p465 = pneg %p224
        %p466 = pneg %p221
        %p467 = pneg %p245
        %p468 = pneg %p242
        %p469 = pneg %p266
        %p470 = pneg %p263
        %p471 = pneg %p292
        %p472 = pneg %p289
        %s473 = sand.u32 %s279, 1
        %s474 = scalar_lea.sflag [#allocation7], %s473
        %s475 = sand.u32 %s279, 1
        %s476 = smul.addr %s475, 32
        %s477 = scalar_lea.vmem [#allocation14], %s476
        %p478 = scmp.lt.s32.totalorder %s30, 1
        %s479 = scalar_select %p478, %s30, 1
        %s480 = smul.addr %s479, 2
        %s481 = smul.addr %s480, 8
        %s482 = scalar_lea.vmem %s0, %s481
        %vm484 = vcmask 1043456
        %vm485 = vcmask 64516
        %vm486 = vmor %vm485, %vm484
        %487 = vst.msk [vmem:[#allocation2] sm:$0xff] %vm486, 0
        %488 = vst.msk [vmem:[#allocation2 + $0x8] sm:$0xff] %vm486, 0
        %489 = vst.msk [vmem:[#allocation2 + $0x10] sm:$0xff] %vm486, 0
        %490 = vst.msk [vmem:[#allocation2 + $0x18] sm:$0xff] %vm486, 0
        %vm491 = vcmask 1040384
        %vm492 = vcmask 61444
        %vm493 = vmor %vm492, %vm491
        %494 = vst.msk [vmem:[#allocation2 + $0x20] sm:$0x11] %vm493, 0
        %495 = vst.msk [vmem:[#allocation3] sm:$0xff] %vm486, 0
        %496 = vst.msk [vmem:[#allocation3 + $0x8] sm:$0xff] %vm486, 0
        %497 = vst.msk [vmem:[#allocation3 + $0x10] sm:$0xff] %vm486, 0
        %498 = vst.msk [vmem:[#allocation3 + $0x18] sm:$0xff] %vm486, 0
        %499 = vst.msk [vmem:[#allocation3 + $0x20] sm:$0x11] %vm493, 0
        %500 = vst.msk [vmem:[#allocation4] sm:$0xff] %vm486, 0
        %501 = vst.msk [vmem:[#allocation4 + $0x8] sm:$0xff] %vm486, 0
        %502 = vst.msk [vmem:[#allocation4 + $0x10] sm:$0xff] %vm486, 0
        %503 = vst.msk [vmem:[#allocation4 + $0x18] sm:$0xff] %vm486, 0
        %504 = vst.msk [vmem:[#allocation4 + $0x20] sm:$0x11] %vm493, 0
        %v505 = vld [vmem:[%s482] sm:$0xff]
        %v506 = vld [vmem:[%s482 + $0x8] sm:$0xff]
        %v507 = vld [vmem:[#allocation8] sm:$0xff]
        %v508 = vld [vmem:[#allocation8 + $0x8] sm:$0xff]
        %v509 = vld [vmem:[#allocation8 + $0x10] sm:$0xff]
        %v510 = vld [vmem:[#allocation8 + $0x18] sm:$0xff]
        %v511 = vld [vmem:[#allocation8 + $0x20] sm:$0xff]
        %v512 = vld [vmem:[#allocation8 + $0x28] sm:$0xff]
        %v513 = vld [vmem:[#allocation8 + $0x30] sm:$0xff]
        %v514 = vld [vmem:[#allocation8 + $0x38] sm:$0xff]
        %vm515 = vcmask 523264
        %v517 = vsel %vm515, %v505, 0
        %v520 = vsel %vm515, %v506, 0
        %522 = vmatprep.subr.mxu0 0.0
        %523 = vmatpush1.msra.mxu0 0.0
        %524 = vmatprep.subr.mxu0 0.0
        %525 = vmatpush1.msra.mxu0 0.0
        %526 = vmatprep.subr.mxu0 0.0
        %527 = vmatpush1.msra.mxu0 0.0
        %528 = vmatprep.subr.mxu0 0.0
        %529 = vmatpush1.msra.mxu0 0.0
        %530 = vmatprep.subr.mxu0 0.0
        %531 = vmatpush1.msra.mxu0 0.0
        %532 = vmatprep.subr.mxu0 0.0
        %533 = vmatpush1.msra.mxu0 0.0
        %534 = vmatprep.subr.mxu0 0.0
        %535 = vmatpush1.msra.mxu0 0.0
        %536 = vmatprep.subr.mxu0 0.0
        %537 = vmatpush1.msra.mxu0 0.0
        %538 = vmatprep.subr.mxu0 0.0
        %539 = vmatpush1.msra.mxu0 %v514
        %540 = vmatprep.subr.mxu0 0.0
        %541 = vmatpush1.msra.mxu0 %v513
        %542 = vmatprep.subr.mxu0 0.0
        %543 = vmatpush1.msra.mxu0 %v512
        %544 = vmatprep.subr.mxu0 0.0
        %545 = vmatpush1.msra.mxu0 %v511
        %546 = vmatprep.subr.mxu0 0.0
        %547 = vmatpush1.msra.mxu0 %v510
        %548 = vmatprep.subr.mxu0 0.0
        %549 = vmatpush1.msra.mxu0 %v509
        %550 = vmatprep.subr.mxu0 0.0
        %551 = vmatpush1.msra.mxu0 %v508
        %552 = vmatprep.subr.mxu0 0.0
        %553 = vmatpush1.msra.mxu0 %v507
        %554 = vmatprep.subr.mxu0 0.0
        %555 = vmatpush2.msra.mxu0 0.0
        %556 = vmatprep.subr.mxu0 0.0
        %557 = vmatpush2.msra.mxu0 0.0
        %558 = vmatprep.subr.mxu0 0.0
        %559 = vmatpush2.msra.mxu0 0.0
        %560 = vmatprep.subr.mxu0 0.0
        %561 = vmatpush2.msra.mxu0 0.0
        %562 = vmatprep.subr.mxu0 0.0
        %563 = vmatpush2.msra.mxu0 0.0
        %564 = vmatprep.subr.mxu0 0.0
        %565 = vmatpush2.msra.mxu0 0.0
        %566 = vmatprep.subr.mxu0 0.0
        %567 = vmatpush2.msra.mxu0 0.0
        %568 = vmatprep.subr.mxu0 0.0
        %569 = vmatpush2.msra.mxu0 0.0
        %570 = vmatprep.subr.mxu0 0.0
        %571 = vmatpush2.msra.mxu0 0.0
        %572 = vmatprep.subr.mxu0 0.0
        %573 = vmatpush2.msra.mxu0 0.0
        %574 = vmatprep.subr.mxu0 0.0
        %575 = vmatpush2.msra.mxu0 0.0
        %576 = vmatprep.subr.mxu0 0.0
        %577 = vmatpush2.msra.mxu0 0.0
        %578 = vmatprep.subr.mxu0 0.0
        %579 = vmatpush2.msra.mxu0 0.0
        %580 = vmatprep.subr.mxu0 0.0
        %581 = vmatpush2.msra.mxu0 0.0
        %582 = vmatprep.subr.mxu0 0.0
        %583 = vmatpush2.msra.mxu0 0.0
        %584 = vmatprep.subr.mxu0 0.0
        %585 = vmatpush2.msra.mxu0 0.0
        %586 = vmatprep.mubr.f32.mxu0 0.0
        %587 = vmatmul.mubr.f32.gmra.mxu0 %v517
        %v588 = vpop.f32.mrf.mxu0
        %v589 = vadd.f32 0.0, %v588
        %v590 = vpop.f32.mrf.mxu0
        %591 = vmatprep.mubr.f32.mxu0 0.0
        %592 = vmatmul.mubr.f32.gmra.mxu0 %v520
        %v593 = vpop.f32.mrf.mxu0
        %v594 = vadd.f32 0.0, %v593
        %v595 = vpop.f32.mrf.mxu0
        %596 = vdwg.mxu0
        %v597 = vld [vmem:[%s3] sm:$0xff]
        %v598 = vld [vmem:[%s3 + $0x8] sm:$0xff]
        %v599 = vld [vmem:[%s3 + $0x10] sm:$0xff]
        %v600 = vld [vmem:[%s3 + $0x18] sm:$0xff]
        %vm601 = vcmask 130048
        %v603 = vsel %vm601, %v597, 0
        %v606 = vsel %vm601, %v598, 0
        %v609 = vsel %vm601, %v599, 0
        %v612 = vsel %vm601, %v600, 0
        %614 = vmatprep.subr.mxu0 0.0
        %615 = vmatpush1.msra.mxu0 0.0
        %616 = vmatprep.subr.mxu0 0.0
        %617 = vmatpush1.msra.mxu0 0.0
        %618 = vmatprep.subr.mxu0 0.0
        %619 = vmatpush1.msra.mxu0 0.0
        %620 = vmatprep.subr.mxu0 0.0
        %621 = vmatpush1.msra.mxu0 0.0
        %622 = vmatprep.subr.mxu0 0.0
        %623 = vmatpush1.msra.mxu0 0.0
        %624 = vmatprep.subr.mxu0 0.0
        %625 = vmatpush1.msra.mxu0 0.0
        %626 = vmatprep.subr.mxu0 0.0
        %627 = vmatpush1.msra.mxu0 0.0
        %628 = vmatprep.subr.mxu0 0.0
        %629 = vmatpush1.msra.mxu0 0.0
        %630 = vmatprep.subr.mxu0 0.0
        %631 = vmatpush1.msra.mxu0 0.0
        %632 = vmatprep.subr.mxu0 0.0
        %633 = vmatpush1.msra.mxu0 0.0
        %634 = vmatprep.subr.mxu0 0.0
        %635 = vmatpush1.msra.mxu0 0.0
        %636 = vmatprep.subr.mxu0 0.0
        %637 = vmatpush1.msra.mxu0 0.0
        %638 = vmatprep.subr.mxu0 0.0
        %639 = vmatpush1.msra.mxu0 0.0
        %640 = vmatprep.subr.mxu0 0.0
        %641 = vmatpush1.msra.mxu0 0.0
        %642 = vmatprep.subr.mxu0 0.0
        %643 = vmatpush1.msra.mxu0 %v594
        %644 = vmatprep.subr.mxu0 0.0
        %645 = vmatpush1.msra.mxu0 %v589
        %646 = vmatprep.subr.mxu0 0.0
        %647 = vmatpush2.msra.mxu0 0.0
        %648 = vmatprep.subr.mxu0 0.0
        %649 = vmatpush2.msra.mxu0 0.0
        %650 = vmatprep.subr.mxu0 0.0
        %651 = vmatpush2.msra.mxu0 0.0
        %652 = vmatprep.subr.mxu0 0.0
        %653 = vmatpush2.msra.mxu0 0.0
        %654 = vmatprep.subr.mxu0 0.0
        %655 = vmatpush2.msra.mxu0 0.0
        %656 = vmatprep.subr.mxu0 0.0
        %657 = vmatpush2.msra.mxu0 0.0
        %658 = vmatprep.subr.mxu0 0.0
        %659 = vmatpush2.msra.mxu0 0.0
        %660 = vmatprep.subr.mxu0 0.0
        %661 = vmatpush2.msra.mxu0 0.0
        %662 = vmatprep.subr.mxu0 0.0
        %663 = vmatpush2.msra.mxu0 0.0
        %664 = vmatprep.subr.mxu0 0.0
        %665 = vmatpush2.msra.mxu0 0.0
        %666 = vmatprep.subr.mxu0 0.0
        %667 = vmatpush2.msra.mxu0 0.0
        %668 = vmatprep.subr.mxu0 0.0
        %669 = vmatpush2.msra.mxu0 0.0
        %670 = vmatprep.subr.mxu0 0.0
        %671 = vmatpush2.msra.mxu0 0.0
        %672 = vmatprep.subr.mxu0 0.0
        %673 = vmatpush2.msra.mxu0 0.0
        %674 = vmatprep.subr.mxu0 0.0
        %675 = vmatpush2.msra.mxu0 0.0
        %676 = vmatprep.subr.mxu0 0.0
        %677 = vmatpush2.msra.mxu0 0.0
        %678 = vmatprep.mubr.f32.mxu0 0.0
        %679 = vmatmul.mubr.f32.gmra.mxu0 %v603
        %v680 = vpop.f32.mrf.mxu0
        %v681 = vadd.f32 0.0, %v680
        %v682 = vpop.f32.mrf.mxu0
        %683 = vmatprep.mubr.f32.mxu0 0.0
        %684 = vmatmul.mubr.f32.gmra.mxu0 %v606
        %v685 = vpop.f32.mrf.mxu0
        %v686 = vadd.f32 0.0, %v685
        %v687 = vpop.f32.mrf.mxu0
        %688 = vmatprep.mubr.f32.mxu0 0.0
        %689 = vmatmul.mubr.f32.gmra.mxu0 %v609
        %v690 = vpop.f32.mrf.mxu0
        %v691 = vadd.f32 0.0, %v690
        %v692 = vpop.f32.mrf.mxu0
        %693 = vmatprep.mubr.f32.mxu0 0.0
        %694 = vmatmul.mubr.f32.gmra.mxu0 %v612
        %v695 = vpop.f32.mrf.mxu0
        %v696 = vadd.f32 0.0, %v695
        %v697 = vpop.f32.mrf.mxu0
        %698 = vdwg.mxu0
        %v699 = vpack.c.bf16 %v686, %v681
        %v700 = vpack.c.bf16 %v696, %v691
        %v703 = vunpack.c.l.b16 %v699
        %v704 = vunpack.c.h.b16 %v699
        %v705 = vunpack.c.l.b16 %v700
        %v706 = vunpack.c.h.b16 %v700
        %v707 = vpack.c.b16 %v703, %v703
        %v708 = vpack.c.b16 %v704, %v704
        %v709 = vpack.c.b16 %v705, %v705
        %v710 = vpack.c.b16 %v706, %v706
        %vm711 = vsmask.f32 256
        %vm712 = vsmask.f32 4368
        %vm713 = vmor %vm711, %vm712
        %v715 = vshrl.u32 %v707, 16
        %v717 = vrot.slane %v715, 7
        %v718 = vshll.u32 %v707, 16
        %v720 = vor.u32 %v717, %v718
        %v721 = vrot.slane %v717, 4
        %v723 = vshrl.u32 %v708, 16
        %v725 = vrot.slane %v723, 7
        %v726 = vshll.u32 %v708, 16
        %v728 = vor.u32 %v725, %v726
        %v729 = vsel %vm713, %v721, %v728
        %v730 = vrot.slane %v725, 4
        %v732 = vshrl.u32 %v709, 16
        %v734 = vrot.slane %v732, 7
        %v735 = vshll.u32 %v709, 16
        %v737 = vor.u32 %v734, %v735
        %v738 = vsel %vm713, %v730, %v737
        %v739 = vrot.slane %v734, 4
        %v741 = vshrl.u32 %v710, 16
        %v743 = vrot.slane %v741, 7
        %v744 = vshll.u32 %v710, 16
        %v746 = vor.u32 %v743, %v744
        %v747 = vsel %vm713, %v739, %v746
        %v748 = vrot.slane %v743, 4
        %749 = vrot.lane.b32.xlu0 %v720, 4
        %v750 = vpop.permute.xlu0 %749
        %751 = vrot.lane.b32.xlu0 %v729, 4
        %v752 = vpop.permute.xlu0 %751
        %753 = vrot.lane.b32.xlu0 %v738, 4
        %v754 = vpop.permute.xlu0 %753
        %755 = vrot.lane.b32.xlu0 %v747, 4
        %v756 = vpop.permute.xlu0 %755
        %757 = vrot.lane.b32.xlu0 %v748, 4
        %v758 = vpop.permute.xlu0 %757
        %v759 = vrot.slane %v750, 4
        %v760 = vrot.slane %v752, 4
        %v761 = vrot.slane %v754, 4
        %v762 = vrot.slane %v756, 4
        %v763 = vrot.slane %v758, 4
        %vm764 = vcmask 31744
        %v765 = vsel %vm764, %v759, %v750
        %v766 = vsel %vm764, %v760, %v752
        %v767 = vsel %vm764, %v761, %v754
        %v768 = vsel %vm764, %v762, %v756
        %v769 = vsel %vm764, %v763, %v758
        %vm775 = vcmask 1043488
        %vm776 = vsmask.f32 7938
        %vm777 = vmand %vm775, %vm776
        %vm778 = vcmask 31748
        %vm779 = vsmask.f32 7954
        %vm780 = vmand %vm778, %vm779
        %vm781 = vmor %vm780, %vm777
        %v782 = vld [vmem:[#allocation3] sm:$0xff]
        %v783 = vsel %vm781, %v765, %v782
        %784 = vst [vmem:[#allocation3] sm:$0xff] %v783
        %vm785 = vcmask 1043488
        %vm786 = vcmask 31748
        %vm787 = vmor %vm786, %vm785
        %788 = vst.msk [vmem:[#allocation3 + $0x8] sm:$0xff] %vm787, %v766
        %789 = vst.msk [vmem:[#allocation3 + $0x10] sm:$0xff] %vm787, %v767
        %790 = vst.msk [vmem:[#allocation3 + $0x18] sm:$0xff] %vm787, %v768
        %vm791 = vcmask 1040416
        %vm792 = vmand %vm791, %vm711
        %vm793 = vcmask 28676
        %vm794 = vsmask.f32 4352
        %vm795 = vmand %vm793, %vm794
        %vm796 = vmor %vm795, %vm792
        %v797 = vld [vmem:[#allocation3 + $0x20] sm:$0x11]
        %v798 = vsel %vm796, %v769, %v797
        %799 = vst [vmem:[#allocation3 + $0x20] sm:$0x11] %v798
        %v800 = vld [vmem:[%s418] sm:$0xff]
        %v801 = vld [vmem:[%s418 + $0x8] sm:$0xff]
        %v802 = vld [vmem:[%s418 + $0x10] sm:$0xff]
        %v803 = vld [vmem:[%s418 + $0x18] sm:$0xff]
        %v804 = vpack.c.bf16 %v801, %v800
        %v805 = vpack.c.bf16 %v803, %v802
        %v808 = vunpack.c.l.b16 %v804
        %v809 = vunpack.c.h.b16 %v804
        %v810 = vunpack.c.l.b16 %v805
        %v811 = vunpack.c.h.b16 %v805
        %v812 = vpack.c.b16 %v808, %v808
        %v813 = vpack.c.b16 %v809, %v809
        %v814 = vpack.c.b16 %v810, %v810
        %v815 = vpack.c.b16 %v811, %v811
        %v817 = vshrl.u32 %v812, 16
        %v819 = vrot.slane %v817, 7
        %v820 = vshll.u32 %v812, 16
        %v822 = vor.u32 %v819, %v820
        %v823 = vrot.slane %v819, 4
        %v825 = vshrl.u32 %v813, 16
        %v827 = vrot.slane %v825, 7
        %v828 = vshll.u32 %v813, 16
        %v830 = vor.u32 %v827, %v828
        %v831 = vsel %vm713, %v823, %v830
        %v832 = vrot.slane %v827, 4
        %v834 = vshrl.u32 %v814, 16
        %v836 = vrot.slane %v834, 7
        %v837 = vshll.u32 %v814, 16
        %v839 = vor.u32 %v836, %v837
        %v840 = vsel %vm713, %v832, %v839
        %v841 = vrot.slane %v836, 4
        %v843 = vshrl.u32 %v815, 16
        %v845 = vrot.slane %v843, 7
        %v846 = vshll.u32 %v815, 16
        %v848 = vor.u32 %v845, %v846
        %v849 = vsel %vm713, %v841, %v848
        %v850 = vrot.slane %v845, 4
        %851 = vrot.lane.b32.xlu0 %v822, 4
        %v852 = vpop.permute.xlu0 %851
        %853 = vrot.lane.b32.xlu0 %v831, 4
        %v854 = vpop.permute.xlu0 %853
        %855 = vrot.lane.b32.xlu0 %v840, 4
        %v856 = vpop.permute.xlu0 %855
        %857 = vrot.lane.b32.xlu0 %v849, 4
        %v858 = vpop.permute.xlu0 %857
        %859 = vrot.lane.b32.xlu0 %v850, 4
        %v860 = vpop.permute.xlu0 %859
        %v861 = vrot.slane %v852, 4
        %v862 = vrot.slane %v854, 4
        %v863 = vrot.slane %v856, 4
        %v864 = vrot.slane %v858, 4
        %v865 = vrot.slane %v860, 4
        %v866 = vsel %vm764, %v861, %v852
        %v867 = vsel %vm764, %v862, %v854
        %v868 = vsel %vm764, %v863, %v856
        %v869 = vsel %vm764, %v864, %v858
        %v870 = vsel %vm764, %v865, %v860
        %v876 = vld [vmem:[#allocation2] sm:$0xff]
        %v877 = vsel %vm781, %v866, %v876
        %878 = vst [vmem:[#allocation2] sm:$0xff] %v877
        %879 = vst.msk [vmem:[#allocation2 + $0x8] sm:$0xff] %vm787, %v867
        %880 = vst.msk [vmem:[#allocation2 + $0x10] sm:$0xff] %vm787, %v868
        %881 = vst.msk [vmem:[#allocation2 + $0x18] sm:$0xff] %vm787, %v869
        %v882 = vld [vmem:[#allocation2 + $0x20] sm:$0x11]
        %v883 = vsel %vm796, %v870, %v882
        %884 = vst [vmem:[#allocation2 + $0x20] sm:$0x11] %v883
        %v885 = vld [vmem:[#allocation2] sm:$0xf]
        %v886 = vld [vmem:[#allocation2 + $0x8] sm:$0xf]
        %v887 = vld [vmem:[#allocation2 + $0x10] sm:$0xf]
        %v888 = vld [vmem:[#allocation2 + $0x18] sm:$0xf]
        %v889 = vld [vmem:[#allocation3] sm:$0xf]
        %v890 = vld [vmem:[#allocation3 + $0x8] sm:$0xf]
        %v891 = vld [vmem:[#allocation3 + $0x10] sm:$0xf]
        %v892 = vld [vmem:[#allocation3 + $0x18] sm:$0xf]
        %v893 = vld [vmem:[#allocation10] sm:$0xf]
        %v894 = vld [vmem:[#allocation10 + $0x4] sm:$0xf]
        %v895 = vld [vmem:[#allocation10 + $0x8] sm:$0xf]
        %v896 = vld [vmem:[#allocation10 + $0xc] sm:$0xf]
        %v897 = vld [vmem:[#allocation10 + $0x10] sm:$0xf]
        %v898 = vld [vmem:[#allocation10 + $0x14] sm:$0xf]
        %v899 = vld [vmem:[#allocation10 + $0x18] sm:$0xf]
        %v900 = vld [vmem:[#allocation10 + $0x1c] sm:$0xf]
        %v901 = vld [vmem:[#allocation10 + $0x20] sm:$0xf]
        %v902 = vld [vmem:[#allocation10 + $0x24] sm:$0xf]
        %v903 = vld [vmem:[#allocation10 + $0x28] sm:$0xf]
        %v904 = vld [vmem:[#allocation10 + $0x2c] sm:$0xf]
        %v905 = vld [vmem:[#allocation10 + $0x30] sm:$0xf]
        %v906 = vld [vmem:[#allocation10 + $0x34] sm:$0xf]
        %v907 = vld [vmem:[#allocation10 + $0x38] sm:$0xf]
        %v908 = vld [vmem:[#allocation10 + $0x3c] sm:$0xf]
        %v909 = vld [vmem:[#allocation11] sm:$0xf]
        %v910 = vld [vmem:[#allocation11 + $0x4] sm:$0xf]
        %v911 = vld [vmem:[#allocation11 + $0x8] sm:$0xf]
        %v912 = vld [vmem:[#allocation11 + $0xc] sm:$0xf]
        %v913 = vld [vmem:[#allocation11 + $0x10] sm:$0xf]
        %v914 = vld [vmem:[#allocation11 + $0x14] sm:$0xf]
        %v915 = vld [vmem:[#allocation11 + $0x18] sm:$0xf]
        %v916 = vld [vmem:[#allocation11 + $0x1c] sm:$0xf]
        %v917 = vld [vmem:[#allocation11 + $0x20] sm:$0xf]
        %v918 = vld [vmem:[#allocation11 + $0x24] sm:$0xf]
        %v919 = vld [vmem:[#allocation11 + $0x28] sm:$0xf]
        %v920 = vld [vmem:[#allocation11 + $0x2c] sm:$0xf]
        %v921 = vld [vmem:[#allocation11 + $0x30] sm:$0xf]
        %v922 = vld [vmem:[#allocation11 + $0x34] sm:$0xf]
        %v923 = vld [vmem:[#allocation11 + $0x38] sm:$0xf]
        %v924 = vld [vmem:[#allocation11 + $0x3c] sm:$0xf]
        %v929 = vunpack.c.l.b16 %v889
        %v930 = vunpack.c.l.b16 %v890
        %v931 = vunpack.c.l.b16 %v891
        %v932 = vunpack.c.l.b16 %v892
        %v933 = vpack.c.b16 %v930, %v929
        %v934 = vpack.c.b16 %v932, %v931
        %v953 = vunpack.c.l.b16 %v909
        %v954 = vunpack.c.l.b16 %v910
        %v955 = vunpack.c.l.b16 %v911
        %v956 = vunpack.c.l.b16 %v912
        %v957 = vunpack.c.l.b16 %v913
        %v958 = vunpack.c.l.b16 %v914
        %v959 = vunpack.c.l.b16 %v915
        %v960 = vunpack.c.l.b16 %v916
        %v961 = vunpack.c.l.b16 %v917
        %v962 = vunpack.c.l.b16 %v918
        %v963 = vunpack.c.l.b16 %v919
        %v964 = vunpack.c.l.b16 %v920
        %v965 = vunpack.c.l.b16 %v921
        %v966 = vunpack.c.l.b16 %v922
        %v967 = vunpack.c.l.b16 %v923
        %v968 = vunpack.c.l.b16 %v924
        %v969 = vpack.c.b16 %v954, %v953
        %v970 = vpack.c.b16 %v956, %v955
        %v971 = vpack.c.b16 %v958, %v957
        %v972 = vpack.c.b16 %v960, %v959
        %v973 = vpack.c.b16 %v962, %v961
        %v974 = vpack.c.b16 %v964, %v963
        %v975 = vpack.c.b16 %v966, %v965
        %v976 = vpack.c.b16 %v968, %v967
        %985 = vmatprep.subr.bf16.mxu0 0
        %986 = vmatpush1.bf16.msra.mxu0 %v976
        %987 = vmatprep.subr.bf16.mxu0 0
        %988 = vmatpush1.bf16.msra.mxu0 %v975
        %989 = vmatprep.subr.bf16.mxu0 0
        %990 = vmatpush1.bf16.msra.mxu0 %v974
        %991 = vmatprep.subr.bf16.mxu0 0
        %992 = vmatpush1.bf16.msra.mxu0 %v973
        %993 = vmatprep.subr.bf16.mxu0 0
        %994 = vmatpush1.bf16.msra.mxu0 %v972
        %995 = vmatprep.subr.bf16.mxu0 0
        %996 = vmatpush1.bf16.msra.mxu0 %v971
        %997 = vmatprep.subr.bf16.mxu0 0
        %998 = vmatpush1.bf16.msra.mxu0 %v970
        %999 = vmatprep.subr.bf16.mxu0 0
        %1000 = vmatpush1.bf16.msra.mxu0 %v969
        %1001 = vmatprep.subr.bf16.mxu0 0
        %1002 = vmatpush2.bf16.msra.mxu0 0
        %1003 = vmatprep.subr.bf16.mxu0 0
        %1004 = vmatpush2.bf16.msra.mxu0 0
        %1005 = vmatprep.subr.bf16.mxu0 0
        %1006 = vmatpush2.bf16.msra.mxu0 0
        %1007 = vmatprep.subr.bf16.mxu0 0
        %1008 = vmatpush2.bf16.msra.mxu0 0
        %1009 = vmatprep.subr.bf16.mxu0 0
        %1010 = vmatpush2.bf16.msra.mxu0 0
        %1011 = vmatprep.subr.bf16.mxu0 0
        %1012 = vmatpush2.bf16.msra.mxu0 0
        %1013 = vmatprep.subr.bf16.mxu0 0
        %1014 = vmatpush2.bf16.msra.mxu0 0
        %1015 = vmatprep.subr.bf16.mxu0 0
        %1016 = vmatpush2.bf16.msra.mxu0 0
        %1017 = vmatprep.mubr.bf16.mxu0 0
        %1018 = vmatmul.mubr.bf16.gmra.mxu0 %v933
        %v1019 = vpop.f32.mrf.mxu0
        %v1020 = vadd.f32 0.0, %v1019
        %v1021 = vpop.f32.mrf.mxu0
        %v1022 = vpop.f32.mrf.mxu0
        %v1023 = vadd.f32 0.0, %v1022
        %v1024 = vpop.f32.mrf.mxu0
        %1025 = vmatprep.mubr.bf16.mxu0 0
        %1026 = vmatmul.mubr.bf16.gmra.mxu0 %v934
        %v1027 = vpop.f32.mrf.mxu0
        %v1028 = vadd.f32 0.0, %v1027
        %v1029 = vpop.f32.mrf.mxu0
        %v1030 = vpop.f32.mrf.mxu0
        %v1031 = vadd.f32 0.0, %v1030
        %v1032 = vpop.f32.mrf.mxu0
        %1033 = vdwg.mxu0
        %v1038 = vunpack.c.l.b16 %v885
        %v1039 = vunpack.c.l.b16 %v886
        %v1040 = vunpack.c.l.b16 %v887
        %v1041 = vunpack.c.l.b16 %v888
        %v1042 = vpack.c.b16 %v1039, %v1038
        %v1043 = vpack.c.b16 %v1041, %v1040
        %v1062 = vunpack.c.l.b16 %v893
        %v1063 = vunpack.c.l.b16 %v894
        %v1064 = vunpack.c.l.b16 %v895
        %v1065 = vunpack.c.l.b16 %v896
        %v1066 = vunpack.c.l.b16 %v897
        %v1067 = vunpack.c.l.b16 %v898
        %v1068 = vunpack.c.l.b16 %v899
        %v1069 = vunpack.c.l.b16 %v900
        %v1070 = vunpack.c.l.b16 %v901
        %v1071 = vunpack.c.l.b16 %v902
        %v1072 = vunpack.c.l.b16 %v903
        %v1073 = vunpack.c.l.b16 %v904
        %v1074 = vunpack.c.l.b16 %v905
        %v1075 = vunpack.c.l.b16 %v906
        %v1076 = vunpack.c.l.b16 %v907
        %v1077 = vunpack.c.l.b16 %v908
        %v1078 = vpack.c.b16 %v1063, %v1062
        %v1079 = vpack.c.b16 %v1065, %v1064
        %v1080 = vpack.c.b16 %v1067, %v1066
        %v1081 = vpack.c.b16 %v1069, %v1068
        %v1082 = vpack.c.b16 %v1071, %v1070
        %v1083 = vpack.c.b16 %v1073, %v1072
        %v1084 = vpack.c.b16 %v1075, %v1074
        %v1085 = vpack.c.b16 %v1077, %v1076
        %1094 = vmatprep.subr.bf16.mxu0 0
        %1095 = vmatpush1.bf16.msra.mxu0 %v1085
        %1096 = vmatprep.subr.bf16.mxu0 0
        %1097 = vmatpush1.bf16.msra.mxu0 %v1084
        %1098 = vmatprep.subr.bf16.mxu0 0
        %1099 = vmatpush1.bf16.msra.mxu0 %v1083
        %1100 = vmatprep.subr.bf16.mxu0 0
        %1101 = vmatpush1.bf16.msra.mxu0 %v1082
        %1102 = vmatprep.subr.bf16.mxu0 0
        %1103 = vmatpush1.bf16.msra.mxu0 %v1081
        %1104 = vmatprep.subr.bf16.mxu0 0
        %1105 = vmatpush1.bf16.msra.mxu0 %v1080
        %1106 = vmatprep.subr.bf16.mxu0 0
        %1107 = vmatpush1.bf16.msra.mxu0 %v1079
        %1108 = vmatprep.subr.bf16.mxu0 0
        %1109 = vmatpush1.bf16.msra.mxu0 %v1078
        %1110 = vmatprep.subr.bf16.mxu0 0
        %1111 = vmatpush2.bf16.msra.mxu0 0
        %1112 = vmatprep.subr.bf16.mxu0 0
        %1113 = vmatpush2.bf16.msra.mxu0 0
        %1114 = vmatprep.subr.bf16.mxu0 0
        %1115 = vmatpush2.bf16.msra.mxu0 0
        %1116 = vmatprep.subr.bf16.mxu0 0
        %1117 = vmatpush2.bf16.msra.mxu0 0
        %1118 = vmatprep.subr.bf16.mxu0 0
        %1119 = vmatpush2.bf16.msra.mxu0 0
        %1120 = vmatprep.subr.bf16.mxu0 0
        %1121 = vmatpush2.bf16.msra.mxu0 0
        %1122 = vmatprep.subr.bf16.mxu0 0
        %1123 = vmatpush2.bf16.msra.mxu0 0
        %1124 = vmatprep.subr.bf16.mxu0 0
        %1125 = vmatpush2.bf16.msra.mxu0 0
        %1126 = vmatprep.mubr.bf16.mxu0 0
        %1127 = vmatmul.mubr.bf16.gmra.mxu0 %v1042
        %v1128 = vpop.f32.mrf.mxu0
        %v1129 = vadd.f32 %v1020, %v1128
        %v1130 = vpop.f32.mrf.mxu0
        %v1131 = vpop.f32.mrf.mxu0
        %v1132 = vadd.f32 %v1023, %v1131
        %v1133 = vpop.f32.mrf.mxu0
        %1134 = vmatprep.mubr.bf16.mxu0 0
        %1135 = vmatmul.mubr.bf16.gmra.mxu0 %v1043
        %v1136 = vpop.f32.mrf.mxu0
        %v1137 = vadd.f32 %v1028, %v1136
        %v1138 = vpop.f32.mrf.mxu0
        %v1139 = vpop.f32.mrf.mxu0
        %v1140 = vadd.f32 %v1031, %v1139
        %v1141 = vpop.f32.mrf.mxu0
        %1142 = vdwg.mxu0
        %v1143 = vld [vmem:[#allocation2] sm:$0xff]
        %v1144 = vld [vmem:[#allocation2 + $0x8] sm:$0xff]
        %v1145 = vld [vmem:[#allocation2 + $0x10] sm:$0xff]
        %v1146 = vld [vmem:[#allocation2 + $0x18] sm:$0xff]
        %v1147 = vld [vmem:[#allocation3] sm:$0xff]
        %v1148 = vld [vmem:[#allocation3 + $0x8] sm:$0xff]
        %v1149 = vld [vmem:[#allocation3 + $0x10] sm:$0xff]
        %v1150 = vld [vmem:[#allocation3 + $0x18] sm:$0xff]
        %s1151 = scalar_lea.vmem [#allocation10], 64
        %v1152 = vld [vmem:[%s1151] sm:$0xf]
        %v1153 = vld [vmem:[%s1151 + $0x4] sm:$0xf]
        %v1154 = vld [vmem:[%s1151 + $0x8] sm:$0xf]
        %v1155 = vld [vmem:[%s1151 + $0xc] sm:$0xf]
        %v1156 = vld [vmem:[%s1151 + $0x10] sm:$0xf]
        %v1157 = vld [vmem:[%s1151 + $0x14] sm:$0xf]
        %v1158 = vld [vmem:[%s1151 + $0x18] sm:$0xf]
        %v1159 = vld [vmem:[%s1151 + $0x1c] sm:$0xf]
        %v1160 = vld [vmem:[%s1151 + $0x20] sm:$0xf]
        %v1161 = vld [vmem:[%s1151 + $0x24] sm:$0xf]
        %v1162 = vld [vmem:[%s1151 + $0x28] sm:$0xf]
        %v1163 = vld [vmem:[%s1151 + $0x2c] sm:$0xf]
        %v1164 = vld [vmem:[%s1151 + $0x30] sm:$0xf]
        %v1165 = vld [vmem:[%s1151 + $0x34] sm:$0xf]
        %v1166 = vld [vmem:[%s1151 + $0x38] sm:$0xf]
        %v1167 = vld [vmem:[%s1151 + $0x3c] sm:$0xf]
        %v1172 = vunpack.c.l.b16 %v1143
        %v1173 = vunpack.c.h.b16 %v1143
        %v1174 = vunpack.c.l.b16 %v1144
        %v1175 = vunpack.c.h.b16 %v1144
        %v1176 = vunpack.c.l.b16 %v1145
        %v1177 = vunpack.c.h.b16 %v1145
        %v1178 = vunpack.c.l.b16 %v1146
        %v1179 = vunpack.c.h.b16 %v1146
        %v1180 = vpack.c.b16 %v1174, %v1172
        %v1181 = vpack.c.b16 %v1175, %v1173
        %v1182 = vpack.c.b16 %v1178, %v1176
        %v1183 = vpack.c.b16 %v1179, %v1177
        %1184 = vrot.lane.b32.xlu0 %v1180, 124
        %v1185 = vpop.permute.xlu0 %1184
        %1186 = vrot.lane.b32.xlu0 %v1181, 124
        %v1187 = vpop.permute.xlu0 %1186
        %1188 = vrot.lane.b32.xlu0 %v1182, 124
        %v1189 = vpop.permute.xlu0 %1188
        %1190 = vrot.lane.b32.xlu0 %v1183, 124
        %v1191 = vpop.permute.xlu0 %1190
        %vm1192 = vcmask 1014784
        %v1193 = vsel %vm1192, %v1185, %v1187
        %v1194 = vsel %vm1192, %v1189, %v1191
        %v1213 = vunpack.c.l.b16 %v1152
        %v1214 = vunpack.c.l.b16 %v1153
        %v1215 = vunpack.c.l.b16 %v1154
        %v1216 = vunpack.c.l.b16 %v1155
        %v1217 = vunpack.c.l.b16 %v1156
        %v1218 = vunpack.c.l.b16 %v1157
        %v1219 = vunpack.c.l.b16 %v1158
        %v1220 = vunpack.c.l.b16 %v1159
        %v1221 = vunpack.c.l.b16 %v1160
        %v1222 = vunpack.c.l.b16 %v1161
        %v1223 = vunpack.c.l.b16 %v1162
        %v1224 = vunpack.c.l.b16 %v1163
        %v1225 = vunpack.c.l.b16 %v1164
        %v1226 = vunpack.c.l.b16 %v1165
        %v1227 = vunpack.c.l.b16 %v1166
        %v1228 = vunpack.c.l.b16 %v1167
        %v1229 = vpack.c.b16 %v1214, %v1213
        %v1230 = vpack.c.b16 %v1216, %v1215
        %v1231 = vpack.c.b16 %v1218, %v1217
        %v1232 = vpack.c.b16 %v1220, %v1219
        %v1233 = vpack.c.b16 %v1222, %v1221
        %v1234 = vpack.c.b16 %v1224, %v1223
        %v1235 = vpack.c.b16 %v1226, %v1225
        %v1236 = vpack.c.b16 %v1228, %v1227
        %1245 = vmatprep.subr.bf16.mxu0 0
        %1246 = vmatpush1.bf16.msra.mxu0 %v1236
        %1247 = vmatprep.subr.bf16.mxu0 0
        %1248 = vmatpush1.bf16.msra.mxu0 %v1235
        %1249 = vmatprep.subr.bf16.mxu0 0
        %1250 = vmatpush1.bf16.msra.mxu0 %v1234
        %1251 = vmatprep.subr.bf16.mxu0 0
        %1252 = vmatpush1.bf16.msra.mxu0 %v1233
        %1253 = vmatprep.subr.bf16.mxu0 0
        %1254 = vmatpush1.bf16.msra.mxu0 %v1232
        %1255 = vmatprep.subr.bf16.mxu0 0
        %1256 = vmatpush1.bf16.msra.mxu0 %v1231
        %1257 = vmatprep.subr.bf16.mxu0 0
        %1258 = vmatpush1.bf16.msra.mxu0 %v1230
        %1259 = vmatprep.subr.bf16.mxu0 0
        %1260 = vmatpush1.bf16.msra.mxu0 %v1229
        %1261 = vmatprep.subr.bf16.mxu0 0
        %1262 = vmatpush2.bf16.msra.mxu0 0
        %1263 = vmatprep.subr.bf16.mxu0 0
        %1264 = vmatpush2.bf16.msra.mxu0 0
        %1265 = vmatprep.subr.bf16.mxu0 0
        %1266 = vmatpush2.bf16.msra.mxu0 0
        %1267 = vmatprep.subr.bf16.mxu0 0
        %1268 = vmatpush2.bf16.msra.mxu0 0
        %1269 = vmatprep.subr.bf16.mxu0 0
        %1270 = vmatpush2.bf16.msra.mxu0 0
        %1271 = vmatprep.subr.bf16.mxu0 0
        %1272 = vmatpush2.bf16.msra.mxu0 0
        %1273 = vmatprep.subr.bf16.mxu0 0
        %1274 = vmatpush2.bf16.msra.mxu0 0
        %1275 = vmatprep.subr.bf16.mxu0 0
        %1276 = vmatpush2.bf16.msra.mxu0 0
        %1277 = vmatprep.mubr.bf16.mxu0 0
        %1278 = vmatmul.mubr.bf16.gmra.mxu0 %v1193
        %v1279 = vpop.f32.mrf.mxu0
        %v1280 = vadd.f32 0.0, %v1279
        %v1281 = vpop.f32.mrf.mxu0
        %v1282 = vpop.f32.mrf.mxu0
        %v1283 = vadd.f32 0.0, %v1282
        %v1284 = vpop.f32.mrf.mxu0
        %1285 = vmatprep.mubr.bf16.mxu0 0
        %1286 = vmatmul.mubr.bf16.gmra.mxu0 %v1194
        %v1287 = vpop.f32.mrf.mxu0
        %v1288 = vadd.f32 0.0, %v1287
        %v1289 = vpop.f32.mrf.mxu0
        %v1290 = vpop.f32.mrf.mxu0
        %v1291 = vadd.f32 0.0, %v1290
        %v1292 = vpop.f32.mrf.mxu0
        %1293 = vdwg.mxu0
        %v1294 = vadd.f32 %v1129, %v1280
        %v1295 = vadd.f32 %v1132, %v1283
        %v1296 = vadd.f32 %v1137, %v1288
        %v1297 = vadd.f32 %v1140, %v1291
        %s1298 = scalar_lea.vmem [#allocation11], 64
        %v1299 = vld [vmem:[%s1298] sm:$0xf]
        %v1300 = vld [vmem:[%s1298 + $0x4] sm:$0xf]
        %v1301 = vld [vmem:[%s1298 + $0x8] sm:$0xf]
        %v1302 = vld [vmem:[%s1298 + $0xc] sm:$0xf]
        %v1303 = vld [vmem:[%s1298 + $0x10] sm:$0xf]
        %v1304 = vld [vmem:[%s1298 + $0x14] sm:$0xf]
        %v1305 = vld [vmem:[%s1298 + $0x18] sm:$0xf]
        %v1306 = vld [vmem:[%s1298 + $0x1c] sm:$0xf]
        %v1307 = vld [vmem:[%s1298 + $0x20] sm:$0xf]
        %v1308 = vld [vmem:[%s1298 + $0x24] sm:$0xf]
        %v1309 = vld [vmem:[%s1298 + $0x28] sm:$0xf]
        %v1310 = vld [vmem:[%s1298 + $0x2c] sm:$0xf]
        %v1311 = vld [vmem:[%s1298 + $0x30] sm:$0xf]
        %v1312 = vld [vmem:[%s1298 + $0x34] sm:$0xf]
        %v1313 = vld [vmem:[%s1298 + $0x38] sm:$0xf]
        %v1314 = vld [vmem:[%s1298 + $0x3c] sm:$0xf]
        %v1319 = vunpack.c.l.b16 %v1147
        %v1320 = vunpack.c.h.b16 %v1147
        %v1321 = vunpack.c.l.b16 %v1148
        %v1322 = vunpack.c.h.b16 %v1148
        %v1323 = vunpack.c.l.b16 %v1149
        %v1324 = vunpack.c.h.b16 %v1149
        %v1325 = vunpack.c.l.b16 %v1150
        %v1326 = vunpack.c.h.b16 %v1150
        %v1327 = vpack.c.b16 %v1321, %v1319
        %v1328 = vpack.c.b16 %v1322, %v1320
        %v1329 = vpack.c.b16 %v1325, %v1323
        %v1330 = vpack.c.b16 %v1326, %v1324
        %1331 = vrot.lane.b32.xlu0 %v1327, 124
        %v1332 = vpop.permute.xlu0 %1331
        %1333 = vrot.lane.b32.xlu0 %v1328, 124
        %v1334 = vpop.permute.xlu0 %1333
        %1335 = vrot.lane.b32.xlu0 %v1329, 124
        %v1336 = vpop.permute.xlu0 %1335
        %1337 = vrot.lane.b32.xlu0 %v1330, 124
        %v1338 = vpop.permute.xlu0 %1337
        %v1339 = vsel %vm1192, %v1332, %v1334
        %v1340 = vsel %vm1192, %v1336, %v1338
        %v1359 = vunpack.c.l.b16 %v1299
        %v1360 = vunpack.c.l.b16 %v1300
        %v1361 = vunpack.c.l.b16 %v1301
        %v1362 = vunpack.c.l.b16 %v1302
        %v1363 = vunpack.c.l.b16 %v1303
        %v1364 = vunpack.c.l.b16 %v1304
        %v1365 = vunpack.c.l.b16 %v1305
        %v1366 = vunpack.c.l.b16 %v1306
        %v1367 = vunpack.c.l.b16 %v1307
        %v1368 = vunpack.c.l.b16 %v1308
        %v1369 = vunpack.c.l.b16 %v1309
        %v1370 = vunpack.c.l.b16 %v1310
        %v1371 = vunpack.c.l.b16 %v1311
        %v1372 = vunpack.c.l.b16 %v1312
        %v1373 = vunpack.c.l.b16 %v1313
        %v1374 = vunpack.c.l.b16 %v1314
        %v1375 = vpack.c.b16 %v1360, %v1359
        %v1376 = vpack.c.b16 %v1362, %v1361
        %v1377 = vpack.c.b16 %v1364, %v1363
        %v1378 = vpack.c.b16 %v1366, %v1365
        %v1379 = vpack.c.b16 %v1368, %v1367
        %v1380 = vpack.c.b16 %v1370, %v1369
        %v1381 = vpack.c.b16 %v1372, %v1371
        %v1382 = vpack.c.b16 %v1374, %v1373
        %1391 = vmatprep.subr.bf16.mxu0 0
        %1392 = vmatpush1.bf16.msra.mxu0 %v1382
        %1393 = vmatprep.subr.bf16.mxu0 0
        %1394 = vmatpush1.bf16.msra.mxu0 %v1381
        %1395 = vmatprep.subr.bf16.mxu0 0
        %1396 = vmatpush1.bf16.msra.mxu0 %v1380
        %1397 = vmatprep.subr.bf16.mxu0 0
        %1398 = vmatpush1.bf16.msra.mxu0 %v1379
        %1399 = vmatprep.subr.bf16.mxu0 0
        %1400 = vmatpush1.bf16.msra.mxu0 %v1378
        %1401 = vmatprep.subr.bf16.mxu0 0
        %1402 = vmatpush1.bf16.msra.mxu0 %v1377
        %1403 = vmatprep.subr.bf16.mxu0 0
        %1404 = vmatpush1.bf16.msra.mxu0 %v1376
        %1405 = vmatprep.subr.bf16.mxu0 0
        %1406 = vmatpush1.bf16.msra.mxu0 %v1375
        %1407 = vmatprep.subr.bf16.mxu0 0
        %1408 = vmatpush2.bf16.msra.mxu0 0
        %1409 = vmatprep.subr.bf16.mxu0 0
        %1410 = vmatpush2.bf16.msra.mxu0 0
        %1411 = vmatprep.subr.bf16.mxu0 0
        %1412 = vmatpush2.bf16.msra.mxu0 0
        %1413 = vmatprep.subr.bf16.mxu0 0
        %1414 = vmatpush2.bf16.msra.mxu0 0
        %1415 = vmatprep.subr.bf16.mxu0 0
        %1416 = vmatpush2.bf16.msra.mxu0 0
        %1417 = vmatprep.subr.bf16.mxu0 0
        %1418 = vmatpush2.bf16.msra.mxu0 0
        %1419 = vmatprep.subr.bf16.mxu0 0
        %1420 = vmatpush2.bf16.msra.mxu0 0
        %1421 = vmatprep.subr.bf16.mxu0 0
        %1422 = vmatpush2.bf16.msra.mxu0 0
        %1423 = vmatprep.mubr.bf16.mxu0 0
        %1424 = vmatmul.mubr.bf16.gmra.mxu0 %v1339
        %v1425 = vpop.f32.mrf.mxu0
        %v1426 = vadd.f32 0.0, %v1425
        %v1427 = vpop.f32.mrf.mxu0
        %v1428 = vpop.f32.mrf.mxu0
        %v1429 = vadd.f32 0.0, %v1428
        %v1430 = vpop.f32.mrf.mxu0
        %1431 = vmatprep.mubr.bf16.mxu0 0
        %1432 = vmatmul.mubr.bf16.gmra.mxu0 %v1340
        %v1433 = vpop.f32.mrf.mxu0
        %v1434 = vadd.f32 0.0, %v1433
        %v1435 = vpop.f32.mrf.mxu0
        %v1436 = vpop.f32.mrf.mxu0
        %v1437 = vadd.f32 0.0, %v1436
        %v1438 = vpop.f32.mrf.mxu0
        %1439 = vdwg.mxu0
        %v1440 = vadd.f32 %v1294, %v1426
        %v1441 = vadd.f32 %v1295, %v1429
        %v1442 = vadd.f32 %v1296, %v1434
        %v1443 = vadd.f32 %v1297, %v1437
        %s1444 = scalar_lea.vmem [#allocation10], 128
        %v1445 = vld [vmem:[%s1444] sm:$0xf]
        %v1446 = vld [vmem:[%s1444 + $0x4] sm:$0xf]
        %v1447 = vld [vmem:[%s1444 + $0x8] sm:$0xf]
        %v1448 = vld [vmem:[%s1444 + $0xc] sm:$0xf]
        %v1449 = vld [vmem:[%s1444 + $0x10] sm:$0xf]
        %v1450 = vld [vmem:[%s1444 + $0x14] sm:$0xf]
        %v1451 = vld [vmem:[%s1444 + $0x18] sm:$0xf]
        %v1452 = vld [vmem:[%s1444 + $0x1c] sm:$0xf]
        %v1453 = vld [vmem:[%s1444 + $0x20] sm:$0xf]
        %v1454 = vld [vmem:[%s1444 + $0x24] sm:$0xf]
        %v1455 = vld [vmem:[%s1444 + $0x28] sm:$0xf]
        %v1456 = vld [vmem:[%s1444 + $0x2c] sm:$0xf]
        %v1457 = vld [vmem:[%s1444 + $0x30] sm:$0xf]
        %v1458 = vld [vmem:[%s1444 + $0x34] sm:$0xf]
        %v1459 = vld [vmem:[%s1444 + $0x38] sm:$0xf]
        %v1460 = vld [vmem:[%s1444 + $0x3c] sm:$0xf]
        %1461 = vrot.lane.b32.xlu0 %v1180, 120
        %v1462 = vpop.permute.xlu0 %1461
        %1463 = vrot.lane.b32.xlu0 %v1181, 120
        %v1464 = vpop.permute.xlu0 %1463
        %1465 = vrot.lane.b32.xlu0 %v1182, 120
        %v1466 = vpop.permute.xlu0 %1465
        %1467 = vrot.lane.b32.xlu0 %v1183, 120
        %v1468 = vpop.permute.xlu0 %1467
        %vm1469 = vcmask 982016
        %v1470 = vsel %vm1469, %v1462, %v1464
        %v1471 = vsel %vm1469, %v1466, %v1468
        %v1490 = vunpack.c.l.b16 %v1445
        %v1491 = vunpack.c.l.b16 %v1446
        %v1492 = vunpack.c.l.b16 %v1447
        %v1493 = vunpack.c.l.b16 %v1448
        %v1494 = vunpack.c.l.b16 %v1449
        %v1495 = vunpack.c.l.b16 %v1450
        %v1496 = vunpack.c.l.b16 %v1451
        %v1497 = vunpack.c.l.b16 %v1452
        %v1498 = vunpack.c.l.b16 %v1453
        %v1499 = vunpack.c.l.b16 %v1454
        %v1500 = vunpack.c.l.b16 %v1455
        %v1501 = vunpack.c.l.b16 %v1456
        %v1502 = vunpack.c.l.b16 %v1457
        %v1503 = vunpack.c.l.b16 %v1458
        %v1504 = vunpack.c.l.b16 %v1459
        %v1505 = vunpack.c.l.b16 %v1460
        %v1506 = vpack.c.b16 %v1491, %v1490
        %v1507 = vpack.c.b16 %v1493, %v1492
        %v1508 = vpack.c.b16 %v1495, %v1494
        %v1509 = vpack.c.b16 %v1497, %v1496
        %v1510 = vpack.c.b16 %v1499, %v1498
        %v1511 = vpack.c.b16 %v1501, %v1500
        %v1512 = vpack.c.b16 %v1503, %v1502
        %v1513 = vpack.c.b16 %v1505, %v1504
        %1522 = vmatprep.subr.bf16.mxu0 0
        %1523 = vmatpush1.bf16.msra.mxu0 %v1513
        %1524 = vmatprep.subr.bf16.mxu0 0
        %1525 = vmatpush1.bf16.msra.mxu0 %v1512
        %1526 = vmatprep.subr.bf16.mxu0 0
        %1527 = vmatpush1.bf16.msra.mxu0 %v1511
        %1528 = vmatprep.subr.bf16.mxu0 0
        %1529 = vmatpush1.bf16.msra.mxu0 %v1510
        %1530 = vmatprep.subr.bf16.mxu0 0
        %1531 = vmatpush1.bf16.msra.mxu0 %v1509
        %1532 = vmatprep.subr.bf16.mxu0 0
        %1533 = vmatpush1.bf16.msra.mxu0 %v1508
        %1534 = vmatprep.subr.bf16.mxu0 0
        %1535 = vmatpush1.bf16.msra.mxu0 %v1507
        %1536 = vmatprep.subr.bf16.mxu0 0
        %1537 = vmatpush1.bf16.msra.mxu0 %v1506
        %1538 = vmatprep.subr.bf16.mxu0 0
        %1539 = vmatpush2.bf16.msra.mxu0 0
        %1540 = vmatprep.subr.bf16.mxu0 0
        %1541 = vmatpush2.bf16.msra.mxu0 0
        %1542 = vmatprep.subr.bf16.mxu0 0
        %1543 = vmatpush2.bf16.msra.mxu0 0
        %1544 = vmatprep.subr.bf16.mxu0 0
        %1545 = vmatpush2.bf16.msra.mxu0 0
        %1546 = vmatprep.subr.bf16.mxu0 0
        %1547 = vmatpush2.bf16.msra.mxu0 0
        %1548 = vmatprep.subr.bf16.mxu0 0
        %1549 = vmatpush2.bf16.msra.mxu0 0
        %1550 = vmatprep.subr.bf16.mxu0 0
        %1551 = vmatpush2.bf16.msra.mxu0 0
        %1552 = vmatprep.subr.bf16.mxu0 0
        %1553 = vmatpush2.bf16.msra.mxu0 0
        %1554 = vmatprep.mubr.bf16.mxu0 0
        %1555 = vmatmul.mubr.bf16.gmra.mxu0 %v1470
        %v1556 = vpop.f32.mrf.mxu0
        %v1557 = vadd.f32 0.0, %v1556
        %v1558 = vpop.f32.mrf.mxu0
        %v1559 = vpop.f32.mrf.mxu0
        %v1560 = vadd.f32 0.0, %v1559
        %v1561 = vpop.f32.mrf.mxu0
        %1562 = vmatprep.mubr.bf16.mxu0 0
        %1563 = vmatmul.mubr.bf16.gmra.mxu0 %v1471
        %v1564 = vpop.f32.mrf.mxu0
        %v1565 = vadd.f32 0.0, %v1564
        %v1566 = vpop.f32.mrf.mxu0
        %v1567 = vpop.f32.mrf.mxu0
        %v1568 = vadd.f32 0.0, %v1567
        %v1569 = vpop.f32.mrf.mxu0
        %1570 = vdwg.mxu0
        %v1571 = vadd.f32 %v1440, %v1557
        %v1572 = vadd.f32 %v1441, %v1560
        %v1573 = vadd.f32 %v1442, %v1565
        %v1574 = vadd.f32 %v1443, %v1568
        %s1575 = scalar_lea.vmem [#allocation11], 128
        %v1576 = vld [vmem:[%s1575] sm:$0xf]
        %v1577 = vld [vmem:[%s1575 + $0x4] sm:$0xf]
        %v1578 = vld [vmem:[%s1575 + $0x8] sm:$0xf]
        %v1579 = vld [vmem:[%s1575 + $0xc] sm:$0xf]
        %v1580 = vld [vmem:[%s1575 + $0x10] sm:$0xf]
        %v1581 = vld [vmem:[%s1575 + $0x14] sm:$0xf]
        %v1582 = vld [vmem:[%s1575 + $0x18] sm:$0xf]
        %v1583 = vld [vmem:[%s1575 + $0x1c] sm:$0xf]
        %v1584 = vld [vmem:[%s1575 + $0x20] sm:$0xf]
        %v1585 = vld [vmem:[%s1575 + $0x24] sm:$0xf]
        %v1586 = vld [vmem:[%s1575 + $0x28] sm:$0xf]
        %v1587 = vld [vmem:[%s1575 + $0x2c] sm:$0xf]
        %v1588 = vld [vmem:[%s1575 + $0x30] sm:$0xf]
        %v1589 = vld [vmem:[%s1575 + $0x34] sm:$0xf]
        %v1590 = vld [vmem:[%s1575 + $0x38] sm:$0xf]
        %v1591 = vld [vmem:[%s1575 + $0x3c] sm:$0xf]
        %1592 = vrot.lane.b32.xlu0 %v1327, 120
        %v1593 = vpop.permute.xlu0 %1592
        %1594 = vrot.lane.b32.xlu0 %v1328, 120
        %v1595 = vpop.permute.xlu0 %1594
        %1596 = vrot.lane.b32.xlu0 %v1329, 120
        %v1597 = vpop.permute.xlu0 %1596
        %1598 = vrot.lane.b32.xlu0 %v1330, 120
        %v1599 = vpop.permute.xlu0 %1598
        %v1600 = vsel %vm1469, %v1593, %v1595
        %v1601 = vsel %vm1469, %v1597, %v1599
        %v1620 = vunpack.c.l.b16 %v1576
        %v1621 = vunpack.c.l.b16 %v1577
        %v1622 = vunpack.c.l.b16 %v1578
        %v1623 = vunpack.c.l.b16 %v1579
        %v1624 = vunpack.c.l.b16 %v1580
        %v1625 = vunpack.c.l.b16 %v1581
        %v1626 = vunpack.c.l.b16 %v1582
        %v1627 = vunpack.c.l.b16 %v1583
        %v1628 = vunpack.c.l.b16 %v1584
        %v1629 = vunpack.c.l.b16 %v1585
        %v1630 = vunpack.c.l.b16 %v1586
        %v1631 = vunpack.c.l.b16 %v1587
        %v1632 = vunpack.c.l.b16 %v1588
        %v1633 = vunpack.c.l.b16 %v1589
        %v1634 = vunpack.c.l.b16 %v1590
        %v1635 = vunpack.c.l.b16 %v1591
        %v1636 = vpack.c.b16 %v1621, %v1620
        %v1637 = vpack.c.b16 %v1623, %v1622
        %v1638 = vpack.c.b16 %v1625, %v1624
        %v1639 = vpack.c.b16 %v1627, %v1626
        %v1640 = vpack.c.b16 %v1629, %v1628
        %v1641 = vpack.c.b16 %v1631, %v1630
        %v1642 = vpack.c.b16 %v1633, %v1632
        %v1643 = vpack.c.b16 %v1635, %v1634
        %1652 = vmatprep.subr.bf16.mxu0 0
        %1653 = vmatpush1.bf16.msra.mxu0 %v1643
        %1654 = vmatprep.subr.bf16.mxu0 0
        %1655 = vmatpush1.bf16.msra.mxu0 %v1642
        %1656 = vmatprep.subr.bf16.mxu0 0
        %1657 = vmatpush1.bf16.msra.mxu0 %v1641
        %1658 = vmatprep.subr.bf16.mxu0 0
        %1659 = vmatpush1.bf16.msra.mxu0 %v1640
        %1660 = vmatprep.subr.bf16.mxu0 0
        %1661 = vmatpush1.bf16.msra.mxu0 %v1639
        %1662 = vmatprep.subr.bf16.mxu0 0
        %1663 = vmatpush1.bf16.msra.mxu0 %v1638
        %1664 = vmatprep.subr.bf16.mxu0 0
        %1665 = vmatpush1.bf16.msra.mxu0 %v1637
        %1666 = vmatprep.subr.bf16.mxu0 0
        %1667 = vmatpush1.bf16.msra.mxu0 %v1636
        %1668 = vmatprep.subr.bf16.mxu0 0
        %1669 = vmatpush2.bf16.msra.mxu0 0
        %1670 = vmatprep.subr.bf16.mxu0 0
        %1671 = vmatpush2.bf16.msra.mxu0 0
        %1672 = vmatprep.subr.bf16.mxu0 0
        %1673 = vmatpush2.bf16.msra.mxu0 0
        %1674 = vmatprep.subr.bf16.mxu0 0
        %1675 = vmatpush2.bf16.msra.mxu0 0
        %1676 = vmatprep.subr.bf16.mxu0 0
        %1677 = vmatpush2.bf16.msra.mxu0 0
        %1678 = vmatprep.subr.bf16.mxu0 0
        %1679 = vmatpush2.bf16.msra.mxu0 0
        %1680 = vmatprep.subr.bf16.mxu0 0
        %1681 = vmatpush2.bf16.msra.mxu0 0
        %1682 = vmatprep.subr.bf16.mxu0 0
        %1683 = vmatpush2.bf16.msra.mxu0 0
        %1684 = vmatprep.mubr.bf16.mxu0 0
        %1685 = vmatmul.mubr.bf16.gmra.mxu0 %v1600
        %v1686 = vpop.f32.mrf.mxu0
        %v1687 = vadd.f32 0.0, %v1686
        %v1688 = vpop.f32.mrf.mxu0
        %v1689 = vpop.f32.mrf.mxu0
        %v1690 = vadd.f32 0.0, %v1689
        %v1691 = vpop.f32.mrf.mxu0
        %1692 = vmatprep.mubr.bf16.mxu0 0
        %1693 = vmatmul.mubr.bf16.gmra.mxu0 %v1601
        %v1694 = vpop.f32.mrf.mxu0
        %v1695 = vadd.f32 0.0, %v1694
        %v1696 = vpop.f32.mrf.mxu0
        %v1697 = vpop.f32.mrf.mxu0
        %v1698 = vadd.f32 0.0, %v1697
        %v1699 = vpop.f32.mrf.mxu0
        %1700 = vdwg.mxu0
        %v1701 = vadd.f32 %v1571, %v1687
        %v1702 = vadd.f32 %v1572, %v1690
        %v1703 = vadd.f32 %v1573, %v1695
        %v1704 = vadd.f32 %v1574, %v1698
        %v1705 = vld [vmem:[#allocation2] sm:$0xf]
        %v1706 = vld [vmem:[#allocation2 + $0x8] sm:$0xf]
        %v1707 = vld [vmem:[#allocation2 + $0x10] sm:$0xf]
        %v1708 = vld [vmem:[#allocation2 + $0x18] sm:$0xf]
        %v1709 = vld [vmem:[#allocation2 + $0x20] sm:$0x1]
        %v1710 = vld [vmem:[#allocation3] sm:$0xf]
        %v1711 = vld [vmem:[#allocation3 + $0x8] sm:$0xf]
        %v1712 = vld [vmem:[#allocation3 + $0x10] sm:$0xf]
        %v1713 = vld [vmem:[#allocation3 + $0x18] sm:$0xf]
        %v1714 = vld [vmem:[#allocation3 + $0x20] sm:$0x1]
        %s1715 = scalar_lea.vmem [#allocation10], 192
        %v1716 = vld [vmem:[%s1715] sm:$0xf]
        %v1717 = vld [vmem:[%s1715 + $0x4] sm:$0xf]
        %v1718 = vld [vmem:[%s1715 + $0x8] sm:$0xf]
        %v1719 = vld [vmem:[%s1715 + $0xc] sm:$0xf]
        %v1720 = vld [vmem:[%s1715 + $0x10] sm:$0xf]
        %v1721 = vld [vmem:[%s1715 + $0x14] sm:$0xf]
        %v1722 = vld [vmem:[%s1715 + $0x18] sm:$0xf]
        %v1723 = vld [vmem:[%s1715 + $0x1c] sm:$0xf]
        %v1724 = vld [vmem:[%s1715 + $0x20] sm:$0xf]
        %v1725 = vld [vmem:[%s1715 + $0x24] sm:$0xf]
        %v1726 = vld [vmem:[%s1715 + $0x28] sm:$0xf]
        %v1727 = vld [vmem:[%s1715 + $0x2c] sm:$0xf]
        %v1728 = vld [vmem:[%s1715 + $0x30] sm:$0xf]
        %v1729 = vld [vmem:[%s1715 + $0x34] sm:$0xf]
        %v1730 = vld [vmem:[%s1715 + $0x38] sm:$0xf]
        %v1731 = vld [vmem:[%s1715 + $0x3c] sm:$0xf]
        %v1737 = vunpack.c.l.b16 %v1705
        %v1738 = vunpack.c.l.b16 %v1706
        %v1739 = vunpack.c.l.b16 %v1707
        %v1740 = vunpack.c.l.b16 %v1708
        %v1741 = vunpack.c.l.b16 %v1709
        %v1742 = vpack.c.b16 %v1738, %v1737
        %v1743 = vpack.c.b16 %v1740, %v1739
        %v1744 = vpack.c.b16 %v1741, %v1741
        %vm1745 = vsmask.f32 7424
        %v1747 = vshrl.u32 %v1742, 16
        %v1749 = vshll.u32 %v1742, 16
        %v1751 = vrot.slane %v1749, 1
        %v1752 = vor.u32 %v1747, %v1751
        %v1754 = vshll.u32 %v1743, 16
        %v1756 = vrot.slane %v1754, 1
        %v1757 = vsel %vm1745, %v1752, %v1756
        %v1758 = vshrl.u32 %v1743, 16
        %v1760 = vor.u32 %v1758, %v1756
        %v1762 = vshll.u32 %v1744, 16
        %v1764 = vrot.slane %v1762, 1
        %v1765 = vsel %vm1745, %v1760, %v1764
        %v1784 = vunpack.c.l.b16 %v1716
        %v1785 = vunpack.c.l.b16 %v1717
        %v1786 = vunpack.c.l.b16 %v1718
        %v1787 = vunpack.c.l.b16 %v1719
        %v1788 = vunpack.c.l.b16 %v1720
        %v1789 = vunpack.c.l.b16 %v1721
        %v1790 = vunpack.c.l.b16 %v1722
        %v1791 = vunpack.c.l.b16 %v1723
        %v1792 = vunpack.c.l.b16 %v1724
        %v1793 = vunpack.c.l.b16 %v1725
        %v1794 = vunpack.c.l.b16 %v1726
        %v1795 = vunpack.c.l.b16 %v1727
        %v1796 = vunpack.c.l.b16 %v1728
        %v1797 = vunpack.c.l.b16 %v1729
        %v1798 = vunpack.c.l.b16 %v1730
        %v1799 = vunpack.c.l.b16 %v1731
        %v1800 = vpack.c.b16 %v1785, %v1784
        %v1801 = vpack.c.b16 %v1787, %v1786
        %v1802 = vpack.c.b16 %v1789, %v1788
        %v1803 = vpack.c.b16 %v1791, %v1790
        %v1804 = vpack.c.b16 %v1793, %v1792
        %v1805 = vpack.c.b16 %v1795, %v1794
        %v1806 = vpack.c.b16 %v1797, %v1796
        %v1807 = vpack.c.b16 %v1799, %v1798
        %1816 = vmatprep.subr.bf16.mxu0 0
        %1817 = vmatpush1.bf16.msra.mxu0 %v1807
        %1818 = vmatprep.subr.bf16.mxu0 0
        %1819 = vmatpush1.bf16.msra.mxu0 %v1806
        %1820 = vmatprep.subr.bf16.mxu0 0
        %1821 = vmatpush1.bf16.msra.mxu0 %v1805
        %1822 = vmatprep.subr.bf16.mxu0 0
        %1823 = vmatpush1.bf16.msra.mxu0 %v1804
        %1824 = vmatprep.subr.bf16.mxu0 0
        %1825 = vmatpush1.bf16.msra.mxu0 %v1803
        %1826 = vmatprep.subr.bf16.mxu0 0
        %1827 = vmatpush1.bf16.msra.mxu0 %v1802
        %1828 = vmatprep.subr.bf16.mxu0 0
        %1829 = vmatpush1.bf16.msra.mxu0 %v1801
        %1830 = vmatprep.subr.bf16.mxu0 0
        %1831 = vmatpush1.bf16.msra.mxu0 %v1800
        %1832 = vmatprep.subr.bf16.mxu0 0
        %1833 = vmatpush2.bf16.msra.mxu0 0
        %1834 = vmatprep.subr.bf16.mxu0 0
        %1835 = vmatpush2.bf16.msra.mxu0 0
        %1836 = vmatprep.subr.bf16.mxu0 0
        %1837 = vmatpush2.bf16.msra.mxu0 0
        %1838 = vmatprep.subr.bf16.mxu0 0
        %1839 = vmatpush2.bf16.msra.mxu0 0
        %1840 = vmatprep.subr.bf16.mxu0 0
        %1841 = vmatpush2.bf16.msra.mxu0 0
        %1842 = vmatprep.subr.bf16.mxu0 0
        %1843 = vmatpush2.bf16.msra.mxu0 0
        %1844 = vmatprep.subr.bf16.mxu0 0
        %1845 = vmatpush2.bf16.msra.mxu0 0
        %1846 = vmatprep.subr.bf16.mxu0 0
        %1847 = vmatpush2.bf16.msra.mxu0 0
        %1848 = vmatprep.mubr.bf16.mxu0 0
        %1849 = vmatmul.mubr.bf16.gmra.mxu0 %v1757
        %v1850 = vpop.f32.mrf.mxu0
        %v1851 = vadd.f32 0.0, %v1850
        %v1852 = vpop.f32.mrf.mxu0
        %v1853 = vpop.f32.mrf.mxu0
        %v1854 = vadd.f32 0.0, %v1853
        %v1855 = vpop.f32.mrf.mxu0
        %1856 = vmatprep.mubr.bf16.mxu0 0
        %1857 = vmatmul.mubr.bf16.gmra.mxu0 %v1765
        %v1858 = vpop.f32.mrf.mxu0
        %v1859 = vadd.f32 0.0, %v1858
        %v1860 = vpop.f32.mrf.mxu0
        %v1861 = vpop.f32.mrf.mxu0
        %v1862 = vadd.f32 0.0, %v1861
        %v1863 = vpop.f32.mrf.mxu0
        %1864 = vdwg.mxu0
        %v1865 = vadd.f32 %v1701, %v1851
        %v1866 = vadd.f32 %v1702, %v1854
        %v1867 = vadd.f32 %v1703, %v1859
        %v1868 = vadd.f32 %v1704, %v1862
        %s1869 = scalar_lea.vmem [#allocation11], 192
        %v1870 = vld [vmem:[%s1869] sm:$0xf]
        %v1871 = vld [vmem:[%s1869 + $0x4] sm:$0xf]
        %v1872 = vld [vmem:[%s1869 + $0x8] sm:$0xf]
        %v1873 = vld [vmem:[%s1869 + $0xc] sm:$0xf]
        %v1874 = vld [vmem:[%s1869 + $0x10] sm:$0xf]
        %v1875 = vld [vmem:[%s1869 + $0x14] sm:$0xf]
        %v1876 = vld [vmem:[%s1869 + $0x18] sm:$0xf]
        %v1877 = vld [vmem:[%s1869 + $0x1c] sm:$0xf]
        %v1878 = vld [vmem:[%s1869 + $0x20] sm:$0xf]
        %v1879 = vld [vmem:[%s1869 + $0x24] sm:$0xf]
        %v1880 = vld [vmem:[%s1869 + $0x28] sm:$0xf]
        %v1881 = vld [vmem:[%s1869 + $0x2c] sm:$0xf]
        %v1882 = vld [vmem:[%s1869 + $0x30] sm:$0xf]
        %v1883 = vld [vmem:[%s1869 + $0x34] sm:$0xf]
        %v1884 = vld [vmem:[%s1869 + $0x38] sm:$0xf]
        %v1885 = vld [vmem:[%s1869 + $0x3c] sm:$0xf]
        %v1891 = vunpack.c.l.b16 %v1710
        %v1892 = vunpack.c.l.b16 %v1711
        %v1893 = vunpack.c.l.b16 %v1712
        %v1894 = vunpack.c.l.b16 %v1713
        %v1895 = vunpack.c.l.b16 %v1714
        %v1896 = vpack.c.b16 %v1892, %v1891
        %v1897 = vpack.c.b16 %v1894, %v1893
        %v1898 = vpack.c.b16 %v1895, %v1895
        %v1900 = vshrl.u32 %v1896, 16
        %v1902 = vshll.u32 %v1896, 16
        %v1904 = vrot.slane %v1902, 1
        %v1905 = vor.u32 %v1900, %v1904
        %v1907 = vshll.u32 %v1897, 16
        %v1909 = vrot.slane %v1907, 1
        %v1910 = vsel %vm1745, %v1905, %v1909
        %v1911 = vshrl.u32 %v1897, 16
        %v1913 = vor.u32 %v1911, %v1909
        %v1915 = vshll.u32 %v1898, 16
        %v1917 = vrot.slane %v1915, 1
        %v1918 = vsel %vm1745, %v1913, %v1917
        %v1937 = vunpack.c.l.b16 %v1870
        %v1938 = vunpack.c.l.b16 %v1871
        %v1939 = vunpack.c.l.b16 %v1872
        %v1940 = vunpack.c.l.b16 %v1873
        %v1941 = vunpack.c.l.b16 %v1874
        %v1942 = vunpack.c.l.b16 %v1875
        %v1943 = vunpack.c.l.b16 %v1876
        %v1944 = vunpack.c.l.b16 %v1877
        %v1945 = vunpack.c.l.b16 %v1878
        %v1946 = vunpack.c.l.b16 %v1879
        %v1947 = vunpack.c.l.b16 %v1880
        %v1948 = vunpack.c.l.b16 %v1881
        %v1949 = vunpack.c.l.b16 %v1882
        %v1950 = vunpack.c.l.b16 %v1883
        %v1951 = vunpack.c.l.b16 %v1884
        %v1952 = vunpack.c.l.b16 %v1885
        %v1953 = vpack.c.b16 %v1938, %v1937
        %v1954 = vpack.c.b16 %v1940, %v1939
        %v1955 = vpack.c.b16 %v1942, %v1941
        %v1956 = vpack.c.b16 %v1944, %v1943
        %v1957 = vpack.c.b16 %v1946, %v1945
        %v1958 = vpack.c.b16 %v1948, %v1947
        %v1959 = vpack.c.b16 %v1950, %v1949
        %v1960 = vpack.c.b16 %v1952, %v1951
        %1969 = vmatprep.subr.bf16.mxu0 0
        %1970 = vmatpush1.bf16.msra.mxu0 %v1960
        %1971 = vmatprep.subr.bf16.mxu0 0
        %1972 = vmatpush1.bf16.msra.mxu0 %v1959
        %1973 = vmatprep.subr.bf16.mxu0 0
        %1974 = vmatpush1.bf16.msra.mxu0 %v1958
        %1975 = vmatprep.subr.bf16.mxu0 0
        %1976 = vmatpush1.bf16.msra.mxu0 %v1957
        %1977 = vmatprep.subr.bf16.mxu0 0
        %1978 = vmatpush1.bf16.msra.mxu0 %v1956
        %1979 = vmatprep.subr.bf16.mxu0 0
        %1980 = vmatpush1.bf16.msra.mxu0 %v1955
        %1981 = vmatprep.subr.bf16.mxu0 0
        %1982 = vmatpush1.bf16.msra.mxu0 %v1954
        %1983 = vmatprep.subr.bf16.mxu0 0
        %1984 = vmatpush1.bf16.msra.mxu0 %v1953
        %1985 = vmatprep.subr.bf16.mxu0 0
        %1986 = vmatpush2.bf16.msra.mxu0 0
        %1987 = vmatprep.subr.bf16.mxu0 0
        %1988 = vmatpush2.bf16.msra.mxu0 0
        %1989 = vmatprep.subr.bf16.mxu0 0
        %1990 = vmatpush2.bf16.msra.mxu0 0
        %1991 = vmatprep.subr.bf16.mxu0 0
        %1992 = vmatpush2.bf16.msra.mxu0 0
        %1993 = vmatprep.subr.bf16.mxu0 0
        %1994 = vmatpush2.bf16.msra.mxu0 0
        %1995 = vmatprep.subr.bf16.mxu0 0
        %1996 = vmatpush2.bf16.msra.mxu0 0
        %1997 = vmatprep.subr.bf16.mxu0 0
        %1998 = vmatpush2.bf16.msra.mxu0 0
        %1999 = vmatprep.subr.bf16.mxu0 0
        %2000 = vmatpush2.bf16.msra.mxu0 0
        %2001 = vmatprep.mubr.bf16.mxu0 0
        %2002 = vmatmul.mubr.bf16.gmra.mxu0 %v1910
        %v2003 = vpop.f32.mrf.mxu0
        %v2004 = vadd.f32 0.0, %v2003
        %v2005 = vpop.f32.mrf.mxu0
        %v2006 = vpop.f32.mrf.mxu0
        %v2007 = vadd.f32 0.0, %v2006
        %v2008 = vpop.f32.mrf.mxu0
        %2009 = vmatprep.mubr.bf16.mxu0 0
        %2010 = vmatmul.mubr.bf16.gmra.mxu0 %v1918
        %v2011 = vpop.f32.mrf.mxu0
        %v2012 = vadd.f32 0.0, %v2011
        %v2013 = vpop.f32.mrf.mxu0
        %v2014 = vpop.f32.mrf.mxu0
        %v2015 = vadd.f32 0.0, %v2014
        %v2016 = vpop.f32.mrf.mxu0
        %2017 = vdwg.mxu0
        %v2018 = vadd.f32 %v1865, %v2004
        %v2019 = vadd.f32 %v1866, %v2007
        %v2020 = vadd.f32 %v1867, %v2012
        %v2021 = vadd.f32 %v1868, %v2015
        %v2022 = vld [vmem:[#allocation2] sm:$0xff]
        %v2023 = vld [vmem:[#allocation2 + $0x8] sm:$0xff]
        %v2024 = vld [vmem:[#allocation2 + $0x10] sm:$0xff]
        %v2025 = vld [vmem:[#allocation2 + $0x18] sm:$0xff]
        %v2026 = vld [vmem:[#allocation2 + $0x20] sm:$0x11]
        %v2027 = vld [vmem:[#allocation3] sm:$0xff]
        %v2028 = vld [vmem:[#allocation3 + $0x8] sm:$0xff]
        %v2029 = vld [vmem:[#allocation3 + $0x10] sm:$0xff]
        %v2030 = vld [vmem:[#allocation3 + $0x18] sm:$0xff]
        %v2031 = vld [vmem:[#allocation3 + $0x20] sm:$0x11]
        %s2032 = scalar_lea.vmem [#allocation10], 256
        %v2033 = vld [vmem:[%s2032] sm:$0xf]
        %v2034 = vld [vmem:[%s2032 + $0x4] sm:$0xf]
        %v2035 = vld [vmem:[%s2032 + $0x8] sm:$0xf]
        %v2036 = vld [vmem:[%s2032 + $0xc] sm:$0xf]
        %v2037 = vld [vmem:[%s2032 + $0x10] sm:$0xf]
        %v2038 = vld [vmem:[%s2032 + $0x14] sm:$0xf]
        %v2039 = vld [vmem:[%s2032 + $0x18] sm:$0xf]
        %v2040 = vld [vmem:[%s2032 + $0x1c] sm:$0xf]
        %v2041 = vld [vmem:[%s2032 + $0x20] sm:$0xf]
        %v2042 = vld [vmem:[%s2032 + $0x24] sm:$0xf]
        %v2043 = vld [vmem:[%s2032 + $0x28] sm:$0xf]
        %v2044 = vld [vmem:[%s2032 + $0x2c] sm:$0xf]
        %v2045 = vld [vmem:[%s2032 + $0x30] sm:$0xf]
        %v2046 = vld [vmem:[%s2032 + $0x34] sm:$0xf]
        %v2047 = vld [vmem:[%s2032 + $0x38] sm:$0xf]
        %v2048 = vld [vmem:[%s2032 + $0x3c] sm:$0xf]
        %v2054 = vunpack.c.l.b16 %v2022
        %v2055 = vunpack.c.h.b16 %v2022
        %v2056 = vunpack.c.l.b16 %v2023
        %v2057 = vunpack.c.h.b16 %v2023
        %v2058 = vunpack.c.l.b16 %v2024
        %v2059 = vunpack.c.h.b16 %v2024
        %v2060 = vunpack.c.l.b16 %v2025
        %v2061 = vunpack.c.h.b16 %v2025
        %v2062 = vunpack.c.l.b16 %v2026
        %v2063 = vunpack.c.h.b16 %v2026
        %v2064 = vpack.c.b16 %v2056, %v2054
        %v2065 = vpack.c.b16 %v2057, %v2055
        %v2066 = vpack.c.b16 %v2060, %v2058
        %v2067 = vpack.c.b16 %v2061, %v2059
        %v2068 = vpack.c.b16 %v2062, %v2062
        %v2069 = vpack.c.b16 %v2063, %v2063
        %v2071 = vshrl.u32 %v2064, 16
        %v2073 = vshll.u32 %v2064, 16
        %v2075 = vrot.slane %v2073, 1
        %v2076 = vor.u32 %v2071, %v2075
        %v2078 = vshll.u32 %v2066, 16
        %v2080 = vrot.slane %v2078, 1
        %v2081 = vsel %vm1745, %v2076, %v2080
        %v2083 = vshrl.u32 %v2065, 16
        %v2085 = vshll.u32 %v2065, 16
        %v2087 = vrot.slane %v2085, 1
        %v2088 = vor.u32 %v2083, %v2087
        %v2090 = vshll.u32 %v2067, 16
        %v2092 = vrot.slane %v2090, 1
        %v2093 = vsel %vm1745, %v2088, %v2092
        %v2094 = vshrl.u32 %v2066, 16
        %v2096 = vor.u32 %v2094, %v2080
        %v2098 = vshll.u32 %v2068, 16
        %v2100 = vrot.slane %v2098, 1
        %v2101 = vsel %vm1745, %v2096, %v2100
        %v2102 = vshrl.u32 %v2067, 16
        %v2104 = vor.u32 %v2102, %v2092
        %v2106 = vshll.u32 %v2069, 16
        %v2108 = vrot.slane %v2106, 1
        %v2109 = vsel %vm1745, %v2104, %v2108
        %2110 = vrot.lane.b32.xlu0 %v2081, 124
        %v2111 = vpop.permute.xlu0 %2110
        %2112 = vrot.lane.b32.xlu0 %v2093, 124
        %v2113 = vpop.permute.xlu0 %2112
        %2114 = vrot.lane.b32.xlu0 %v2101, 124
        %v2115 = vpop.permute.xlu0 %2114
        %2116 = vrot.lane.b32.xlu0 %v2109, 124
        %v2117 = vpop.permute.xlu0 %2116
        %v2118 = vsel %vm1192, %v2111, %v2113
        %v2119 = vsel %vm1192, %v2115, %v2117
        %v2138 = vunpack.c.l.b16 %v2033
        %v2139 = vunpack.c.l.b16 %v2034
        %v2140 = vunpack.c.l.b16 %v2035
        %v2141 = vunpack.c.l.b16 %v2036
        %v2142 = vunpack.c.l.b16 %v2037
        %v2143 = vunpack.c.l.b16 %v2038
        %v2144 = vunpack.c.l.b16 %v2039
        %v2145 = vunpack.c.l.b16 %v2040
        %v2146 = vunpack.c.l.b16 %v2041
        %v2147 = vunpack.c.l.b16 %v2042
        %v2148 = vunpack.c.l.b16 %v2043
        %v2149 = vunpack.c.l.b16 %v2044
        %v2150 = vunpack.c.l.b16 %v2045
        %v2151 = vunpack.c.l.b16 %v2046
        %v2152 = vunpack.c.l.b16 %v2047
        %v2153 = vunpack.c.l.b16 %v2048
        %v2154 = vpack.c.b16 %v2139, %v2138
        %v2155 = vpack.c.b16 %v2141, %v2140
        %v2156 = vpack.c.b16 %v2143, %v2142
        %v2157 = vpack.c.b16 %v2145, %v2144
        %v2158 = vpack.c.b16 %v2147, %v2146
        %v2159 = vpack.c.b16 %v2149, %v2148
        %v2160 = vpack.c.b16 %v2151, %v2150
        %v2161 = vpack.c.b16 %v2153, %v2152
        %2170 = vmatprep.subr.bf16.mxu0 0
        %2171 = vmatpush1.bf16.msra.mxu0 %v2161
        %2172 = vmatprep.subr.bf16.mxu0 0
        %2173 = vmatpush1.bf16.msra.mxu0 %v2160
        %2174 = vmatprep.subr.bf16.mxu0 0
        %2175 = vmatpush1.bf16.msra.mxu0 %v2159
        %2176 = vmatprep.subr.bf16.mxu0 0
        %2177 = vmatpush1.bf16.msra.mxu0 %v2158
        %2178 = vmatprep.subr.bf16.mxu0 0
        %2179 = vmatpush1.bf16.msra.mxu0 %v2157
        %2180 = vmatprep.subr.bf16.mxu0 0
        %2181 = vmatpush1.bf16.msra.mxu0 %v2156
        %2182 = vmatprep.subr.bf16.mxu0 0
        %2183 = vmatpush1.bf16.msra.mxu0 %v2155
        %2184 = vmatprep.subr.bf16.mxu0 0
        %2185 = vmatpush1.bf16.msra.mxu0 %v2154
        %2186 = vmatprep.subr.bf16.mxu0 0
        %2187 = vmatpush2.bf16.msra.mxu0 0
        %2188 = vmatprep.subr.bf16.mxu0 0
        %2189 = vmatpush2.bf16.msra.mxu0 0
        %2190 = vmatprep.subr.bf16.mxu0 0
        %2191 = vmatpush2.bf16.msra.mxu0 0
        %2192 = vmatprep.subr.bf16.mxu0 0
        %2193 = vmatpush2.bf16.msra.mxu0 0
        %2194 = vmatprep.subr.bf16.mxu0 0
        %2195 = vmatpush2.bf16.msra.mxu0 0
        %2196 = vmatprep.subr.bf16.mxu0 0
        %2197 = vmatpush2.bf16.msra.mxu0 0
        %2198 = vmatprep.subr.bf16.mxu0 0
        %2199 = vmatpush2.bf16.msra.mxu0 0
        %2200 = vmatprep.subr.bf16.mxu0 0
        %2201 = vmatpush2.bf16.msra.mxu0 0
        %2202 = vmatprep.mubr.bf16.mxu0 0
        %2203 = vmatmul.mubr.bf16.gmra.mxu0 %v2118
        %v2204 = vpop.f32.mrf.mxu0
        %v2205 = vadd.f32 0.0, %v2204
        %v2206 = vpop.f32.mrf.mxu0
        %v2207 = vpop.f32.mrf.mxu0
        %v2208 = vadd.f32 0.0, %v2207
        %v2209 = vpop.f32.mrf.mxu0
        %2210 = vmatprep.mubr.bf16.mxu0 0
        %2211 = vmatmul.mubr.bf16.gmra.mxu0 %v2119
        %v2212 = vpop.f32.mrf.mxu0
        %v2213 = vadd.f32 0.0, %v2212
        %v2214 = vpop.f32.mrf.mxu0
        %v2215 = vpop.f32.mrf.mxu0
        %v2216 = vadd.f32 0.0, %v2215
        %v2217 = vpop.f32.mrf.mxu0
        %2218 = vdwg.mxu0
        %v2219 = vadd.f32 %v2018, %v2205
        %v2220 = vadd.f32 %v2019, %v2208
        %v2221 = vadd.f32 %v2020, %v2213
        %v2222 = vadd.f32 %v2021, %v2216
        %s2223 = scalar_lea.vmem [#allocation11], 256
        %v2224 = vld [vmem:[%s2223] sm:$0xf]
        %v2225 = vld [vmem:[%s2223 + $0x4] sm:$0xf]
        %v2226 = vld [vmem:[%s2223 + $0x8] sm:$0xf]
        %v2227 = vld [vmem:[%s2223 + $0xc] sm:$0xf]
        %v2228 = vld [vmem:[%s2223 + $0x10] sm:$0xf]
        %v2229 = vld [vmem:[%s2223 + $0x14] sm:$0xf]
        %v2230 = vld [vmem:[%s2223 + $0x18] sm:$0xf]
        %v2231 = vld [vmem:[%s2223 + $0x1c] sm:$0xf]
        %v2232 = vld [vmem:[%s2223 + $0x20] sm:$0xf]
        %v2233 = vld [vmem:[%s2223 + $0x24] sm:$0xf]
        %v2234 = vld [vmem:[%s2223 + $0x28] sm:$0xf]
        %v2235 = vld [vmem:[%s2223 + $0x2c] sm:$0xf]
        %v2236 = vld [vmem:[%s2223 + $0x30] sm:$0xf]
        %v2237 = vld [vmem:[%s2223 + $0x34] sm:$0xf]
        %v2238 = vld [vmem:[%s2223 + $0x38] sm:$0xf]
        %v2239 = vld [vmem:[%s2223 + $0x3c] sm:$0xf]
        %v2245 = vunpack.c.l.b16 %v2027
        %v2246 = vunpack.c.h.b16 %v2027
        %v2247 = vunpack.c.l.b16 %v2028
        %v2248 = vunpack.c.h.b16 %v2028
        %v2249 = vunpack.c.l.b16 %v2029
        %v2250 = vunpack.c.h.b16 %v2029
        %v2251 = vunpack.c.l.b16 %v2030
        %v2252 = vunpack.c.h.b16 %v2030
        %v2253 = vunpack.c.l.b16 %v2031
        %v2254 = vunpack.c.h.b16 %v2031
        %v2255 = vpack.c.b16 %v2247, %v2245
        %v2256 = vpack.c.b16 %v2248, %v2246
        %v2257 = vpack.c.b16 %v2251, %v2249
        %v2258 = vpack.c.b16 %v2252, %v2250
        %v2259 = vpack.c.b16 %v2253, %v2253
        %v2260 = vpack.c.b16 %v2254, %v2254
        %v2262 = vshrl.u32 %v2255, 16
        %v2264 = vshll.u32 %v2255, 16
        %v2266 = vrot.slane %v2264, 1
        %v2267 = vor.u32 %v2262, %v2266
        %v2269 = vshll.u32 %v2257, 16
        %v2271 = vrot.slane %v2269, 1
        %v2272 = vsel %vm1745, %v2267, %v2271
        %v2274 = vshrl.u32 %v2256, 16
        %v2276 = vshll.u32 %v2256, 16
        %v2278 = vrot.slane %v2276, 1
        %v2279 = vor.u32 %v2274, %v2278
        %v2281 = vshll.u32 %v2258, 16
        %v2283 = vrot.slane %v2281, 1
        %v2284 = vsel %vm1745, %v2279, %v2283
        %v2285 = vshrl.u32 %v2257, 16
        %v2287 = vor.u32 %v2285, %v2271
        %v2289 = vshll.u32 %v2259, 16
        %v2291 = vrot.slane %v2289, 1
        %v2292 = vsel %vm1745, %v2287, %v2291
        %v2293 = vshrl.u32 %v2258, 16
        %v2295 = vor.u32 %v2293, %v2283
        %v2297 = vshll.u32 %v2260, 16
        %v2299 = vrot.slane %v2297, 1
        %v2300 = vsel %vm1745, %v2295, %v2299
        %2301 = vrot.lane.b32.xlu0 %v2272, 124
        %v2302 = vpop.permute.xlu0 %2301
        %2303 = vrot.lane.b32.xlu0 %v2284, 124
        %v2304 = vpop.permute.xlu0 %2303
        %2305 = vrot.lane.b32.xlu0 %v2292, 124
        %v2306 = vpop.permute.xlu0 %2305
        %2307 = vrot.lane.b32.xlu0 %v2300, 124
        %v2308 = vpop.permute.xlu0 %2307
        %v2309 = vsel %vm1192, %v2302, %v2304
        %v2310 = vsel %vm1192, %v2306, %v2308
        %v2329 = vunpack.c.l.b16 %v2224
        %v2330 = vunpack.c.l.b16 %v2225
        %v2331 = vunpack.c.l.b16 %v2226
        %v2332 = vunpack.c.l.b16 %v2227
        %v2333 = vunpack.c.l.b16 %v2228
        %v2334 = vunpack.c.l.b16 %v2229
        %v2335 = vunpack.c.l.b16 %v2230
        %v2336 = vunpack.c.l.b16 %v2231
        %v2337 = vunpack.c.l.b16 %v2232
        %v2338 = vunpack.c.l.b16 %v2233
        %v2339 = vunpack.c.l.b16 %v2234
        %v2340 = vunpack.c.l.b16 %v2235
        %v2341 = vunpack.c.l.b16 %v2236
        %v2342 = vunpack.c.l.b16 %v2237
        %v2343 = vunpack.c.l.b16 %v2238
        %v2344 = vunpack.c.l.b16 %v2239
        %v2345 = vpack.c.b16 %v2330, %v2329
        %v2346 = vpack.c.b16 %v2332, %v2331
        %v2347 = vpack.c.b16 %v2334, %v2333
        %v2348 = vpack.c.b16 %v2336, %v2335
        %v2349 = vpack.c.b16 %v2338, %v2337
        %v2350 = vpack.c.b16 %v2340, %v2339
        %v2351 = vpack.c.b16 %v2342, %v2341
        %v2352 = vpack.c.b16 %v2344, %v2343
        %2361 = vmatprep.subr.bf16.mxu0 0
        %2362 = vmatpush1.bf16.msra.mxu0 %v2352
        %2363 = vmatprep.subr.bf16.mxu0 0
        %2364 = vmatpush1.bf16.msra.mxu0 %v2351
        %2365 = vmatprep.subr.bf16.mxu0 0
        %2366 = vmatpush1.bf16.msra.mxu0 %v2350
        %2367 = vmatprep.subr.bf16.mxu0 0
        %2368 = vmatpush1.bf16.msra.mxu0 %v2349
        %2369 = vmatprep.subr.bf16.mxu0 0
        %2370 = vmatpush1.bf16.msra.mxu0 %v2348
        %2371 = vmatprep.subr.bf16.mxu0 0
        %2372 = vmatpush1.bf16.msra.mxu0 %v2347
        %2373 = vmatprep.subr.bf16.mxu0 0
        %2374 = vmatpush1.bf16.msra.mxu0 %v2346
        %2375 = vmatprep.subr.bf16.mxu0 0
        %2376 = vmatpush1.bf16.msra.mxu0 %v2345
        %2377 = vmatprep.subr.bf16.mxu0 0
        %2378 = vmatpush2.bf16.msra.mxu0 0
        %2379 = vmatprep.subr.bf16.mxu0 0
        %2380 = vmatpush2.bf16.msra.mxu0 0
        %2381 = vmatprep.subr.bf16.mxu0 0
        %2382 = vmatpush2.bf16.msra.mxu0 0
        %2383 = vmatprep.subr.bf16.mxu0 0
        %2384 = vmatpush2.bf16.msra.mxu0 0
        %2385 = vmatprep.subr.bf16.mxu0 0
        %2386 = vmatpush2.bf16.msra.mxu0 0
        %2387 = vmatprep.subr.bf16.mxu0 0
        %2388 = vmatpush2.bf16.msra.mxu0 0
        %2389 = vmatprep.subr.bf16.mxu0 0
        %2390 = vmatpush2.bf16.msra.mxu0 0
        %2391 = vmatprep.subr.bf16.mxu0 0
        %2392 = vmatpush2.bf16.msra.mxu0 0
        %2393 = vmatprep.mubr.bf16.mxu0 0
        %2394 = vmatmul.mubr.bf16.gmra.mxu0 %v2309
        %v2395 = vpop.f32.mrf.mxu0
        %v2396 = vadd.f32 0.0, %v2395
        %v2397 = vpop.f32.mrf.mxu0
        %v2398 = vpop.f32.mrf.mxu0
        %v2399 = vadd.f32 0.0, %v2398
        %v2400 = vpop.f32.mrf.mxu0
        %2401 = vmatprep.mubr.bf16.mxu0 0
        %2402 = vmatmul.mubr.bf16.gmra.mxu0 %v2310
        %v2403 = vpop.f32.mrf.mxu0
        %v2404 = vadd.f32 0.0, %v2403
        %v2405 = vpop.f32.mrf.mxu0
        %v2406 = vpop.f32.mrf.mxu0
        %v2407 = vadd.f32 0.0, %v2406
        %v2408 = vpop.f32.mrf.mxu0
        %2409 = vdwg.mxu0
        %v2410 = vadd.f32 %v2219, %v2396
        %v2411 = vadd.f32 %v2220, %v2399
        %v2412 = vadd.f32 %v2221, %v2404
        %v2413 = vadd.f32 %v2222, %v2407
        %s2414 = scalar_lea.vmem [#allocation10], 320
        %v2415 = vld [vmem:[%s2414] sm:$0xf]
        %v2416 = vld [vmem:[%s2414 + $0x4] sm:$0xf]
        %v2417 = vld [vmem:[%s2414 + $0x8] sm:$0xf]
        %v2418 = vld [vmem:[%s2414 + $0xc] sm:$0xf]
        %v2419 = vld [vmem:[%s2414 + $0x10] sm:$0xf]
        %v2420 = vld [vmem:[%s2414 + $0x14] sm:$0xf]
        %v2421 = vld [vmem:[%s2414 + $0x18] sm:$0xf]
        %v2422 = vld [vmem:[%s2414 + $0x1c] sm:$0xf]
        %v2423 = vld [vmem:[%s2414 + $0x20] sm:$0xf]
        %v2424 = vld [vmem:[%s2414 + $0x24] sm:$0xf]
        %v2425 = vld [vmem:[%s2414 + $0x28] sm:$0xf]
        %v2426 = vld [vmem:[%s2414 + $0x2c] sm:$0xf]
        %v2427 = vld [vmem:[%s2414 + $0x30] sm:$0xf]
        %v2428 = vld [vmem:[%s2414 + $0x34] sm:$0xf]
        %v2429 = vld [vmem:[%s2414 + $0x38] sm:$0xf]
        %v2430 = vld [vmem:[%s2414 + $0x3c] sm:$0xf]
        %2431 = vrot.lane.b32.xlu0 %v2081, 120
        %v2432 = vpop.permute.xlu0 %2431
        %2433 = vrot.lane.b32.xlu0 %v2093, 120
        %v2434 = vpop.permute.xlu0 %2433
        %2435 = vrot.lane.b32.xlu0 %v2101, 120
        %v2436 = vpop.permute.xlu0 %2435
        %2437 = vrot.lane.b32.xlu0 %v2109, 120
        %v2438 = vpop.permute.xlu0 %2437
        %v2439 = vsel %vm1469, %v2432, %v2434
        %v2440 = vsel %vm1469, %v2436, %v2438
        %v2459 = vunpack.c.l.b16 %v2415
        %v2460 = vunpack.c.l.b16 %v2416
        %v2461 = vunpack.c.l.b16 %v2417
        %v2462 = vunpack.c.l.b16 %v2418
        %v2463 = vunpack.c.l.b16 %v2419
        %v2464 = vunpack.c.l.b16 %v2420
        %v2465 = vunpack.c.l.b16 %v2421
        %v2466 = vunpack.c.l.b16 %v2422
        %v2467 = vunpack.c.l.b16 %v2423
        %v2468 = vunpack.c.l.b16 %v2424
        %v2469 = vunpack.c.l.b16 %v2425
        %v2470 = vunpack.c.l.b16 %v2426
        %v2471 = vunpack.c.l.b16 %v2427
        %v2472 = vunpack.c.l.b16 %v2428
        %v2473 = vunpack.c.l.b16 %v2429
        %v2474 = vunpack.c.l.b16 %v2430
        %v2475 = vpack.c.b16 %v2460, %v2459
        %v2476 = vpack.c.b16 %v2462, %v2461
        %v2477 = vpack.c.b16 %v2464, %v2463
        %v2478 = vpack.c.b16 %v2466, %v2465
        %v2479 = vpack.c.b16 %v2468, %v2467
        %v2480 = vpack.c.b16 %v2470, %v2469
        %v2481 = vpack.c.b16 %v2472, %v2471
        %v2482 = vpack.c.b16 %v2474, %v2473
        %2491 = vmatprep.subr.bf16.mxu0 0
        %2492 = vmatpush1.bf16.msra.mxu0 %v2482
        %2493 = vmatprep.subr.bf16.mxu0 0
        %2494 = vmatpush1.bf16.msra.mxu0 %v2481
        %2495 = vmatprep.subr.bf16.mxu0 0
        %2496 = vmatpush1.bf16.msra.mxu0 %v2480
        %2497 = vmatprep.subr.bf16.mxu0 0
        %2498 = vmatpush1.bf16.msra.mxu0 %v2479
        %2499 = vmatprep.subr.bf16.mxu0 0
        %2500 = vmatpush1.bf16.msra.mxu0 %v2478
        %2501 = vmatprep.subr.bf16.mxu0 0
        %2502 = vmatpush1.bf16.msra.mxu0 %v2477
        %2503 = vmatprep.subr.bf16.mxu0 0
        %2504 = vmatpush1.bf16.msra.mxu0 %v2476
        %2505 = vmatprep.subr.bf16.mxu0 0
        %2506 = vmatpush1.bf16.msra.mxu0 %v2475
        %2507 = vmatprep.subr.bf16.mxu0 0
        %2508 = vmatpush2.bf16.msra.mxu0 0
        %2509 = vmatprep.subr.bf16.mxu0 0
        %2510 = vmatpush2.bf16.msra.mxu0 0
        %2511 = vmatprep.subr.bf16.mxu0 0
        %2512 = vmatpush2.bf16.msra.mxu0 0
        %2513 = vmatprep.subr.bf16.mxu0 0
        %2514 = vmatpush2.bf16.msra.mxu0 0
        %2515 = vmatprep.subr.bf16.mxu0 0
        %2516 = vmatpush2.bf16.msra.mxu0 0
        %2517 = vmatprep.subr.bf16.mxu0 0
        %2518 = vmatpush2.bf16.msra.mxu0 0
        %2519 = vmatprep.subr.bf16.mxu0 0
        %2520 = vmatpush2.bf16.msra.mxu0 0
        %2521 = vmatprep.subr.bf16.mxu0 0
        %2522 = vmatpush2.bf16.msra.mxu0 0
        %2523 = vmatprep.mubr.bf16.mxu0 0
        %2524 = vmatmul.mubr.bf16.gmra.mxu0 %v2439
        %v2525 = vpop.f32.mrf.mxu0
        %v2526 = vadd.f32 0.0, %v2525
        %v2527 = vpop.f32.mrf.mxu0
        %v2528 = vpop.f32.mrf.mxu0
        %v2529 = vadd.f32 0.0, %v2528
        %v2530 = vpop.f32.mrf.mxu0
        %2531 = vmatprep.mubr.bf16.mxu0 0
        %2532 = vmatmul.mubr.bf16.gmra.mxu0 %v2440
        %v2533 = vpop.f32.mrf.mxu0
        %v2534 = vadd.f32 0.0, %v2533
        %v2535 = vpop.f32.mrf.mxu0
        %v2536 = vpop.f32.mrf.mxu0
        %v2537 = vadd.f32 0.0, %v2536
        %v2538 = vpop.f32.mrf.mxu0
        %2539 = vdwg.mxu0
        %v2540 = vadd.f32 %v2410, %v2526
        %v2541 = vadd.f32 %v2411, %v2529
        %v2542 = vadd.f32 %v2412, %v2534
        %v2543 = vadd.f32 %v2413, %v2537
        %s2544 = scalar_lea.vmem [#allocation11], 320
        %v2545 = vld [vmem:[%s2544] sm:$0xf]
        %v2546 = vld [vmem:[%s2544 + $0x4] sm:$0xf]
        %v2547 = vld [vmem:[%s2544 + $0x8] sm:$0xf]
        %v2548 = vld [vmem:[%s2544 + $0xc] sm:$0xf]
        %v2549 = vld [vmem:[%s2544 + $0x10] sm:$0xf]
        %v2550 = vld [vmem:[%s2544 + $0x14] sm:$0xf]
        %v2551 = vld [vmem:[%s2544 + $0x18] sm:$0xf]
        %v2552 = vld [vmem:[%s2544 + $0x1c] sm:$0xf]
        %v2553 = vld [vmem:[%s2544 + $0x20] sm:$0xf]
        %v2554 = vld [vmem:[%s2544 + $0x24] sm:$0xf]
        %v2555 = vld [vmem:[%s2544 + $0x28] sm:$0xf]
        %v2556 = vld [vmem:[%s2544 + $0x2c] sm:$0xf]
        %v2557 = vld [vmem:[%s2544 + $0x30] sm:$0xf]
        %v2558 = vld [vmem:[%s2544 + $0x34] sm:$0xf]
        %v2559 = vld [vmem:[%s2544 + $0x38] sm:$0xf]
        %v2560 = vld [vmem:[%s2544 + $0x3c] sm:$0xf]
        %2561 = vrot.lane.b32.xlu0 %v2272, 120
        %v2562 = vpop.permute.xlu0 %2561
        %2563 = vrot.lane.b32.xlu0 %v2284, 120
        %v2564 = vpop.permute.xlu0 %2563
        %2565 = vrot.lane.b32.xlu0 %v2292, 120
        %v2566 = vpop.permute.xlu0 %2565
        %2567 = vrot.lane.b32.xlu0 %v2300, 120
        %v2568 = vpop.permute.xlu0 %2567
        %v2569 = vsel %vm1469, %v2562, %v2564
        %v2570 = vsel %vm1469, %v2566, %v2568
        %v2589 = vunpack.c.l.b16 %v2545
        %v2590 = vunpack.c.l.b16 %v2546
        %v2591 = vunpack.c.l.b16 %v2547
        %v2592 = vunpack.c.l.b16 %v2548
        %v2593 = vunpack.c.l.b16 %v2549
        %v2594 = vunpack.c.l.b16 %v2550
        %v2595 = vunpack.c.l.b16 %v2551
        %v2596 = vunpack.c.l.b16 %v2552
        %v2597 = vunpack.c.l.b16 %v2553
        %v2598 = vunpack.c.l.b16 %v2554
        %v2599 = vunpack.c.l.b16 %v2555
        %v2600 = vunpack.c.l.b16 %v2556
        %v2601 = vunpack.c.l.b16 %v2557
        %v2602 = vunpack.c.l.b16 %v2558
        %v2603 = vunpack.c.l.b16 %v2559
        %v2604 = vunpack.c.l.b16 %v2560
        %v2605 = vpack.c.b16 %v2590, %v2589
        %v2606 = vpack.c.b16 %v2592, %v2591
        %v2607 = vpack.c.b16 %v2594, %v2593
        %v2608 = vpack.c.b16 %v2596, %v2595
        %v2609 = vpack.c.b16 %v2598, %v2597
        %v2610 = vpack.c.b16 %v2600, %v2599
        %v2611 = vpack.c.b16 %v2602, %v2601
        %v2612 = vpack.c.b16 %v2604, %v2603
        %2621 = vmatprep.subr.bf16.mxu0 0
        %2622 = vmatpush1.bf16.msra.mxu0 %v2612
        %2623 = vmatprep.subr.bf16.mxu0 0
        %2624 = vmatpush1.bf16.msra.mxu0 %v2611
        %2625 = vmatprep.subr.bf16.mxu0 0
        %2626 = vmatpush1.bf16.msra.mxu0 %v2610
        %2627 = vmatprep.subr.bf16.mxu0 0
        %2628 = vmatpush1.bf16.msra.mxu0 %v2609
        %2629 = vmatprep.subr.bf16.mxu0 0
        %2630 = vmatpush1.bf16.msra.mxu0 %v2608
        %2631 = vmatprep.subr.bf16.mxu0 0
        %2632 = vmatpush1.bf16.msra.mxu0 %v2607
        %2633 = vmatprep.subr.bf16.mxu0 0
        %2634 = vmatpush1.bf16.msra.mxu0 %v2606
        %2635 = vmatprep.subr.bf16.mxu0 0
        %2636 = vmatpush1.bf16.msra.mxu0 %v2605
        %2637 = vmatprep.subr.bf16.mxu0 0
        %2638 = vmatpush2.bf16.msra.mxu0 0
        %2639 = vmatprep.subr.bf16.mxu0 0
        %2640 = vmatpush2.bf16.msra.mxu0 0
        %2641 = vmatprep.subr.bf16.mxu0 0
        %2642 = vmatpush2.bf16.msra.mxu0 0
        %2643 = vmatprep.subr.bf16.mxu0 0
        %2644 = vmatpush2.bf16.msra.mxu0 0
        %2645 = vmatprep.subr.bf16.mxu0 0
        %2646 = vmatpush2.bf16.msra.mxu0 0
        %2647 = vmatprep.subr.bf16.mxu0 0
        %2648 = vmatpush2.bf16.msra.mxu0 0
        %2649 = vmatprep.subr.bf16.mxu0 0
        %2650 = vmatpush2.bf16.msra.mxu0 0
        %2651 = vmatprep.subr.bf16.mxu0 0
        %2652 = vmatpush2.bf16.msra.mxu0 0
        %2653 = vmatprep.mubr.bf16.mxu0 0
        %2654 = vmatmul.mubr.bf16.gmra.mxu0 %v2569
        %v2655 = vpop.f32.mrf.mxu0
        %v2656 = vadd.f32 0.0, %v2655
        %v2657 = vpop.f32.mrf.mxu0
        %v2658 = vpop.f32.mrf.mxu0
        %v2659 = vadd.f32 0.0, %v2658
        %v2660 = vpop.f32.mrf.mxu0
        %2661 = vmatprep.mubr.bf16.mxu0 0
        %2662 = vmatmul.mubr.bf16.gmra.mxu0 %v2570
        %v2663 = vpop.f32.mrf.mxu0
        %v2664 = vadd.f32 0.0, %v2663
        %v2665 = vpop.f32.mrf.mxu0
        %v2666 = vpop.f32.mrf.mxu0
        %v2667 = vadd.f32 0.0, %v2666
        %v2668 = vpop.f32.mrf.mxu0
        %2669 = vdwg.mxu0
        %v2670 = vadd.f32 %v2540, %v2656
        %v2671 = vadd.f32 %v2541, %v2659
        %v2672 = vadd.f32 %v2542, %v2664
        %v2673 = vadd.f32 %v2543, %v2667
        %v2674 = vld [vmem:[#allocation2] sm:$0xe]
        %v2675 = vld [vmem:[#allocation3] sm:$0xe]
        %s2676 = scalar_lea.vmem [#allocation10], 384
        %v2677 = vld [vmem:[%s2676] sm:$0xf]
        %v2678 = vld [vmem:[%s2676 + $0x4] sm:$0xf]
        %v2679 = vld [vmem:[%s2676 + $0x8] sm:$0xf]
        %v2680 = vld [vmem:[%s2676 + $0xc] sm:$0xf]
        %v2681 = vld [vmem:[%s2676 + $0x10] sm:$0xf]
        %v2682 = vld [vmem:[%s2676 + $0x14] sm:$0xf]
        %v2683 = vld [vmem:[%s2676 + $0x18] sm:$0xf]
        %v2684 = vld [vmem:[%s2676 + $0x1c] sm:$0xf]
        %v2685 = vld [vmem:[%s2676 + $0x20] sm:$0xf]
        %v2686 = vld [vmem:[%s2676 + $0x24] sm:$0xf]
        %v2687 = vld [vmem:[%s2676 + $0x28] sm:$0xf]
        %v2688 = vld [vmem:[%s2676 + $0x2c] sm:$0xf]
        %v2689 = vld [vmem:[%s2676 + $0x30] sm:$0xf]
        %v2690 = vld [vmem:[%s2676 + $0x34] sm:$0xf]
        %v2691 = vld [vmem:[%s2676 + $0x38] sm:$0xf]
        %v2692 = vld [vmem:[%s2676 + $0x3c] sm:$0xf]
        %v2694 = vunpack.c.l.b16 %v2674
        %v2695 = vpack.c.b16 %v1738, %v2694
        %vm2696 = vcmask 1046528
        %v2697 = vrot.slane %v2695, 1
        %v2698 = vrot.slane %v1743, 1
        %v2699 = vsel %vm2696, %v2697, %v2698
        %v2700 = vrot.slane %v1744, 1
        %v2701 = vsel %vm2696, %v2698, %v2700
        %v2720 = vunpack.c.l.b16 %v2677
        %v2721 = vunpack.c.l.b16 %v2678
        %v2722 = vunpack.c.l.b16 %v2679
        %v2723 = vunpack.c.l.b16 %v2680
        %v2724 = vunpack.c.l.b16 %v2681
        %v2725 = vunpack.c.l.b16 %v2682
        %v2726 = vunpack.c.l.b16 %v2683
        %v2727 = vunpack.c.l.b16 %v2684
        %v2728 = vunpack.c.l.b16 %v2685
        %v2729 = vunpack.c.l.b16 %v2686
        %v2730 = vunpack.c.l.b16 %v2687
        %v2731 = vunpack.c.l.b16 %v2688
        %v2732 = vunpack.c.l.b16 %v2689
        %v2733 = vunpack.c.l.b16 %v2690
        %v2734 = vunpack.c.l.b16 %v2691
        %v2735 = vunpack.c.l.b16 %v2692
        %v2736 = vpack.c.b16 %v2721, %v2720
        %v2737 = vpack.c.b16 %v2723, %v2722
        %v2738 = vpack.c.b16 %v2725, %v2724
        %v2739 = vpack.c.b16 %v2727, %v2726
        %v2740 = vpack.c.b16 %v2729, %v2728
        %v2741 = vpack.c.b16 %v2731, %v2730
        %v2742 = vpack.c.b16 %v2733, %v2732
        %v2743 = vpack.c.b16 %v2735, %v2734
        %2752 = vmatprep.subr.bf16.mxu0 0
        %2753 = vmatpush1.bf16.msra.mxu0 %v2743
        %2754 = vmatprep.subr.bf16.mxu0 0
        %2755 = vmatpush1.bf16.msra.mxu0 %v2742
        %2756 = vmatprep.subr.bf16.mxu0 0
        %2757 = vmatpush1.bf16.msra.mxu0 %v2741
        %2758 = vmatprep.subr.bf16.mxu0 0
        %2759 = vmatpush1.bf16.msra.mxu0 %v2740
        %2760 = vmatprep.subr.bf16.mxu0 0
        %2761 = vmatpush1.bf16.msra.mxu0 %v2739
        %2762 = vmatprep.subr.bf16.mxu0 0
        %2763 = vmatpush1.bf16.msra.mxu0 %v2738
        %2764 = vmatprep.subr.bf16.mxu0 0
        %2765 = vmatpush1.bf16.msra.mxu0 %v2737
        %2766 = vmatprep.subr.bf16.mxu0 0
        %2767 = vmatpush1.bf16.msra.mxu0 %v2736
        %2768 = vmatprep.subr.bf16.mxu0 0
        %2769 = vmatpush2.bf16.msra.mxu0 0
        %2770 = vmatprep.subr.bf16.mxu0 0
        %2771 = vmatpush2.bf16.msra.mxu0 0
        %2772 = vmatprep.subr.bf16.mxu0 0
        %2773 = vmatpush2.bf16.msra.mxu0 0
        %2774 = vmatprep.subr.bf16.mxu0 0
        %2775 = vmatpush2.bf16.msra.mxu0 0
        %2776 = vmatprep.subr.bf16.mxu0 0
        %2777 = vmatpush2.bf16.msra.mxu0 0
        %2778 = vmatprep.subr.bf16.mxu0 0
        %2779 = vmatpush2.bf16.msra.mxu0 0
        %2780 = vmatprep.subr.bf16.mxu0 0
        %2781 = vmatpush2.bf16.msra.mxu0 0
        %2782 = vmatprep.subr.bf16.mxu0 0
        %2783 = vmatpush2.bf16.msra.mxu0 0
        %2784 = vmatprep.mubr.bf16.mxu0 0
        %2785 = vmatmul.mubr.bf16.gmra.mxu0 %v2699
        %v2786 = vpop.f32.mrf.mxu0
        %v2787 = vadd.f32 0.0, %v2786
        %v2788 = vpop.f32.mrf.mxu0
        %v2789 = vpop.f32.mrf.mxu0
        %v2790 = vadd.f32 0.0, %v2789
        %v2791 = vpop.f32.mrf.mxu0
        %2792 = vmatprep.mubr.bf16.mxu0 0
        %2793 = vmatmul.mubr.bf16.gmra.mxu0 %v2701
        %v2794 = vpop.f32.mrf.mxu0
        %v2795 = vadd.f32 0.0, %v2794
        %v2796 = vpop.f32.mrf.mxu0
        %v2797 = vpop.f32.mrf.mxu0
        %v2798 = vadd.f32 0.0, %v2797
        %v2799 = vpop.f32.mrf.mxu0
        %2800 = vdwg.mxu0
        %v2801 = vadd.f32 %v2670, %v2787
        %v2802 = vadd.f32 %v2671, %v2790
        %v2803 = vadd.f32 %v2672, %v2795
        %v2804 = vadd.f32 %v2673, %v2798
        %s2805 = scalar_lea.vmem [#allocation11], 384
        %v2806 = vld [vmem:[%s2805] sm:$0xf]
        %v2807 = vld [vmem:[%s2805 + $0x4] sm:$0xf]
        %v2808 = vld [vmem:[%s2805 + $0x8] sm:$0xf]
        %v2809 = vld [vmem:[%s2805 + $0xc] sm:$0xf]
        %v2810 = vld [vmem:[%s2805 + $0x10] sm:$0xf]
        %v2811 = vld [vmem:[%s2805 + $0x14] sm:$0xf]
        %v2812 = vld [vmem:[%s2805 + $0x18] sm:$0xf]
        %v2813 = vld [vmem:[%s2805 + $0x1c] sm:$0xf]
        %v2814 = vld [vmem:[%s2805 + $0x20] sm:$0xf]
        %v2815 = vld [vmem:[%s2805 + $0x24] sm:$0xf]
        %v2816 = vld [vmem:[%s2805 + $0x28] sm:$0xf]
        %v2817 = vld [vmem:[%s2805 + $0x2c] sm:$0xf]
        %v2818 = vld [vmem:[%s2805 + $0x30] sm:$0xf]
        %v2819 = vld [vmem:[%s2805 + $0x34] sm:$0xf]
        %v2820 = vld [vmem:[%s2805 + $0x38] sm:$0xf]
        %v2821 = vld [vmem:[%s2805 + $0x3c] sm:$0xf]
        %v2823 = vunpack.c.l.b16 %v2675
        %v2824 = vpack.c.b16 %v1892, %v2823
        %v2825 = vrot.slane %v2824, 1
        %v2826 = vrot.slane %v1897, 1
        %v2827 = vsel %vm2696, %v2825, %v2826
        %v2828 = vrot.slane %v1898, 1
        %v2829 = vsel %vm2696, %v2826, %v2828
        %v2848 = vunpack.c.l.b16 %v2806
        %v2849 = vunpack.c.l.b16 %v2807
        %v2850 = vunpack.c.l.b16 %v2808
        %v2851 = vunpack.c.l.b16 %v2809
        %v2852 = vunpack.c.l.b16 %v2810
        %v2853 = vunpack.c.l.b16 %v2811
        %v2854 = vunpack.c.l.b16 %v2812
        %v2855 = vunpack.c.l.b16 %v2813
        %v2856 = vunpack.c.l.b16 %v2814
        %v2857 = vunpack.c.l.b16 %v2815
        %v2858 = vunpack.c.l.b16 %v2816
        %v2859 = vunpack.c.l.b16 %v2817
        %v2860 = vunpack.c.l.b16 %v2818
        %v2861 = vunpack.c.l.b16 %v2819
        %v2862 = vunpack.c.l.b16 %v2820
        %v2863 = vunpack.c.l.b16 %v2821
        %v2864 = vpack.c.b16 %v2849, %v2848
        %v2865 = vpack.c.b16 %v2851, %v2850
        %v2866 = vpack.c.b16 %v2853, %v2852
        %v2867 = vpack.c.b16 %v2855, %v2854
        %v2868 = vpack.c.b16 %v2857, %v2856
        %v2869 = vpack.c.b16 %v2859, %v2858
        %v2870 = vpack.c.b16 %v2861, %v2860
        %v2871 = vpack.c.b16 %v2863, %v2862
        %2880 = vmatprep.subr.bf16.mxu0 0
        %2881 = vmatpush1.bf16.msra.mxu0 %v2871
        %2882 = vmatprep.subr.bf16.mxu0 0
        %2883 = vmatpush1.bf16.msra.mxu0 %v2870
        %2884 = vmatprep.subr.bf16.mxu0 0
        %2885 = vmatpush1.bf16.msra.mxu0 %v2869
        %2886 = vmatprep.subr.bf16.mxu0 0
        %2887 = vmatpush1.bf16.msra.mxu0 %v2868
        %2888 = vmatprep.subr.bf16.mxu0 0
        %2889 = vmatpush1.bf16.msra.mxu0 %v2867
        %2890 = vmatprep.subr.bf16.mxu0 0
        %2891 = vmatpush1.bf16.msra.mxu0 %v2866
        %2892 = vmatprep.subr.bf16.mxu0 0
        %2893 = vmatpush1.bf16.msra.mxu0 %v2865
        %2894 = vmatprep.subr.bf16.mxu0 0
        %2895 = vmatpush1.bf16.msra.mxu0 %v2864
        %2896 = vmatprep.subr.bf16.mxu0 0
        %2897 = vmatpush2.bf16.msra.mxu0 0
        %2898 = vmatprep.subr.bf16.mxu0 0
        %2899 = vmatpush2.bf16.msra.mxu0 0
        %2900 = vmatprep.subr.bf16.mxu0 0
        %2901 = vmatpush2.bf16.msra.mxu0 0
        %2902 = vmatprep.subr.bf16.mxu0 0
        %2903 = vmatpush2.bf16.msra.mxu0 0
        %2904 = vmatprep.subr.bf16.mxu0 0
        %2905 = vmatpush2.bf16.msra.mxu0 0
        %2906 = vmatprep.subr.bf16.mxu0 0
        %2907 = vmatpush2.bf16.msra.mxu0 0
        %2908 = vmatprep.subr.bf16.mxu0 0
        %2909 = vmatpush2.bf16.msra.mxu0 0
        %2910 = vmatprep.subr.bf16.mxu0 0
        %2911 = vmatpush2.bf16.msra.mxu0 0
        %2912 = vmatprep.mubr.bf16.mxu0 0
        %2913 = vmatmul.mubr.bf16.gmra.mxu0 %v2827
        %v2914 = vpop.f32.mrf.mxu0
        %v2915 = vadd.f32 0.0, %v2914
        %v2916 = vpop.f32.mrf.mxu0
        %v2917 = vpop.f32.mrf.mxu0
        %v2918 = vadd.f32 0.0, %v2917
        %v2919 = vpop.f32.mrf.mxu0
        %2920 = vmatprep.mubr.bf16.mxu0 0
        %2921 = vmatmul.mubr.bf16.gmra.mxu0 %v2829
        %v2922 = vpop.f32.mrf.mxu0
        %v2923 = vadd.f32 0.0, %v2922
        %v2924 = vpop.f32.mrf.mxu0
        %v2925 = vpop.f32.mrf.mxu0
        %v2926 = vadd.f32 0.0, %v2925
        %v2927 = vpop.f32.mrf.mxu0
        %2928 = vdwg.mxu0
        %v2929 = vadd.f32 %v2801, %v2915
        %v2930 = vadd.f32 %v2802, %v2918
        %v2931 = vadd.f32 %v2803, %v2923
        %v2932 = vadd.f32 %v2804, %v2926
        %v2933 = vld [vmem:[#allocation2] sm:$0xee]
        %v2934 = vld [vmem:[#allocation3] sm:$0xee]
        %s2935 = scalar_lea.vmem [#allocation10], 448
        %v2936 = vld [vmem:[%s2935] sm:$0xf]
        %v2937 = vld [vmem:[%s2935 + $0x4] sm:$0xf]
        %v2938 = vld [vmem:[%s2935 + $0x8] sm:$0xf]
        %v2939 = vld [vmem:[%s2935 + $0xc] sm:$0xf]
        %v2940 = vld [vmem:[%s2935 + $0x10] sm:$0xf]
        %v2941 = vld [vmem:[%s2935 + $0x14] sm:$0xf]
        %v2942 = vld [vmem:[%s2935 + $0x18] sm:$0xf]
        %v2943 = vld [vmem:[%s2935 + $0x1c] sm:$0xf]
        %v2944 = vld [vmem:[%s2935 + $0x20] sm:$0xf]
        %v2945 = vld [vmem:[%s2935 + $0x24] sm:$0xf]
        %v2946 = vld [vmem:[%s2935 + $0x28] sm:$0xf]
        %v2947 = vld [vmem:[%s2935 + $0x2c] sm:$0xf]
        %v2948 = vld [vmem:[%s2935 + $0x30] sm:$0xf]
        %v2949 = vld [vmem:[%s2935 + $0x34] sm:$0xf]
        %v2950 = vld [vmem:[%s2935 + $0x38] sm:$0xf]
        %v2951 = vld [vmem:[%s2935 + $0x3c] sm:$0xf]
        %v2953 = vunpack.c.l.b16 %v2933
        %v2954 = vunpack.c.h.b16 %v2933
        %v2955 = vpack.c.b16 %v2056, %v2953
        %v2956 = vpack.c.b16 %v2057, %v2954
        %v2957 = vrot.slane %v2955, 1
        %v2958 = vrot.slane %v2066, 1
        %v2959 = vsel %vm2696, %v2957, %v2958
        %v2960 = vrot.slane %v2956, 1
        %v2961 = vrot.slane %v2067, 1
        %v2962 = vsel %vm2696, %v2960, %v2961
        %v2963 = vrot.slane %v2068, 1
        %v2964 = vsel %vm2696, %v2958, %v2963
        %v2965 = vrot.slane %v2069, 1
        %v2966 = vsel %vm2696, %v2961, %v2965
        %2967 = vrot.lane.b32.xlu0 %v2959, 124
        %v2968 = vpop.permute.xlu0 %2967
        %2969 = vrot.lane.b32.xlu0 %v2962, 124
        %v2970 = vpop.permute.xlu0 %2969
        %2971 = vrot.lane.b32.xlu0 %v2964, 124
        %v2972 = vpop.permute.xlu0 %2971
        %2973 = vrot.lane.b32.xlu0 %v2966, 124
        %v2974 = vpop.permute.xlu0 %2973
        %v2975 = vsel %vm1192, %v2968, %v2970
        %v2976 = vsel %vm1192, %v2972, %v2974
        %v2995 = vunpack.c.l.b16 %v2936
        %v2996 = vunpack.c.l.b16 %v2937
        %v2997 = vunpack.c.l.b16 %v2938
        %v2998 = vunpack.c.l.b16 %v2939
        %v2999 = vunpack.c.l.b16 %v2940
        %v3000 = vunpack.c.l.b16 %v2941
        %v3001 = vunpack.c.l.b16 %v2942
        %v3002 = vunpack.c.l.b16 %v2943
        %v3003 = vunpack.c.l.b16 %v2944
        %v3004 = vunpack.c.l.b16 %v2945
        %v3005 = vunpack.c.l.b16 %v2946
        %v3006 = vunpack.c.l.b16 %v2947
        %v3007 = vunpack.c.l.b16 %v2948
        %v3008 = vunpack.c.l.b16 %v2949
        %v3009 = vunpack.c.l.b16 %v2950
        %v3010 = vunpack.c.l.b16 %v2951
        %v3011 = vpack.c.b16 %v2996, %v2995
        %v3012 = vpack.c.b16 %v2998, %v2997
        %v3013 = vpack.c.b16 %v3000, %v2999
        %v3014 = vpack.c.b16 %v3002, %v3001
        %v3015 = vpack.c.b16 %v3004, %v3003
        %v3016 = vpack.c.b16 %v3006, %v3005
        %v3017 = vpack.c.b16 %v3008, %v3007
        %v3018 = vpack.c.b16 %v3010, %v3009
        %3027 = vmatprep.subr.bf16.mxu0 0
        %3028 = vmatpush1.bf16.msra.mxu0 %v3018
        %3029 = vmatprep.subr.bf16.mxu0 0
        %3030 = vmatpush1.bf16.msra.mxu0 %v3017
        %3031 = vmatprep.subr.bf16.mxu0 0
        %3032 = vmatpush1.bf16.msra.mxu0 %v3016
        %3033 = vmatprep.subr.bf16.mxu0 0
        %3034 = vmatpush1.bf16.msra.mxu0 %v3015
        %3035 = vmatprep.subr.bf16.mxu0 0
        %3036 = vmatpush1.bf16.msra.mxu0 %v3014
        %3037 = vmatprep.subr.bf16.mxu0 0
        %3038 = vmatpush1.bf16.msra.mxu0 %v3013
        %3039 = vmatprep.subr.bf16.mxu0 0
        %3040 = vmatpush1.bf16.msra.mxu0 %v3012
        %3041 = vmatprep.subr.bf16.mxu0 0
        %3042 = vmatpush1.bf16.msra.mxu0 %v3011
        %3043 = vmatprep.subr.bf16.mxu0 0
        %3044 = vmatpush2.bf16.msra.mxu0 0
        %3045 = vmatprep.subr.bf16.mxu0 0
        %3046 = vmatpush2.bf16.msra.mxu0 0
        %3047 = vmatprep.subr.bf16.mxu0 0
        %3048 = vmatpush2.bf16.msra.mxu0 0
        %3049 = vmatprep.subr.bf16.mxu0 0
        %3050 = vmatpush2.bf16.msra.mxu0 0
        %3051 = vmatprep.subr.bf16.mxu0 0
        %3052 = vmatpush2.bf16.msra.mxu0 0
        %3053 = vmatprep.subr.bf16.mxu0 0
        %3054 = vmatpush2.bf16.msra.mxu0 0
        %3055 = vmatprep.subr.bf16.mxu0 0
        %3056 = vmatpush2.bf16.msra.mxu0 0
        %3057 = vmatprep.subr.bf16.mxu0 0
        %3058 = vmatpush2.bf16.msra.mxu0 0
        %3059 = vmatprep.mubr.bf16.mxu0 0
        %3060 = vmatmul.mubr.bf16.gmra.mxu0 %v2975
        %v3061 = vpop.f32.mrf.mxu0
        %v3062 = vadd.f32 0.0, %v3061
        %v3063 = vpop.f32.mrf.mxu0
        %v3064 = vpop.f32.mrf.mxu0
        %v3065 = vadd.f32 0.0, %v3064
        %v3066 = vpop.f32.mrf.mxu0
        %3067 = vmatprep.mubr.bf16.mxu0 0
        %3068 = vmatmul.mubr.bf16.gmra.mxu0 %v2976
        %v3069 = vpop.f32.mrf.mxu0
        %v3070 = vadd.f32 0.0, %v3069
        %v3071 = vpop.f32.mrf.mxu0
        %v3072 = vpop.f32.mrf.mxu0
        %v3073 = vadd.f32 0.0, %v3072
        %v3074 = vpop.f32.mrf.mxu0
        %3075 = vdwg.mxu0
        %v3076 = vadd.f32 %v2929, %v3062
        %v3077 = vadd.f32 %v2930, %v3065
        %v3078 = vadd.f32 %v2931, %v3070
        %v3079 = vadd.f32 %v2932, %v3073
        %s3080 = scalar_lea.vmem [#allocation11], 448
        %v3081 = vld [vmem:[%s3080] sm:$0xf]
        %v3082 = vld [vmem:[%s3080 + $0x4] sm:$0xf]
        %v3083 = vld [vmem:[%s3080 + $0x8] sm:$0xf]
        %v3084 = vld [vmem:[%s3080 + $0xc] sm:$0xf]
        %v3085 = vld [vmem:[%s3080 + $0x10] sm:$0xf]
        %v3086 = vld [vmem:[%s3080 + $0x14] sm:$0xf]
        %v3087 = vld [vmem:[%s3080 + $0x18] sm:$0xf]
        %v3088 = vld [vmem:[%s3080 + $0x1c] sm:$0xf]
        %v3089 = vld [vmem:[%s3080 + $0x20] sm:$0xf]
        %v3090 = vld [vmem:[%s3080 + $0x24] sm:$0xf]
        %v3091 = vld [vmem:[%s3080 + $0x28] sm:$0xf]
        %v3092 = vld [vmem:[%s3080 + $0x2c] sm:$0xf]
        %v3093 = vld [vmem:[%s3080 + $0x30] sm:$0xf]
        %v3094 = vld [vmem:[%s3080 + $0x34] sm:$0xf]
        %v3095 = vld [vmem:[%s3080 + $0x38] sm:$0xf]
        %v3096 = vld [vmem:[%s3080 + $0x3c] sm:$0xf]
        %v3098 = vunpack.c.l.b16 %v2934
        %v3099 = vunpack.c.h.b16 %v2934
        %v3100 = vpack.c.b16 %v2247, %v3098
        %v3101 = vpack.c.b16 %v2248, %v3099
        %v3102 = vrot.slane %v3100, 1
        %v3103 = vrot.slane %v2257, 1
        %v3104 = vsel %vm2696, %v3102, %v3103
        %v3105 = vrot.slane %v3101, 1
        %v3106 = vrot.slane %v2258, 1
        %v3107 = vsel %vm2696, %v3105, %v3106
        %v3108 = vrot.slane %v2259, 1
        %v3109 = vsel %vm2696, %v3103, %v3108
        %v3110 = vrot.slane %v2260, 1
        %v3111 = vsel %vm2696, %v3106, %v3110
        %3112 = vrot.lane.b32.xlu0 %v3104, 124
        %v3113 = vpop.permute.xlu0 %3112
        %3114 = vrot.lane.b32.xlu0 %v3107, 124
        %v3115 = vpop.permute.xlu0 %3114
        %3116 = vrot.lane.b32.xlu0 %v3109, 124
        %v3117 = vpop.permute.xlu0 %3116
        %3118 = vrot.lane.b32.xlu0 %v3111, 124
        %v3119 = vpop.permute.xlu0 %3118
        %v3120 = vsel %vm1192, %v3113, %v3115
        %v3121 = vsel %vm1192, %v3117, %v3119
        %v3140 = vunpack.c.l.b16 %v3081
        %v3141 = vunpack.c.l.b16 %v3082
        %v3142 = vunpack.c.l.b16 %v3083
        %v3143 = vunpack.c.l.b16 %v3084
        %v3144 = vunpack.c.l.b16 %v3085
        %v3145 = vunpack.c.l.b16 %v3086
        %v3146 = vunpack.c.l.b16 %v3087
        %v3147 = vunpack.c.l.b16 %v3088
        %v3148 = vunpack.c.l.b16 %v3089
        %v3149 = vunpack.c.l.b16 %v3090
        %v3150 = vunpack.c.l.b16 %v3091
        %v3151 = vunpack.c.l.b16 %v3092
        %v3152 = vunpack.c.l.b16 %v3093
        %v3153 = vunpack.c.l.b16 %v3094
        %v3154 = vunpack.c.l.b16 %v3095
        %v3155 = vunpack.c.l.b16 %v3096
        %v3156 = vpack.c.b16 %v3141, %v3140
        %v3157 = vpack.c.b16 %v3143, %v3142
        %v3158 = vpack.c.b16 %v3145, %v3144
        %v3159 = vpack.c.b16 %v3147, %v3146
        %v3160 = vpack.c.b16 %v3149, %v3148
        %v3161 = vpack.c.b16 %v3151, %v3150
        %v3162 = vpack.c.b16 %v3153, %v3152
        %v3163 = vpack.c.b16 %v3155, %v3154
        %3172 = vmatprep.subr.bf16.mxu0 0
        %3173 = vmatpush1.bf16.msra.mxu0 %v3163
        %3174 = vmatprep.subr.bf16.mxu0 0
        %3175 = vmatpush1.bf16.msra.mxu0 %v3162
        %3176 = vmatprep.subr.bf16.mxu0 0
        %3177 = vmatpush1.bf16.msra.mxu0 %v3161
        %3178 = vmatprep.subr.bf16.mxu0 0
        %3179 = vmatpush1.bf16.msra.mxu0 %v3160
        %3180 = vmatprep.subr.bf16.mxu0 0
        %3181 = vmatpush1.bf16.msra.mxu0 %v3159
        %3182 = vmatprep.subr.bf16.mxu0 0
        %3183 = vmatpush1.bf16.msra.mxu0 %v3158
        %3184 = vmatprep.subr.bf16.mxu0 0
        %3185 = vmatpush1.bf16.msra.mxu0 %v3157
        %3186 = vmatprep.subr.bf16.mxu0 0
        %3187 = vmatpush1.bf16.msra.mxu0 %v3156
        %3188 = vmatprep.subr.bf16.mxu0 0
        %3189 = vmatpush2.bf16.msra.mxu0 0
        %3190 = vmatprep.subr.bf16.mxu0 0
        %3191 = vmatpush2.bf16.msra.mxu0 0
        %3192 = vmatprep.subr.bf16.mxu0 0
        %3193 = vmatpush2.bf16.msra.mxu0 0
        %3194 = vmatprep.subr.bf16.mxu0 0
        %3195 = vmatpush2.bf16.msra.mxu0 0
        %3196 = vmatprep.subr.bf16.mxu0 0
        %3197 = vmatpush2.bf16.msra.mxu0 0
        %3198 = vmatprep.subr.bf16.mxu0 0
        %3199 = vmatpush2.bf16.msra.mxu0 0
        %3200 = vmatprep.subr.bf16.mxu0 0
        %3201 = vmatpush2.bf16.msra.mxu0 0
        %3202 = vmatprep.subr.bf16.mxu0 0
        %3203 = vmatpush2.bf16.msra.mxu0 0
        %3204 = vmatprep.mubr.bf16.mxu0 0
        %3205 = vmatmul.mubr.bf16.gmra.mxu0 %v3120
        %v3206 = vpop.f32.mrf.mxu0
        %v3207 = vadd.f32 0.0, %v3206
        %v3208 = vpop.f32.mrf.mxu0
        %v3209 = vpop.f32.mrf.mxu0
        %v3210 = vadd.f32 0.0, %v3209
        %v3211 = vpop.f32.mrf.mxu0
        %3212 = vmatprep.mubr.bf16.mxu0 0
        %3213 = vmatmul.mubr.bf16.gmra.mxu0 %v3121
        %v3214 = vpop.f32.mrf.mxu0
        %v3215 = vadd.f32 0.0, %v3214
        %v3216 = vpop.f32.mrf.mxu0
        %v3217 = vpop.f32.mrf.mxu0
        %v3218 = vadd.f32 0.0, %v3217
        %v3219 = vpop.f32.mrf.mxu0
        %3220 = vdwg.mxu0
        %v3221 = vadd.f32 %v3076, %v3207
        %v3222 = vadd.f32 %v3077, %v3210
        %v3223 = vadd.f32 %v3078, %v3215
        %v3224 = vadd.f32 %v3079, %v3218
        %s3225 = scalar_lea.vmem [#allocation10], 512
        %v3226 = vld [vmem:[%s3225] sm:$0xf]
        %v3227 = vld [vmem:[%s3225 + $0x4] sm:$0xf]
        %v3228 = vld [vmem:[%s3225 + $0x8] sm:$0xf]
        %v3229 = vld [vmem:[%s3225 + $0xc] sm:$0xf]
        %v3230 = vld [vmem:[%s3225 + $0x10] sm:$0xf]
        %v3231 = vld [vmem:[%s3225 + $0x14] sm:$0xf]
        %v3232 = vld [vmem:[%s3225 + $0x18] sm:$0xf]
        %v3233 = vld [vmem:[%s3225 + $0x1c] sm:$0xf]
        %v3234 = vld [vmem:[%s3225 + $0x20] sm:$0xf]
        %v3235 = vld [vmem:[%s3225 + $0x24] sm:$0xf]
        %v3236 = vld [vmem:[%s3225 + $0x28] sm:$0xf]
        %v3237 = vld [vmem:[%s3225 + $0x2c] sm:$0xf]
        %v3238 = vld [vmem:[%s3225 + $0x30] sm:$0xf]
        %v3239 = vld [vmem:[%s3225 + $0x34] sm:$0xf]
        %v3240 = vld [vmem:[%s3225 + $0x38] sm:$0xf]
        %v3241 = vld [vmem:[%s3225 + $0x3c] sm:$0xf]
        %3242 = vrot.lane.b32.xlu0 %v2959, 120
        %v3243 = vpop.permute.xlu0 %3242
        %3244 = vrot.lane.b32.xlu0 %v2962, 120
        %v3245 = vpop.permute.xlu0 %3244
        %3246 = vrot.lane.b32.xlu0 %v2964, 120
        %v3247 = vpop.permute.xlu0 %3246
        %3248 = vrot.lane.b32.xlu0 %v2966, 120
        %v3249 = vpop.permute.xlu0 %3248
        %v3250 = vsel %vm1469, %v3243, %v3245
        %v3251 = vsel %vm1469, %v3247, %v3249
        %v3270 = vunpack.c.l.b16 %v3226
        %v3271 = vunpack.c.l.b16 %v3227
        %v3272 = vunpack.c.l.b16 %v3228
        %v3273 = vunpack.c.l.b16 %v3229
        %v3274 = vunpack.c.l.b16 %v3230
        %v3275 = vunpack.c.l.b16 %v3231
        %v3276 = vunpack.c.l.b16 %v3232
        %v3277 = vunpack.c.l.b16 %v3233
        %v3278 = vunpack.c.l.b16 %v3234
        %v3279 = vunpack.c.l.b16 %v3235
        %v3280 = vunpack.c.l.b16 %v3236
        %v3281 = vunpack.c.l.b16 %v3237
        %v3282 = vunpack.c.l.b16 %v3238
        %v3283 = vunpack.c.l.b16 %v3239
        %v3284 = vunpack.c.l.b16 %v3240
        %v3285 = vunpack.c.l.b16 %v3241
        %v3286 = vpack.c.b16 %v3271, %v3270
        %v3287 = vpack.c.b16 %v3273, %v3272
        %v3288 = vpack.c.b16 %v3275, %v3274
        %v3289 = vpack.c.b16 %v3277, %v3276
        %v3290 = vpack.c.b16 %v3279, %v3278
        %v3291 = vpack.c.b16 %v3281, %v3280
        %v3292 = vpack.c.b16 %v3283, %v3282
        %v3293 = vpack.c.b16 %v3285, %v3284
        %3302 = vmatprep.subr.bf16.mxu0 0
        %3303 = vmatpush1.bf16.msra.mxu0 %v3293
        %3304 = vmatprep.subr.bf16.mxu0 0
        %3305 = vmatpush1.bf16.msra.mxu0 %v3292
        %3306 = vmatprep.subr.bf16.mxu0 0
        %3307 = vmatpush1.bf16.msra.mxu0 %v3291
        %3308 = vmatprep.subr.bf16.mxu0 0
        %3309 = vmatpush1.bf16.msra.mxu0 %v3290
        %3310 = vmatprep.subr.bf16.mxu0 0
        %3311 = vmatpush1.bf16.msra.mxu0 %v3289
        %3312 = vmatprep.subr.bf16.mxu0 0
        %3313 = vmatpush1.bf16.msra.mxu0 %v3288
        %3314 = vmatprep.subr.bf16.mxu0 0
        %3315 = vmatpush1.bf16.msra.mxu0 %v3287
        %3316 = vmatprep.subr.bf16.mxu0 0
        %3317 = vmatpush1.bf16.msra.mxu0 %v3286
        %3318 = vmatprep.subr.bf16.mxu0 0
        %3319 = vmatpush2.bf16.msra.mxu0 0
        %3320 = vmatprep.subr.bf16.mxu0 0
        %3321 = vmatpush2.bf16.msra.mxu0 0
        %3322 = vmatprep.subr.bf16.mxu0 0
        %3323 = vmatpush2.bf16.msra.mxu0 0
        %3324 = vmatprep.subr.bf16.mxu0 0
        %3325 = vmatpush2.bf16.msra.mxu0 0
        %3326 = vmatprep.subr.bf16.mxu0 0
        %3327 = vmatpush2.bf16.msra.mxu0 0
        %3328 = vmatprep.subr.bf16.mxu0 0
        %3329 = vmatpush2.bf16.msra.mxu0 0
        %3330 = vmatprep.subr.bf16.mxu0 0
        %3331 = vmatpush2.bf16.msra.mxu0 0
        %3332 = vmatprep.subr.bf16.mxu0 0
        %3333 = vmatpush2.bf16.msra.mxu0 0
        %3334 = vmatprep.mubr.bf16.mxu0 0
        %3335 = vmatmul.mubr.bf16.gmra.mxu0 %v3250
        %v3336 = vpop.f32.mrf.mxu0
        %v3337 = vadd.f32 0.0, %v3336
        %v3338 = vpop.f32.mrf.mxu0
        %v3339 = vpop.f32.mrf.mxu0
        %v3340 = vadd.f32 0.0, %v3339
        %v3341 = vpop.f32.mrf.mxu0
        %3342 = vmatprep.mubr.bf16.mxu0 0
        %3343 = vmatmul.mubr.bf16.gmra.mxu0 %v3251
        %v3344 = vpop.f32.mrf.mxu0
        %v3345 = vadd.f32 0.0, %v3344
        %v3346 = vpop.f32.mrf.mxu0
        %v3347 = vpop.f32.mrf.mxu0
        %v3348 = vadd.f32 0.0, %v3347
        %v3349 = vpop.f32.mrf.mxu0
        %3350 = vdwg.mxu0
        %v3351 = vadd.f32 %v3221, %v3337
        %v3352 = vadd.f32 %v3222, %v3340
        %v3353 = vadd.f32 %v3223, %v3345
        %v3354 = vadd.f32 %v3224, %v3348
        %s3355 = scalar_lea.vmem [#allocation11], 512
        %v3356 = vld [vmem:[%s3355] sm:$0xf]
        %v3357 = vld [vmem:[%s3355 + $0x4] sm:$0xf]
        %v3358 = vld [vmem:[%s3355 + $0x8] sm:$0xf]
        %v3359 = vld [vmem:[%s3355 + $0xc] sm:$0xf]
        %v3360 = vld [vmem:[%s3355 + $0x10] sm:$0xf]
        %v3361 = vld [vmem:[%s3355 + $0x14] sm:$0xf]
        %v3362 = vld [vmem:[%s3355 + $0x18] sm:$0xf]
        %v3363 = vld [vmem:[%s3355 + $0x1c] sm:$0xf]
        %v3364 = vld [vmem:[%s3355 + $0x20] sm:$0xf]
        %v3365 = vld [vmem:[%s3355 + $0x24] sm:$0xf]
        %v3366 = vld [vmem:[%s3355 + $0x28] sm:$0xf]
        %v3367 = vld [vmem:[%s3355 + $0x2c] sm:$0xf]
        %v3368 = vld [vmem:[%s3355 + $0x30] sm:$0xf]
        %v3369 = vld [vmem:[%s3355 + $0x34] sm:$0xf]
        %v3370 = vld [vmem:[%s3355 + $0x38] sm:$0xf]
        %v3371 = vld [vmem:[%s3355 + $0x3c] sm:$0xf]
        %3372 = vrot.lane.b32.xlu0 %v3104, 120
        %v3373 = vpop.permute.xlu0 %3372
        %3374 = vrot.lane.b32.xlu0 %v3107, 120
        %v3375 = vpop.permute.xlu0 %3374
        %3376 = vrot.lane.b32.xlu0 %v3109, 120
        %v3377 = vpop.permute.xlu0 %3376
        %3378 = vrot.lane.b32.xlu0 %v3111, 120
        %v3379 = vpop.permute.xlu0 %3378
        %v3380 = vsel %vm1469, %v3373, %v3375
        %v3381 = vsel %vm1469, %v3377, %v3379
        %v3400 = vunpack.c.l.b16 %v3356
        %v3401 = vunpack.c.l.b16 %v3357
        %v3402 = vunpack.c.l.b16 %v3358
        %v3403 = vunpack.c.l.b16 %v3359
        %v3404 = vunpack.c.l.b16 %v3360
        %v3405 = vunpack.c.l.b16 %v3361
        %v3406 = vunpack.c.l.b16 %v3362
        %v3407 = vunpack.c.l.b16 %v3363
        %v3408 = vunpack.c.l.b16 %v3364
        %v3409 = vunpack.c.l.b16 %v3365
        %v3410 = vunpack.c.l.b16 %v3366
        %v3411 = vunpack.c.l.b16 %v3367
        %v3412 = vunpack.c.l.b16 %v3368
        %v3413 = vunpack.c.l.b16 %v3369
        %v3414 = vunpack.c.l.b16 %v3370
        %v3415 = vunpack.c.l.b16 %v3371
        %v3416 = vpack.c.b16 %v3401, %v3400
        %v3417 = vpack.c.b16 %v3403, %v3402
        %v3418 = vpack.c.b16 %v3405, %v3404
        %v3419 = vpack.c.b16 %v3407, %v3406
        %v3420 = vpack.c.b16 %v3409, %v3408
        %v3421 = vpack.c.b16 %v3411, %v3410
        %v3422 = vpack.c.b16 %v3413, %v3412
        %v3423 = vpack.c.b16 %v3415, %v3414
        %3432 = vmatprep.subr.bf16.mxu0 0
        %3433 = vmatpush1.bf16.msra.mxu0 %v3423
        %3434 = vmatprep.subr.bf16.mxu0 0
        %3435 = vmatpush1.bf16.msra.mxu0 %v3422
        %3436 = vmatprep.subr.bf16.mxu0 0
        %3437 = vmatpush1.bf16.msra.mxu0 %v3421
        %3438 = vmatprep.subr.bf16.mxu0 0
        %3439 = vmatpush1.bf16.msra.mxu0 %v3420
        %3440 = vmatprep.subr.bf16.mxu0 0
        %3441 = vmatpush1.bf16.msra.mxu0 %v3419
        %3442 = vmatprep.subr.bf16.mxu0 0
        %3443 = vmatpush1.bf16.msra.mxu0 %v3418
        %3444 = vmatprep.subr.bf16.mxu0 0
        %3445 = vmatpush1.bf16.msra.mxu0 %v3417
        %3446 = vmatprep.subr.bf16.mxu0 0
        %3447 = vmatpush1.bf16.msra.mxu0 %v3416
        %3448 = vmatprep.subr.bf16.mxu0 0
        %3449 = vmatpush2.bf16.msra.mxu0 0
        %3450 = vmatprep.subr.bf16.mxu0 0
        %3451 = vmatpush2.bf16.msra.mxu0 0
        %3452 = vmatprep.subr.bf16.mxu0 0
        %3453 = vmatpush2.bf16.msra.mxu0 0
        %3454 = vmatprep.subr.bf16.mxu0 0
        %3455 = vmatpush2.bf16.msra.mxu0 0
        %3456 = vmatprep.subr.bf16.mxu0 0
        %3457 = vmatpush2.bf16.msra.mxu0 0
        %3458 = vmatprep.subr.bf16.mxu0 0
        %3459 = vmatpush2.bf16.msra.mxu0 0
        %3460 = vmatprep.subr.bf16.mxu0 0
        %3461 = vmatpush2.bf16.msra.mxu0 0
        %3462 = vmatprep.subr.bf16.mxu0 0
        %3463 = vmatpush2.bf16.msra.mxu0 0
        %3464 = vmatprep.mubr.bf16.mxu0 0
        %3465 = vmatmul.mubr.bf16.gmra.mxu0 %v3380
        %v3466 = vpop.f32.mrf.mxu0
        %v3467 = vadd.f32 0.0, %v3466
        %v3468 = vpop.f32.mrf.mxu0
        %v3469 = vpop.f32.mrf.mxu0
        %v3470 = vadd.f32 0.0, %v3469
        %v3471 = vpop.f32.mrf.mxu0
        %3472 = vmatprep.mubr.bf16.mxu0 0
        %3473 = vmatmul.mubr.bf16.gmra.mxu0 %v3381
        %v3474 = vpop.f32.mrf.mxu0
        %v3475 = vadd.f32 0.0, %v3474
        %v3476 = vpop.f32.mrf.mxu0
        %v3477 = vpop.f32.mrf.mxu0
        %v3478 = vadd.f32 0.0, %v3477
        %v3479 = vpop.f32.mrf.mxu0
        %3480 = vdwg.mxu0
        %v3481 = vadd.f32 %v3351, %v3467
        %v3482 = vadd.f32 %v3352, %v3470
        %v3483 = vadd.f32 %v3353, %v3475
        %v3484 = vadd.f32 %v3354, %v3478
        %v3485 = vld [vmem:[%s6] sm:$0x1]
        %v3487 = vlaneseq
        %v3488 = vshrl.u32 %v3487, 7
        %v3489 = vsub.s32 0, %v3488
        %v3490 = vrot.slane %v3485, %v3489
        %v3492 = vmul.f32 %v3481, %v3490
        %v3493 = vmul.f32 %v3482, %v3490
        %v3494 = vmul.f32 %v3483, %v3490
        %v3495 = vmul.f32 %v3484, %v3490
        %v3496 = vld [vmem:[%s7] sm:$0x1]
        %v3498 = vlaneseq
        %v3499 = vshrl.u32 %v3498, 7
        %v3500 = vsub.s32 0, %v3499
        %v3501 = vrot.slane %v3496, %v3500
        %v3503 = vadd.f32 %v3492, %v3501
        %v3504 = vadd.f32 %v3493, %v3501
        %v3505 = vadd.f32 %v3494, %v3501
        %v3506 = vadd.f32 %v3495, %v3501
        %v3507 = vmax.f32 %v3503, 0.0
        %v3508 = vmax.f32 %v3504, 0.0
        %v3509 = vmax.f32 %v3505, 0.0
        %v3510 = vmax.f32 %v3506, 0.0
        %v3511 = vpack.c.bf16 %v3508, %v3507
        %v3512 = vpack.c.bf16 %v3510, %v3509
        %v3515 = vunpack.c.l.b16 %v3511
        %v3516 = vunpack.c.h.b16 %v3511
        %v3517 = vunpack.c.l.b16 %v3512
        %v3518 = vunpack.c.h.b16 %v3512
        %v3519 = vpack.c.b16 %v3515, %v3515
        %v3520 = vpack.c.b16 %v3516, %v3516
        %v3521 = vpack.c.b16 %v3517, %v3517
        %v3522 = vpack.c.b16 %v3518, %v3518
        %v3524 = vshrl.u32 %v3519, 16
        %v3526 = vrot.slane %v3524, 7
        %v3527 = vshll.u32 %v3519, 16
        %v3529 = vor.u32 %v3526, %v3527
        %v3530 = vrot.slane %v3526, 4
        %v3532 = vshrl.u32 %v3520, 16
        %v3534 = vrot.slane %v3532, 7
        %v3535 = vshll.u32 %v3520, 16
        %v3537 = vor.u32 %v3534, %v3535
        %v3538 = vsel %vm713, %v3530, %v3537
        %v3539 = vrot.slane %v3534, 4
        %v3541 = vshrl.u32 %v3521, 16
        %v3543 = vrot.slane %v3541, 7
        %v3544 = vshll.u32 %v3521, 16
        %v3546 = vor.u32 %v3543, %v3544
        %v3547 = vsel %vm713, %v3539, %v3546
        %v3548 = vrot.slane %v3543, 4
        %v3550 = vshrl.u32 %v3522, 16
        %v3552 = vrot.slane %v3550, 7
        %v3553 = vshll.u32 %v3522, 16
        %v3555 = vor.u32 %v3552, %v3553
        %v3556 = vsel %vm713, %v3548, %v3555
        %v3557 = vrot.slane %v3552, 4
        %3558 = vrot.lane.b32.xlu0 %v3529, 4
        %v3559 = vpop.permute.xlu0 %3558
        %3560 = vrot.lane.b32.xlu0 %v3538, 4
        %v3561 = vpop.permute.xlu0 %3560
        %3562 = vrot.lane.b32.xlu0 %v3547, 4
        %v3563 = vpop.permute.xlu0 %3562
        %3564 = vrot.lane.b32.xlu0 %v3556, 4
        %v3565 = vpop.permute.xlu0 %3564
        %3566 = vrot.lane.b32.xlu0 %v3557, 4
        %v3567 = vpop.permute.xlu0 %3566
        %v3568 = vrot.slane %v3559, 4
        %v3569 = vrot.slane %v3561, 4
        %v3570 = vrot.slane %v3563, 4
        %v3571 = vrot.slane %v3565, 4
        %v3572 = vrot.slane %v3567, 4
        %v3573 = vsel %vm764, %v3568, %v3559
        %v3574 = vsel %vm764, %v3569, %v3561
        %v3575 = vsel %vm764, %v3570, %v3563
        %v3576 = vsel %vm764, %v3571, %v3565
        %v3577 = vsel %vm764, %v3572, %v3567
        %v3583 = vld [vmem:[#allocation4] sm:$0xff]
        %v3584 = vsel %vm781, %v3573, %v3583
        %3585 = vst [vmem:[#allocation4] sm:$0xff] %v3584
        %3586 = vst.msk [vmem:[#allocation4 + $0x8] sm:$0xff] %vm787, %v3574
        %3587 = vst.msk [vmem:[#allocation4 + $0x10] sm:$0xff] %vm787, %v3575
        %3588 = vst.msk [vmem:[#allocation4 + $0x18] sm:$0xff] %vm787, %v3576
        %v3589 = vld [vmem:[#allocation4 + $0x20] sm:$0x11]
        %v3590 = vsel %vm796, %v3577, %v3589
        %3591 = vst [vmem:[#allocation4 + $0x20] sm:$0x11] %v3590
        %v3592 = vld [vmem:[#allocation4] sm:$0xf]
        %v3593 = vld [vmem:[#allocation4 + $0x8] sm:$0xf]
        %v3594 = vld [vmem:[#allocation4 + $0x10] sm:$0xf]
        %v3595 = vld [vmem:[#allocation4 + $0x18] sm:$0xf]
        %v3596 = vld [vmem:[#allocation13] sm:$0xf]
        %v3597 = vld [vmem:[#allocation13 + $0x4] sm:$0xf]
        %v3598 = vld [vmem:[#allocation13 + $0x8] sm:$0xf]
        %v3599 = vld [vmem:[#allocation13 + $0xc] sm:$0xf]
        %v3600 = vld [vmem:[#allocation13 + $0x10] sm:$0xf]
        %v3601 = vld [vmem:[#allocation13 + $0x14] sm:$0xf]
        %v3602 = vld [vmem:[#allocation13 + $0x18] sm:$0xf]
        %v3603 = vld [vmem:[#allocation13 + $0x1c] sm:$0xf]
        %v3604 = vld [vmem:[#allocation13 + $0x20] sm:$0xf]
        %v3605 = vld [vmem:[#allocation13 + $0x24] sm:$0xf]
        %v3606 = vld [vmem:[#allocation13 + $0x28] sm:$0xf]
        %v3607 = vld [vmem:[#allocation13 + $0x2c] sm:$0xf]
        %v3608 = vld [vmem:[#allocation13 + $0x30] sm:$0xf]
        %v3609 = vld [vmem:[#allocation13 + $0x34] sm:$0xf]
        %v3610 = vld [vmem:[#allocation13 + $0x38] sm:$0xf]
        %v3611 = vld [vmem:[#allocation13 + $0x3c] sm:$0xf]
        %v3612 = vld [vmem:[#allocation4] sm:$0xff]
        %v3613 = vld [vmem:[#allocation4 + $0x8] sm:$0xff]
        %v3614 = vld [vmem:[#allocation4 + $0x10] sm:$0xff]
        %v3615 = vld [vmem:[#allocation4 + $0x18] sm:$0xff]
        %s3616 = scalar_lea.vmem [#allocation13], 64
        %v3617 = vld [vmem:[%s3616] sm:$0xf]
        %v3618 = vld [vmem:[%s3616 + $0x4] sm:$0xf]
        %v3619 = vld [vmem:[%s3616 + $0x8] sm:$0xf]
        %v3620 = vld [vmem:[%s3616 + $0xc] sm:$0xf]
        %v3621 = vld [vmem:[%s3616 + $0x10] sm:$0xf]
        %v3622 = vld [vmem:[%s3616 + $0x14] sm:$0xf]
        %v3623 = vld [vmem:[%s3616 + $0x18] sm:$0xf]
        %v3624 = vld [vmem:[%s3616 + $0x1c] sm:$0xf]
        %v3625 = vld [vmem:[%s3616 + $0x20] sm:$0xf]
        %v3626 = vld [vmem:[%s3616 + $0x24] sm:$0xf]
        %v3627 = vld [vmem:[%s3616 + $0x28] sm:$0xf]
        %v3628 = vld [vmem:[%s3616 + $0x2c] sm:$0xf]
        %v3629 = vld [vmem:[%s3616 + $0x30] sm:$0xf]
        %v3630 = vld [vmem:[%s3616 + $0x34] sm:$0xf]
        %v3631 = vld [vmem:[%s3616 + $0x38] sm:$0xf]
        %v3632 = vld [vmem:[%s3616 + $0x3c] sm:$0xf]
        %v3637 = vunpack.c.l.b16 %v3612
        %v3638 = vunpack.c.h.b16 %v3612
        %v3639 = vunpack.c.l.b16 %v3613
        %v3640 = vunpack.c.h.b16 %v3613
        %v3641 = vunpack.c.l.b16 %v3614
        %v3642 = vunpack.c.h.b16 %v3614
        %v3643 = vunpack.c.l.b16 %v3615
        %v3644 = vunpack.c.h.b16 %v3615
        %v3645 = vpack.c.b16 %v3639, %v3637
        %v3646 = vpack.c.b16 %v3640, %v3638
        %v3647 = vpack.c.b16 %v3643, %v3641
        %v3648 = vpack.c.b16 %v3644, %v3642
        %3649 = vrot.lane.b32.xlu0 %v3645, 124
        %v3650 = vpop.permute.xlu0 %3649
        %3651 = vrot.lane.b32.xlu0 %v3646, 124
        %v3652 = vpop.permute.xlu0 %3651
        %3653 = vrot.lane.b32.xlu0 %v3647, 124
        %v3654 = vpop.permute.xlu0 %3653
        %3655 = vrot.lane.b32.xlu0 %v3648, 124
        %v3656 = vpop.permute.xlu0 %3655
        %v3657 = vsel %vm1192, %v3650, %v3652
        %v3658 = vsel %vm1192, %v3654, %v3656
        %v3677 = vunpack.c.l.b16 %v3617
        %v3678 = vunpack.c.l.b16 %v3618
        %v3679 = vunpack.c.l.b16 %v3619
        %v3680 = vunpack.c.l.b16 %v3620
        %v3681 = vunpack.c.l.b16 %v3621
        %v3682 = vunpack.c.l.b16 %v3622
        %v3683 = vunpack.c.l.b16 %v3623
        %v3684 = vunpack.c.l.b16 %v3624
        %v3685 = vunpack.c.l.b16 %v3625
        %v3686 = vunpack.c.l.b16 %v3626
        %v3687 = vunpack.c.l.b16 %v3627
        %v3688 = vunpack.c.l.b16 %v3628
        %v3689 = vunpack.c.l.b16 %v3629
        %v3690 = vunpack.c.l.b16 %v3630
        %v3691 = vunpack.c.l.b16 %v3631
        %v3692 = vunpack.c.l.b16 %v3632
        %v3693 = vpack.c.b16 %v3678, %v3677
        %v3694 = vpack.c.b16 %v3680, %v3679
        %v3695 = vpack.c.b16 %v3682, %v3681
        %v3696 = vpack.c.b16 %v3684, %v3683
        %v3697 = vpack.c.b16 %v3686, %v3685
        %v3698 = vpack.c.b16 %v3688, %v3687
        %v3699 = vpack.c.b16 %v3690, %v3689
        %v3700 = vpack.c.b16 %v3692, %v3691
        %3709 = vmatprep.subr.bf16.mxu0 0
        %3710 = vmatpush1.bf16.msra.mxu0 %v3700
        %3711 = vmatprep.subr.bf16.mxu0 0
        %3712 = vmatpush1.bf16.msra.mxu0 %v3699
        %3713 = vmatprep.subr.bf16.mxu0 0
        %3714 = vmatpush1.bf16.msra.mxu0 %v3698
        %3715 = vmatprep.subr.bf16.mxu0 0
        %3716 = vmatpush1.bf16.msra.mxu0 %v3697
        %3717 = vmatprep.subr.bf16.mxu0 0
        %3718 = vmatpush1.bf16.msra.mxu0 %v3696
        %3719 = vmatprep.subr.bf16.mxu0 0
        %3720 = vmatpush1.bf16.msra.mxu0 %v3695
        %3721 = vmatprep.subr.bf16.mxu0 0
        %3722 = vmatpush1.bf16.msra.mxu0 %v3694
        %3723 = vmatprep.subr.bf16.mxu0 0
        %3724 = vmatpush1.bf16.msra.mxu0 %v3693
        %3725 = vmatprep.subr.bf16.mxu0 0
        %3726 = vmatpush2.bf16.msra.mxu0 0
        %3727 = vmatprep.subr.bf16.mxu0 0
        %3728 = vmatpush2.bf16.msra.mxu0 0
        %3729 = vmatprep.subr.bf16.mxu0 0
        %3730 = vmatpush2.bf16.msra.mxu0 0
        %3731 = vmatprep.subr.bf16.mxu0 0
        %3732 = vmatpush2.bf16.msra.mxu0 0
        %3733 = vmatprep.subr.bf16.mxu0 0
        %3734 = vmatpush2.bf16.msra.mxu0 0
        %3735 = vmatprep.subr.bf16.mxu0 0
        %3736 = vmatpush2.bf16.msra.mxu0 0
        %3737 = vmatprep.subr.bf16.mxu0 0
        %3738 = vmatpush2.bf16.msra.mxu0 0
        %3739 = vmatprep.subr.bf16.mxu0 0
        %3740 = vmatpush2.bf16.msra.mxu0 0
        %3741 = vmatprep.mubr.bf16.mxu0 0
        %3742 = vmatmul.mubr.bf16.gmra.mxu0 %v3657
        %v3743 = vpop.f32.mrf.mxu0
        %v3744 = vadd.f32 0.0, %v3743
        %v3745 = vpop.f32.mrf.mxu0
        %v3746 = vpop.f32.mrf.mxu0
        %v3747 = vadd.f32 0.0, %v3746
        %v3748 = vpop.f32.mrf.mxu0
        %3749 = vmatprep.mubr.bf16.mxu0 0
        %3750 = vmatmul.mubr.bf16.gmra.mxu0 %v3658
        %v3751 = vpop.f32.mrf.mxu0
        %v3752 = vadd.f32 0.0, %v3751
        %v3753 = vpop.f32.mrf.mxu0
        %v3754 = vpop.f32.mrf.mxu0
        %v3755 = vadd.f32 0.0, %v3754
        %v3756 = vpop.f32.mrf.mxu0
        %3757 = vdwg.mxu0
        %v3762 = vunpack.c.l.b16 %v3592
        %v3763 = vunpack.c.l.b16 %v3593
        %v3764 = vunpack.c.l.b16 %v3594
        %v3765 = vunpack.c.l.b16 %v3595
        %v3766 = vpack.c.b16 %v3763, %v3762
        %v3767 = vpack.c.b16 %v3765, %v3764
        %v3786 = vunpack.c.l.b16 %v3596
        %v3787 = vunpack.c.l.b16 %v3597
        %v3788 = vunpack.c.l.b16 %v3598
        %v3789 = vunpack.c.l.b16 %v3599
        %v3790 = vunpack.c.l.b16 %v3600
        %v3791 = vunpack.c.l.b16 %v3601
        %v3792 = vunpack.c.l.b16 %v3602
        %v3793 = vunpack.c.l.b16 %v3603
        %v3794 = vunpack.c.l.b16 %v3604
        %v3795 = vunpack.c.l.b16 %v3605
        %v3796 = vunpack.c.l.b16 %v3606
        %v3797 = vunpack.c.l.b16 %v3607
        %v3798 = vunpack.c.l.b16 %v3608
        %v3799 = vunpack.c.l.b16 %v3609
        %v3800 = vunpack.c.l.b16 %v3610
        %v3801 = vunpack.c.l.b16 %v3611
        %v3802 = vpack.c.b16 %v3787, %v3786
        %v3803 = vpack.c.b16 %v3789, %v3788
        %v3804 = vpack.c.b16 %v3791, %v3790
        %v3805 = vpack.c.b16 %v3793, %v3792
        %v3806 = vpack.c.b16 %v3795, %v3794
        %v3807 = vpack.c.b16 %v3797, %v3796
        %v3808 = vpack.c.b16 %v3799, %v3798
        %v3809 = vpack.c.b16 %v3801, %v3800
        %3818 = vmatprep.subr.bf16.mxu0 0
        %3819 = vmatpush1.bf16.msra.mxu0 %v3809
        %3820 = vmatprep.subr.bf16.mxu0 0
        %3821 = vmatpush1.bf16.msra.mxu0 %v3808
        %3822 = vmatprep.subr.bf16.mxu0 0
        %3823 = vmatpush1.bf16.msra.mxu0 %v3807
        %3824 = vmatprep.subr.bf16.mxu0 0
        %3825 = vmatpush1.bf16.msra.mxu0 %v3806
        %3826 = vmatprep.subr.bf16.mxu0 0
        %3827 = vmatpush1.bf16.msra.mxu0 %v3805
        %3828 = vmatprep.subr.bf16.mxu0 0
        %3829 = vmatpush1.bf16.msra.mxu0 %v3804
        %3830 = vmatprep.subr.bf16.mxu0 0
        %3831 = vmatpush1.bf16.msra.mxu0 %v3803
        %3832 = vmatprep.subr.bf16.mxu0 0
        %3833 = vmatpush1.bf16.msra.mxu0 %v3802
        %3834 = vmatprep.subr.bf16.mxu0 0
        %3835 = vmatpush2.bf16.msra.mxu0 0
        %3836 = vmatprep.subr.bf16.mxu0 0
        %3837 = vmatpush2.bf16.msra.mxu0 0
        %3838 = vmatprep.subr.bf16.mxu0 0
        %3839 = vmatpush2.bf16.msra.mxu0 0
        %3840 = vmatprep.subr.bf16.mxu0 0
        %3841 = vmatpush2.bf16.msra.mxu0 0
        %3842 = vmatprep.subr.bf16.mxu0 0
        %3843 = vmatpush2.bf16.msra.mxu0 0
        %3844 = vmatprep.subr.bf16.mxu0 0
        %3845 = vmatpush2.bf16.msra.mxu0 0
        %3846 = vmatprep.subr.bf16.mxu0 0
        %3847 = vmatpush2.bf16.msra.mxu0 0
        %3848 = vmatprep.subr.bf16.mxu0 0
        %3849 = vmatpush2.bf16.msra.mxu0 0
        %3850 = vmatprep.mubr.bf16.mxu0 0
        %3851 = vmatmul.mubr.bf16.gmra.mxu0 %v3766
        %v3852 = vpop.f32.mrf.mxu0
        %v3853 = vadd.f32 %v3744, %v3852
        %v3854 = vpop.f32.mrf.mxu0
        %v3855 = vpop.f32.mrf.mxu0
        %v3856 = vadd.f32 %v3747, %v3855
        %v3857 = vpop.f32.mrf.mxu0
        %3858 = vmatprep.mubr.bf16.mxu0 0
        %3859 = vmatmul.mubr.bf16.gmra.mxu0 %v3767
        %v3860 = vpop.f32.mrf.mxu0
        %v3861 = vadd.f32 %v3752, %v3860
        %v3862 = vpop.f32.mrf.mxu0
        %v3863 = vpop.f32.mrf.mxu0
        %v3864 = vadd.f32 %v3755, %v3863
        %v3865 = vpop.f32.mrf.mxu0
        %3866 = vdwg.mxu0
        %s3867 = scalar_lea.vmem [#allocation13], 128
        %v3868 = vld [vmem:[%s3867] sm:$0xf]
        %v3869 = vld [vmem:[%s3867 + $0x4] sm:$0xf]
        %v3870 = vld [vmem:[%s3867 + $0x8] sm:$0xf]
        %v3871 = vld [vmem:[%s3867 + $0xc] sm:$0xf]
        %v3872 = vld [vmem:[%s3867 + $0x10] sm:$0xf]
        %v3873 = vld [vmem:[%s3867 + $0x14] sm:$0xf]
        %v3874 = vld [vmem:[%s3867 + $0x18] sm:$0xf]
        %v3875 = vld [vmem:[%s3867 + $0x1c] sm:$0xf]
        %v3876 = vld [vmem:[%s3867 + $0x20] sm:$0xf]
        %v3877 = vld [vmem:[%s3867 + $0x24] sm:$0xf]
        %v3878 = vld [vmem:[%s3867 + $0x28] sm:$0xf]
        %v3879 = vld [vmem:[%s3867 + $0x2c] sm:$0xf]
        %v3880 = vld [vmem:[%s3867 + $0x30] sm:$0xf]
        %v3881 = vld [vmem:[%s3867 + $0x34] sm:$0xf]
        %v3882 = vld [vmem:[%s3867 + $0x38] sm:$0xf]
        %v3883 = vld [vmem:[%s3867 + $0x3c] sm:$0xf]
        %3884 = vrot.lane.b32.xlu0 %v3645, 120
        %v3885 = vpop.permute.xlu0 %3884
        %3886 = vrot.lane.b32.xlu0 %v3646, 120
        %v3887 = vpop.permute.xlu0 %3886
        %3888 = vrot.lane.b32.xlu0 %v3647, 120
        %v3889 = vpop.permute.xlu0 %3888
        %3890 = vrot.lane.b32.xlu0 %v3648, 120
        %v3891 = vpop.permute.xlu0 %3890
        %v3892 = vsel %vm1469, %v3885, %v3887
        %v3893 = vsel %vm1469, %v3889, %v3891
        %v3912 = vunpack.c.l.b16 %v3868
        %v3913 = vunpack.c.l.b16 %v3869
        %v3914 = vunpack.c.l.b16 %v3870
        %v3915 = vunpack.c.l.b16 %v3871
        %v3916 = vunpack.c.l.b16 %v3872
        %v3917 = vunpack.c.l.b16 %v3873
        %v3918 = vunpack.c.l.b16 %v3874
        %v3919 = vunpack.c.l.b16 %v3875
        %v3920 = vunpack.c.l.b16 %v3876
        %v3921 = vunpack.c.l.b16 %v3877
        %v3922 = vunpack.c.l.b16 %v3878
        %v3923 = vunpack.c.l.b16 %v3879
        %v3924 = vunpack.c.l.b16 %v3880
        %v3925 = vunpack.c.l.b16 %v3881
        %v3926 = vunpack.c.l.b16 %v3882
        %v3927 = vunpack.c.l.b16 %v3883
        %v3928 = vpack.c.b16 %v3913, %v3912
        %v3929 = vpack.c.b16 %v3915, %v3914
        %v3930 = vpack.c.b16 %v3917, %v3916
        %v3931 = vpack.c.b16 %v3919, %v3918
        %v3932 = vpack.c.b16 %v3921, %v3920
        %v3933 = vpack.c.b16 %v3923, %v3922
        %v3934 = vpack.c.b16 %v3925, %v3924
        %v3935 = vpack.c.b16 %v3927, %v3926
        %3944 = vmatprep.subr.bf16.mxu0 0
        %3945 = vmatpush1.bf16.msra.mxu0 %v3935
        %3946 = vmatprep.subr.bf16.mxu0 0
        %3947 = vmatpush1.bf16.msra.mxu0 %v3934
        %3948 = vmatprep.subr.bf16.mxu0 0
        %3949 = vmatpush1.bf16.msra.mxu0 %v3933
        %3950 = vmatprep.subr.bf16.mxu0 0
        %3951 = vmatpush1.bf16.msra.mxu0 %v3932
        %3952 = vmatprep.subr.bf16.mxu0 0
        %3953 = vmatpush1.bf16.msra.mxu0 %v3931
        %3954 = vmatprep.subr.bf16.mxu0 0
        %3955 = vmatpush1.bf16.msra.mxu0 %v3930
        %3956 = vmatprep.subr.bf16.mxu0 0
        %3957 = vmatpush1.bf16.msra.mxu0 %v3929
        %3958 = vmatprep.subr.bf16.mxu0 0
        %3959 = vmatpush1.bf16.msra.mxu0 %v3928
        %3960 = vmatprep.subr.bf16.mxu0 0
        %3961 = vmatpush2.bf16.msra.mxu0 0
        %3962 = vmatprep.subr.bf16.mxu0 0
        %3963 = vmatpush2.bf16.msra.mxu0 0
        %3964 = vmatprep.subr.bf16.mxu0 0
        %3965 = vmatpush2.bf16.msra.mxu0 0
        %3966 = vmatprep.subr.bf16.mxu0 0
        %3967 = vmatpush2.bf16.msra.mxu0 0
        %3968 = vmatprep.subr.bf16.mxu0 0
        %3969 = vmatpush2.bf16.msra.mxu0 0
        %3970 = vmatprep.subr.bf16.mxu0 0
        %3971 = vmatpush2.bf16.msra.mxu0 0
        %3972 = vmatprep.subr.bf16.mxu0 0
        %3973 = vmatpush2.bf16.msra.mxu0 0
        %3974 = vmatprep.subr.bf16.mxu0 0
        %3975 = vmatpush2.bf16.msra.mxu0 0
        %3976 = vmatprep.mubr.bf16.mxu0 0
        %3977 = vmatmul.mubr.bf16.gmra.mxu0 %v3892
        %v3978 = vpop.f32.mrf.mxu0
        %v3979 = vadd.f32 0.0, %v3978
        %v3980 = vpop.f32.mrf.mxu0
        %v3981 = vpop.f32.mrf.mxu0
        %v3982 = vadd.f32 0.0, %v3981
        %v3983 = vpop.f32.mrf.mxu0
        %3984 = vmatprep.mubr.bf16.mxu0 0
        %3985 = vmatmul.mubr.bf16.gmra.mxu0 %v3893
        %v3986 = vpop.f32.mrf.mxu0
        %v3987 = vadd.f32 0.0, %v3986
        %v3988 = vpop.f32.mrf.mxu0
        %v3989 = vpop.f32.mrf.mxu0
        %v3990 = vadd.f32 0.0, %v3989
        %v3991 = vpop.f32.mrf.mxu0
        %3992 = vdwg.mxu0
        %v3993 = vadd.f32 %v3853, %v3979
        %v3994 = vadd.f32 %v3856, %v3982
        %v3995 = vadd.f32 %v3861, %v3987
        %v3996 = vadd.f32 %v3864, %v3990
        %v3997 = vld [vmem:[#allocation4] sm:$0xf]
        %v3998 = vld [vmem:[#allocation4 + $0x8] sm:$0xf]
        %v3999 = vld [vmem:[#allocation4 + $0x10] sm:$0xf]
        %v4000 = vld [vmem:[#allocation4 + $0x18] sm:$0xf]
        %v4001 = vld [vmem:[#allocation4 + $0x20] sm:$0x1]
        %s4002 = scalar_lea.vmem [#allocation13], 192
        %v4003 = vld [vmem:[%s4002] sm:$0xf]
        %v4004 = vld [vmem:[%s4002 + $0x4] sm:$0xf]
        %v4005 = vld [vmem:[%s4002 + $0x8] sm:$0xf]
        %v4006 = vld [vmem:[%s4002 + $0xc] sm:$0xf]
        %v4007 = vld [vmem:[%s4002 + $0x10] sm:$0xf]
        %v4008 = vld [vmem:[%s4002 + $0x14] sm:$0xf]
        %v4009 = vld [vmem:[%s4002 + $0x18] sm:$0xf]
        %v4010 = vld [vmem:[%s4002 + $0x1c] sm:$0xf]
        %v4011 = vld [vmem:[%s4002 + $0x20] sm:$0xf]
        %v4012 = vld [vmem:[%s4002 + $0x24] sm:$0xf]
        %v4013 = vld [vmem:[%s4002 + $0x28] sm:$0xf]
        %v4014 = vld [vmem:[%s4002 + $0x2c] sm:$0xf]
        %v4015 = vld [vmem:[%s4002 + $0x30] sm:$0xf]
        %v4016 = vld [vmem:[%s4002 + $0x34] sm:$0xf]
        %v4017 = vld [vmem:[%s4002 + $0x38] sm:$0xf]
        %v4018 = vld [vmem:[%s4002 + $0x3c] sm:$0xf]
        %v4024 = vunpack.c.l.b16 %v3997
        %v4025 = vunpack.c.l.b16 %v3998
        %v4026 = vunpack.c.l.b16 %v3999
        %v4027 = vunpack.c.l.b16 %v4000
        %v4028 = vunpack.c.l.b16 %v4001
        %v4029 = vpack.c.b16 %v4025, %v4024
        %v4030 = vpack.c.b16 %v4027, %v4026
        %v4031 = vpack.c.b16 %v4028, %v4028
        %v4033 = vshrl.u32 %v4029, 16
        %v4035 = vshll.u32 %v4029, 16
        %v4037 = vrot.slane %v4035, 1
        %v4038 = vor.u32 %v4033, %v4037
        %v4040 = vshll.u32 %v4030, 16
        %v4042 = vrot.slane %v4040, 1
        %v4043 = vsel %vm1745, %v4038, %v4042
        %v4044 = vshrl.u32 %v4030, 16
        %v4046 = vor.u32 %v4044, %v4042
        %v4048 = vshll.u32 %v4031, 16
        %v4050 = vrot.slane %v4048, 1
        %v4051 = vsel %vm1745, %v4046, %v4050
        %v4070 = vunpack.c.l.b16 %v4003
        %v4071 = vunpack.c.l.b16 %v4004
        %v4072 = vunpack.c.l.b16 %v4005
        %v4073 = vunpack.c.l.b16 %v4006
        %v4074 = vunpack.c.l.b16 %v4007
        %v4075 = vunpack.c.l.b16 %v4008
        %v4076 = vunpack.c.l.b16 %v4009
        %v4077 = vunpack.c.l.b16 %v4010
        %v4078 = vunpack.c.l.b16 %v4011
        %v4079 = vunpack.c.l.b16 %v4012
        %v4080 = vunpack.c.l.b16 %v4013
        %v4081 = vunpack.c.l.b16 %v4014
        %v4082 = vunpack.c.l.b16 %v4015
        %v4083 = vunpack.c.l.b16 %v4016
        %v4084 = vunpack.c.l.b16 %v4017
        %v4085 = vunpack.c.l.b16 %v4018
        %v4086 = vpack.c.b16 %v4071, %v4070
        %v4087 = vpack.c.b16 %v4073, %v4072
        %v4088 = vpack.c.b16 %v4075, %v4074
        %v4089 = vpack.c.b16 %v4077, %v4076
        %v4090 = vpack.c.b16 %v4079, %v4078
        %v4091 = vpack.c.b16 %v4081, %v4080
        %v4092 = vpack.c.b16 %v4083, %v4082
        %v4093 = vpack.c.b16 %v4085, %v4084
        %4102 = vmatprep.subr.bf16.mxu0 0
        %4103 = vmatpush1.bf16.msra.mxu0 %v4093
        %4104 = vmatprep.subr.bf16.mxu0 0
        %4105 = vmatpush1.bf16.msra.mxu0 %v4092
        %4106 = vmatprep.subr.bf16.mxu0 0
        %4107 = vmatpush1.bf16.msra.mxu0 %v4091
        %4108 = vmatprep.subr.bf16.mxu0 0
        %4109 = vmatpush1.bf16.msra.mxu0 %v4090
        %4110 = vmatprep.subr.bf16.mxu0 0
        %4111 = vmatpush1.bf16.msra.mxu0 %v4089
        %4112 = vmatprep.subr.bf16.mxu0 0
        %4113 = vmatpush1.bf16.msra.mxu0 %v4088
        %4114 = vmatprep.subr.bf16.mxu0 0
        %4115 = vmatpush1.bf16.msra.mxu0 %v4087
        %4116 = vmatprep.subr.bf16.mxu0 0
        %4117 = vmatpush1.bf16.msra.mxu0 %v4086
        %4118 = vmatprep.subr.bf16.mxu0 0
        %4119 = vmatpush2.bf16.msra.mxu0 0
        %4120 = vmatprep.subr.bf16.mxu0 0
        %4121 = vmatpush2.bf16.msra.mxu0 0
        %4122 = vmatprep.subr.bf16.mxu0 0
        %4123 = vmatpush2.bf16.msra.mxu0 0
        %4124 = vmatprep.subr.bf16.mxu0 0
        %4125 = vmatpush2.bf16.msra.mxu0 0
        %4126 = vmatprep.subr.bf16.mxu0 0
        %4127 = vmatpush2.bf16.msra.mxu0 0
        %4128 = vmatprep.subr.bf16.mxu0 0
        %4129 = vmatpush2.bf16.msra.mxu0 0
        %4130 = vmatprep.subr.bf16.mxu0 0
        %4131 = vmatpush2.bf16.msra.mxu0 0
        %4132 = vmatprep.subr.bf16.mxu0 0
        %4133 = vmatpush2.bf16.msra.mxu0 0
        %4134 = vmatprep.mubr.bf16.mxu0 0
        %4135 = vmatmul.mubr.bf16.gmra.mxu0 %v4043
        %v4136 = vpop.f32.mrf.mxu0
        %v4137 = vadd.f32 0.0, %v4136
        %v4138 = vpop.f32.mrf.mxu0
        %v4139 = vpop.f32.mrf.mxu0
        %v4140 = vadd.f32 0.0, %v4139
        %v4141 = vpop.f32.mrf.mxu0
        %4142 = vmatprep.mubr.bf16.mxu0 0
        %4143 = vmatmul.mubr.bf16.gmra.mxu0 %v4051
        %v4144 = vpop.f32.mrf.mxu0
        %v4145 = vadd.f32 0.0, %v4144
        %v4146 = vpop.f32.mrf.mxu0
        %v4147 = vpop.f32.mrf.mxu0
        %v4148 = vadd.f32 0.0, %v4147
        %v4149 = vpop.f32.mrf.mxu0
        %4150 = vdwg.mxu0
        %v4151 = vadd.f32 %v3993, %v4137
        %v4152 = vadd.f32 %v3994, %v4140
        %v4153 = vadd.f32 %v3995, %v4145
        %v4154 = vadd.f32 %v3996, %v4148
        %v4155 = vld [vmem:[#allocation4] sm:$0xff]
        %v4156 = vld [vmem:[#allocation4 + $0x8] sm:$0xff]
        %v4157 = vld [vmem:[#allocation4 + $0x10] sm:$0xff]
        %v4158 = vld [vmem:[#allocation4 + $0x18] sm:$0xff]
        %v4159 = vld [vmem:[#allocation4 + $0x20] sm:$0x11]
        %s4160 = scalar_lea.vmem [#allocation13], 256
        %v4161 = vld [vmem:[%s4160] sm:$0xf]
        %v4162 = vld [vmem:[%s4160 + $0x4] sm:$0xf]
        %v4163 = vld [vmem:[%s4160 + $0x8] sm:$0xf]
        %v4164 = vld [vmem:[%s4160 + $0xc] sm:$0xf]
        %v4165 = vld [vmem:[%s4160 + $0x10] sm:$0xf]
        %v4166 = vld [vmem:[%s4160 + $0x14] sm:$0xf]
        %v4167 = vld [vmem:[%s4160 + $0x18] sm:$0xf]
        %v4168 = vld [vmem:[%s4160 + $0x1c] sm:$0xf]
        %v4169 = vld [vmem:[%s4160 + $0x20] sm:$0xf]
        %v4170 = vld [vmem:[%s4160 + $0x24] sm:$0xf]
        %v4171 = vld [vmem:[%s4160 + $0x28] sm:$0xf]
        %v4172 = vld [vmem:[%s4160 + $0x2c] sm:$0xf]
        %v4173 = vld [vmem:[%s4160 + $0x30] sm:$0xf]
        %v4174 = vld [vmem:[%s4160 + $0x34] sm:$0xf]
        %v4175 = vld [vmem:[%s4160 + $0x38] sm:$0xf]
        %v4176 = vld [vmem:[%s4160 + $0x3c] sm:$0xf]
        %v4182 = vunpack.c.l.b16 %v4155
        %v4183 = vunpack.c.h.b16 %v4155
        %v4184 = vunpack.c.l.b16 %v4156
        %v4185 = vunpack.c.h.b16 %v4156
        %v4186 = vunpack.c.l.b16 %v4157
        %v4187 = vunpack.c.h.b16 %v4157
        %v4188 = vunpack.c.l.b16 %v4158
        %v4189 = vunpack.c.h.b16 %v4158
        %v4190 = vunpack.c.l.b16 %v4159
        %v4191 = vunpack.c.h.b16 %v4159
        %v4192 = vpack.c.b16 %v4184, %v4182
        %v4193 = vpack.c.b16 %v4185, %v4183
        %v4194 = vpack.c.b16 %v4188, %v4186
        %v4195 = vpack.c.b16 %v4189, %v4187
        %v4196 = vpack.c.b16 %v4190, %v4190
        %v4197 = vpack.c.b16 %v4191, %v4191
        %v4199 = vshrl.u32 %v4192, 16
        %v4201 = vshll.u32 %v4192, 16
        %v4203 = vrot.slane %v4201, 1
        %v4204 = vor.u32 %v4199, %v4203
        %v4206 = vshll.u32 %v4194, 16
        %v4208 = vrot.slane %v4206, 1
        %v4209 = vsel %vm1745, %v4204, %v4208
        %v4211 = vshrl.u32 %v4193, 16
        %v4213 = vshll.u32 %v4193, 16
        %v4215 = vrot.slane %v4213, 1
        %v4216 = vor.u32 %v4211, %v4215
        %v4218 = vshll.u32 %v4195, 16
        %v4220 = vrot.slane %v4218, 1
        %v4221 = vsel %vm1745, %v4216, %v4220
        %v4222 = vshrl.u32 %v4194, 16
        %v4224 = vor.u32 %v4222, %v4208
        %v4226 = vshll.u32 %v4196, 16
        %v4228 = vrot.slane %v4226, 1
        %v4229 = vsel %vm1745, %v4224, %v4228
        %v4230 = vshrl.u32 %v4195, 16
        %v4232 = vor.u32 %v4230, %v4220
        %v4234 = vshll.u32 %v4197, 16
        %v4236 = vrot.slane %v4234, 1
        %v4237 = vsel %vm1745, %v4232, %v4236
        %4238 = vrot.lane.b32.xlu0 %v4209, 124
        %v4239 = vpop.permute.xlu0 %4238
        %4240 = vrot.lane.b32.xlu0 %v4221, 124
        %v4241 = vpop.permute.xlu0 %4240
        %4242 = vrot.lane.b32.xlu0 %v4229, 124
        %v4243 = vpop.permute.xlu0 %4242
        %4244 = vrot.lane.b32.xlu0 %v4237, 124
        %v4245 = vpop.permute.xlu0 %4244
        %v4246 = vsel %vm1192, %v4239, %v4241
        %v4247 = vsel %vm1192, %v4243, %v4245
        %v4266 = vunpack.c.l.b16 %v4161
        %v4267 = vunpack.c.l.b16 %v4162
        %v4268 = vunpack.c.l.b16 %v4163
        %v4269 = vunpack.c.l.b16 %v4164
        %v4270 = vunpack.c.l.b16 %v4165
        %v4271 = vunpack.c.l.b16 %v4166
        %v4272 = vunpack.c.l.b16 %v4167
        %v4273 = vunpack.c.l.b16 %v4168
        %v4274 = vunpack.c.l.b16 %v4169
        %v4275 = vunpack.c.l.b16 %v4170
        %v4276 = vunpack.c.l.b16 %v4171
        %v4277 = vunpack.c.l.b16 %v4172
        %v4278 = vunpack.c.l.b16 %v4173
        %v4279 = vunpack.c.l.b16 %v4174
        %v4280 = vunpack.c.l.b16 %v4175
        %v4281 = vunpack.c.l.b16 %v4176
        %v4282 = vpack.c.b16 %v4267, %v4266
        %v4283 = vpack.c.b16 %v4269, %v4268
        %v4284 = vpack.c.b16 %v4271, %v4270
        %v4285 = vpack.c.b16 %v4273, %v4272
        %v4286 = vpack.c.b16 %v4275, %v4274
        %v4287 = vpack.c.b16 %v4277, %v4276
        %v4288 = vpack.c.b16 %v4279, %v4278
        %v4289 = vpack.c.b16 %v4281, %v4280
        %4298 = vmatprep.subr.bf16.mxu0 0
        %4299 = vmatpush1.bf16.msra.mxu0 %v4289
        %4300 = vmatprep.subr.bf16.mxu0 0
        %4301 = vmatpush1.bf16.msra.mxu0 %v4288
        %4302 = vmatprep.subr.bf16.mxu0 0
        %4303 = vmatpush1.bf16.msra.mxu0 %v4287
        %4304 = vmatprep.subr.bf16.mxu0 0
        %4305 = vmatpush1.bf16.msra.mxu0 %v4286
        %4306 = vmatprep.subr.bf16.mxu0 0
        %4307 = vmatpush1.bf16.msra.mxu0 %v4285
        %4308 = vmatprep.subr.bf16.mxu0 0
        %4309 = vmatpush1.bf16.msra.mxu0 %v4284
        %4310 = vmatprep.subr.bf16.mxu0 0
        %4311 = vmatpush1.bf16.msra.mxu0 %v4283
        %4312 = vmatprep.subr.bf16.mxu0 0
        %4313 = vmatpush1.bf16.msra.mxu0 %v4282
        %4314 = vmatprep.subr.bf16.mxu0 0
        %4315 = vmatpush2.bf16.msra.mxu0 0
        %4316 = vmatprep.subr.bf16.mxu0 0
        %4317 = vmatpush2.bf16.msra.mxu0 0
        %4318 = vmatprep.subr.bf16.mxu0 0
        %4319 = vmatpush2.bf16.msra.mxu0 0
        %4320 = vmatprep.subr.bf16.mxu0 0
        %4321 = vmatpush2.bf16.msra.mxu0 0
        %4322 = vmatprep.subr.bf16.mxu0 0
        %4323 = vmatpush2.bf16.msra.mxu0 0
        %4324 = vmatprep.subr.bf16.mxu0 0
        %4325 = vmatpush2.bf16.msra.mxu0 0
        %4326 = vmatprep.subr.bf16.mxu0 0
        %4327 = vmatpush2.bf16.msra.mxu0 0
        %4328 = vmatprep.subr.bf16.mxu0 0
        %4329 = vmatpush2.bf16.msra.mxu0 0
        %4330 = vmatprep.mubr.bf16.mxu0 0
        %4331 = vmatmul.mubr.bf16.gmra.mxu0 %v4246
        %v4332 = vpop.f32.mrf.mxu0
        %v4333 = vadd.f32 0.0, %v4332
        %v4334 = vpop.f32.mrf.mxu0
        %v4335 = vpop.f32.mrf.mxu0
        %v4336 = vadd.f32 0.0, %v4335
        %v4337 = vpop.f32.mrf.mxu0
        %4338 = vmatprep.mubr.bf16.mxu0 0
        %4339 = vmatmul.mubr.bf16.gmra.mxu0 %v4247
        %v4340 = vpop.f32.mrf.mxu0
        %v4341 = vadd.f32 0.0, %v4340
        %v4342 = vpop.f32.mrf.mxu0
        %v4343 = vpop.f32.mrf.mxu0
        %v4344 = vadd.f32 0.0, %v4343
        %v4345 = vpop.f32.mrf.mxu0
        %4346 = vdwg.mxu0
        %v4347 = vadd.f32 %v4151, %v4333
        %v4348 = vadd.f32 %v4152, %v4336
        %v4349 = vadd.f32 %v4153, %v4341
        %v4350 = vadd.f32 %v4154, %v4344
        %s4351 = scalar_lea.vmem [#allocation13], 320
        %v4352 = vld [vmem:[%s4351] sm:$0xf]
        %v4353 = vld [vmem:[%s4351 + $0x4] sm:$0xf]
        %v4354 = vld [vmem:[%s4351 + $0x8] sm:$0xf]
        %v4355 = vld [vmem:[%s4351 + $0xc] sm:$0xf]
        %v4356 = vld [vmem:[%s4351 + $0x10] sm:$0xf]
        %v4357 = vld [vmem:[%s4351 + $0x14] sm:$0xf]
        %v4358 = vld [vmem:[%s4351 + $0x18] sm:$0xf]
        %v4359 = vld [vmem:[%s4351 + $0x1c] sm:$0xf]
        %v4360 = vld [vmem:[%s4351 + $0x20] sm:$0xf]
        %v4361 = vld [vmem:[%s4351 + $0x24] sm:$0xf]
        %v4362 = vld [vmem:[%s4351 + $0x28] sm:$0xf]
        %v4363 = vld [vmem:[%s4351 + $0x2c] sm:$0xf]
        %v4364 = vld [vmem:[%s4351 + $0x30] sm:$0xf]
        %v4365 = vld [vmem:[%s4351 + $0x34] sm:$0xf]
        %v4366 = vld [vmem:[%s4351 + $0x38] sm:$0xf]
        %v4367 = vld [vmem:[%s4351 + $0x3c] sm:$0xf]
        %4368 = vrot.lane.b32.xlu0 %v4209, 120
        %v4369 = vpop.permute.xlu0 %4368
        %4370 = vrot.lane.b32.xlu0 %v4221, 120
        %v4371 = vpop.permute.xlu0 %4370
        %4372 = vrot.lane.b32.xlu0 %v4229, 120
        %v4373 = vpop.permute.xlu0 %4372
        %4374 = vrot.lane.b32.xlu0 %v4237, 120
        %v4375 = vpop.permute.xlu0 %4374
        %v4376 = vsel %vm1469, %v4369, %v4371
        %v4377 = vsel %vm1469, %v4373, %v4375
        %v4396 = vunpack.c.l.b16 %v4352
        %v4397 = vunpack.c.l.b16 %v4353
        %v4398 = vunpack.c.l.b16 %v4354
        %v4399 = vunpack.c.l.b16 %v4355
        %v4400 = vunpack.c.l.b16 %v4356
        %v4401 = vunpack.c.l.b16 %v4357
        %v4402 = vunpack.c.l.b16 %v4358
        %v4403 = vunpack.c.l.b16 %v4359
        %v4404 = vunpack.c.l.b16 %v4360
        %v4405 = vunpack.c.l.b16 %v4361
        %v4406 = vunpack.c.l.b16 %v4362
        %v4407 = vunpack.c.l.b16 %v4363
        %v4408 = vunpack.c.l.b16 %v4364
        %v4409 = vunpack.c.l.b16 %v4365
        %v4410 = vunpack.c.l.b16 %v4366
        %v4411 = vunpack.c.l.b16 %v4367
        %v4412 = vpack.c.b16 %v4397, %v4396
        %v4413 = vpack.c.b16 %v4399, %v4398
        %v4414 = vpack.c.b16 %v4401, %v4400
        %v4415 = vpack.c.b16 %v4403, %v4402
        %v4416 = vpack.c.b16 %v4405, %v4404
        %v4417 = vpack.c.b16 %v4407, %v4406
        %v4418 = vpack.c.b16 %v4409, %v4408
        %v4419 = vpack.c.b16 %v4411, %v4410
        %4428 = vmatprep.subr.bf16.mxu0 0
        %4429 = vmatpush1.bf16.msra.mxu0 %v4419
        %4430 = vmatprep.subr.bf16.mxu0 0
        %4431 = vmatpush1.bf16.msra.mxu0 %v4418
        %4432 = vmatprep.subr.bf16.mxu0 0
        %4433 = vmatpush1.bf16.msra.mxu0 %v4417
        %4434 = vmatprep.subr.bf16.mxu0 0
        %4435 = vmatpush1.bf16.msra.mxu0 %v4416
        %4436 = vmatprep.subr.bf16.mxu0 0
        %4437 = vmatpush1.bf16.msra.mxu0 %v4415
        %4438 = vmatprep.subr.bf16.mxu0 0
        %4439 = vmatpush1.bf16.msra.mxu0 %v4414
        %4440 = vmatprep.subr.bf16.mxu0 0
        %4441 = vmatpush1.bf16.msra.mxu0 %v4413
        %4442 = vmatprep.subr.bf16.mxu0 0
        %4443 = vmatpush1.bf16.msra.mxu0 %v4412
        %4444 = vmatprep.subr.bf16.mxu0 0
        %4445 = vmatpush2.bf16.msra.mxu0 0
        %4446 = vmatprep.subr.bf16.mxu0 0
        %4447 = vmatpush2.bf16.msra.mxu0 0
        %4448 = vmatprep.subr.bf16.mxu0 0
        %4449 = vmatpush2.bf16.msra.mxu0 0
        %4450 = vmatprep.subr.bf16.mxu0 0
        %4451 = vmatpush2.bf16.msra.mxu0 0
        %4452 = vmatprep.subr.bf16.mxu0 0
        %4453 = vmatpush2.bf16.msra.mxu0 0
        %4454 = vmatprep.subr.bf16.mxu0 0
        %4455 = vmatpush2.bf16.msra.mxu0 0
        %4456 = vmatprep.subr.bf16.mxu0 0
        %4457 = vmatpush2.bf16.msra.mxu0 0
        %4458 = vmatprep.subr.bf16.mxu0 0
        %4459 = vmatpush2.bf16.msra.mxu0 0
        %4460 = vmatprep.mubr.bf16.mxu0 0
        %4461 = vmatmul.mubr.bf16.gmra.mxu0 %v4376
        %v4462 = vpop.f32.mrf.mxu0
        %v4463 = vadd.f32 0.0, %v4462
        %v4464 = vpop.f32.mrf.mxu0
        %v4465 = vpop.f32.mrf.mxu0
        %v4466 = vadd.f32 0.0, %v4465
        %v4467 = vpop.f32.mrf.mxu0
        %4468 = vmatprep.mubr.bf16.mxu0 0
        %4469 = vmatmul.mubr.bf16.gmra.mxu0 %v4377
        %v4470 = vpop.f32.mrf.mxu0
        %v4471 = vadd.f32 0.0, %v4470
        %v4472 = vpop.f32.mrf.mxu0
        %v4473 = vpop.f32.mrf.mxu0
        %v4474 = vadd.f32 0.0, %v4473
        %v4475 = vpop.f32.mrf.mxu0
        %4476 = vdwg.mxu0
        %v4477 = vadd.f32 %v4347, %v4463
        %v4478 = vadd.f32 %v4348, %v4466
        %v4479 = vadd.f32 %v4349, %v4471
        %v4480 = vadd.f32 %v4350, %v4474
        %v4481 = vld [vmem:[#allocation4] sm:$0xe]
        %s4482 = scalar_lea.vmem [#allocation13], 384
        %v4483 = vld [vmem:[%s4482] sm:$0xf]
        %v4484 = vld [vmem:[%s4482 + $0x4] sm:$0xf]
        %v4485 = vld [vmem:[%s4482 + $0x8] sm:$0xf]
        %v4486 = vld [vmem:[%s4482 + $0xc] sm:$0xf]
        %v4487 = vld [vmem:[%s4482 + $0x10] sm:$0xf]
        %v4488 = vld [vmem:[%s4482 + $0x14] sm:$0xf]
        %v4489 = vld [vmem:[%s4482 + $0x18] sm:$0xf]
        %v4490 = vld [vmem:[%s4482 + $0x1c] sm:$0xf]
        %v4491 = vld [vmem:[%s4482 + $0x20] sm:$0xf]
        %v4492 = vld [vmem:[%s4482 + $0x24] sm:$0xf]
        %v4493 = vld [vmem:[%s4482 + $0x28] sm:$0xf]
        %v4494 = vld [vmem:[%s4482 + $0x2c] sm:$0xf]
        %v4495 = vld [vmem:[%s4482 + $0x30] sm:$0xf]
        %v4496 = vld [vmem:[%s4482 + $0x34] sm:$0xf]
        %v4497 = vld [vmem:[%s4482 + $0x38] sm:$0xf]
        %v4498 = vld [vmem:[%s4482 + $0x3c] sm:$0xf]
        %v4500 = vunpack.c.l.b16 %v4481
        %v4501 = vpack.c.b16 %v4025, %v4500
        %v4502 = vrot.slane %v4501, 1
        %v4503 = vrot.slane %v4030, 1
        %v4504 = vsel %vm2696, %v4502, %v4503
        %v4505 = vrot.slane %v4031, 1
        %v4506 = vsel %vm2696, %v4503, %v4505
        %v4525 = vunpack.c.l.b16 %v4483
        %v4526 = vunpack.c.l.b16 %v4484
        %v4527 = vunpack.c.l.b16 %v4485
        %v4528 = vunpack.c.l.b16 %v4486
        %v4529 = vunpack.c.l.b16 %v4487
        %v4530 = vunpack.c.l.b16 %v4488
        %v4531 = vunpack.c.l.b16 %v4489
        %v4532 = vunpack.c.l.b16 %v4490
        %v4533 = vunpack.c.l.b16 %v4491
        %v4534 = vunpack.c.l.b16 %v4492
        %v4535 = vunpack.c.l.b16 %v4493
        %v4536 = vunpack.c.l.b16 %v4494
        %v4537 = vunpack.c.l.b16 %v4495
        %v4538 = vunpack.c.l.b16 %v4496
        %v4539 = vunpack.c.l.b16 %v4497
        %v4540 = vunpack.c.l.b16 %v4498
        %v4541 = vpack.c.b16 %v4526, %v4525
        %v4542 = vpack.c.b16 %v4528, %v4527
        %v4543 = vpack.c.b16 %v4530, %v4529
        %v4544 = vpack.c.b16 %v4532, %v4531
        %v4545 = vpack.c.b16 %v4534, %v4533
        %v4546 = vpack.c.b16 %v4536, %v4535
        %v4547 = vpack.c.b16 %v4538, %v4537
        %v4548 = vpack.c.b16 %v4540, %v4539
        %4557 = vmatprep.subr.bf16.mxu0 0
        %4558 = vmatpush1.bf16.msra.mxu0 %v4548
        %4559 = vmatprep.subr.bf16.mxu0 0
        %4560 = vmatpush1.bf16.msra.mxu0 %v4547
        %4561 = vmatprep.subr.bf16.mxu0 0
        %4562 = vmatpush1.bf16.msra.mxu0 %v4546
        %4563 = vmatprep.subr.bf16.mxu0 0
        %4564 = vmatpush1.bf16.msra.mxu0 %v4545
        %4565 = vmatprep.subr.bf16.mxu0 0
        %4566 = vmatpush1.bf16.msra.mxu0 %v4544
        %4567 = vmatprep.subr.bf16.mxu0 0
        %4568 = vmatpush1.bf16.msra.mxu0 %v4543
        %4569 = vmatprep.subr.bf16.mxu0 0
        %4570 = vmatpush1.bf16.msra.mxu0 %v4542
        %4571 = vmatprep.subr.bf16.mxu0 0
        %4572 = vmatpush1.bf16.msra.mxu0 %v4541
        %4573 = vmatprep.subr.bf16.mxu0 0
        %4574 = vmatpush2.bf16.msra.mxu0 0
        %4575 = vmatprep.subr.bf16.mxu0 0
        %4576 = vmatpush2.bf16.msra.mxu0 0
        %4577 = vmatprep.subr.bf16.mxu0 0
        %4578 = vmatpush2.bf16.msra.mxu0 0
        %4579 = vmatprep.subr.bf16.mxu0 0
        %4580 = vmatpush2.bf16.msra.mxu0 0
        %4581 = vmatprep.subr.bf16.mxu0 0
        %4582 = vmatpush2.bf16.msra.mxu0 0
        %4583 = vmatprep.subr.bf16.mxu0 0
        %4584 = vmatpush2.bf16.msra.mxu0 0
        %4585 = vmatprep.subr.bf16.mxu0 0
        %4586 = vmatpush2.bf16.msra.mxu0 0
        %4587 = vmatprep.subr.bf16.mxu0 0
        %4588 = vmatpush2.bf16.msra.mxu0 0
        %4589 = vmatprep.mubr.bf16.mxu0 0
        %4590 = vmatmul.mubr.bf16.gmra.mxu0 %v4504
        %v4591 = vpop.f32.mrf.mxu0
        %v4592 = vadd.f32 0.0, %v4591
        %v4593 = vpop.f32.mrf.mxu0
        %v4594 = vpop.f32.mrf.mxu0
        %v4595 = vadd.f32 0.0, %v4594
        %v4596 = vpop.f32.mrf.mxu0
        %4597 = vmatprep.mubr.bf16.mxu0 0
        %4598 = vmatmul.mubr.bf16.gmra.mxu0 %v4506
        %v4599 = vpop.f32.mrf.mxu0
        %v4600 = vadd.f32 0.0, %v4599
        %v4601 = vpop.f32.mrf.mxu0
        %v4602 = vpop.f32.mrf.mxu0
        %v4603 = vadd.f32 0.0, %v4602
        %v4604 = vpop.f32.mrf.mxu0
        %4605 = vdwg.mxu0
        %v4606 = vadd.f32 %v4477, %v4592
        %v4607 = vadd.f32 %v4478, %v4595
        %v4608 = vadd.f32 %v4479, %v4600
        %v4609 = vadd.f32 %v4480, %v4603
        %v4610 = vld [vmem:[#allocation4] sm:$0xee]
        %s4611 = scalar_lea.vmem [#allocation13], 448
        %v4612 = vld [vmem:[%s4611] sm:$0xf]
        %v4613 = vld [vmem:[%s4611 + $0x4] sm:$0xf]
        %v4614 = vld [vmem:[%s4611 + $0x8] sm:$0xf]
        %v4615 = vld [vmem:[%s4611 + $0xc] sm:$0xf]
        %v4616 = vld [vmem:[%s4611 + $0x10] sm:$0xf]
        %v4617 = vld [vmem:[%s4611 + $0x14] sm:$0xf]
        %v4618 = vld [vmem:[%s4611 + $0x18] sm:$0xf]
        %v4619 = vld [vmem:[%s4611 + $0x1c] sm:$0xf]
        %v4620 = vld [vmem:[%s4611 + $0x20] sm:$0xf]
        %v4621 = vld [vmem:[%s4611 + $0x24] sm:$0xf]
        %v4622 = vld [vmem:[%s4611 + $0x28] sm:$0xf]
        %v4623 = vld [vmem:[%s4611 + $0x2c] sm:$0xf]
        %v4624 = vld [vmem:[%s4611 + $0x30] sm:$0xf]
        %v4625 = vld [vmem:[%s4611 + $0x34] sm:$0xf]
        %v4626 = vld [vmem:[%s4611 + $0x38] sm:$0xf]
        %v4627 = vld [vmem:[%s4611 + $0x3c] sm:$0xf]
        %v4629 = vunpack.c.l.b16 %v4610
        %v4630 = vunpack.c.h.b16 %v4610
        %v4631 = vpack.c.b16 %v4184, %v4629
        %v4632 = vpack.c.b16 %v4185, %v4630
        %v4633 = vrot.slane %v4631, 1
        %v4634 = vrot.slane %v4194, 1
        %v4635 = vsel %vm2696, %v4633, %v4634
        %v4636 = vrot.slane %v4632, 1
        %v4637 = vrot.slane %v4195, 1
        %v4638 = vsel %vm2696, %v4636, %v4637
        %v4639 = vrot.slane %v4196, 1
        %v4640 = vsel %vm2696, %v4634, %v4639
        %v4641 = vrot.slane %v4197, 1
        %v4642 = vsel %vm2696, %v4637, %v4641
        %4643 = vrot.lane.b32.xlu0 %v4635, 124
        %v4644 = vpop.permute.xlu0 %4643
        %4645 = vrot.lane.b32.xlu0 %v4638, 124
        %v4646 = vpop.permute.xlu0 %4645
        %4647 = vrot.lane.b32.xlu0 %v4640, 124
        %v4648 = vpop.permute.xlu0 %4647
        %4649 = vrot.lane.b32.xlu0 %v4642, 124
        %v4650 = vpop.permute.xlu0 %4649
        %v4651 = vsel %vm1192, %v4644, %v4646
        %v4652 = vsel %vm1192, %v4648, %v4650
        %v4671 = vunpack.c.l.b16 %v4612
        %v4672 = vunpack.c.l.b16 %v4613
        %v4673 = vunpack.c.l.b16 %v4614
        %v4674 = vunpack.c.l.b16 %v4615
        %v4675 = vunpack.c.l.b16 %v4616
        %v4676 = vunpack.c.l.b16 %v4617
        %v4677 = vunpack.c.l.b16 %v4618
        %v4678 = vunpack.c.l.b16 %v4619
        %v4679 = vunpack.c.l.b16 %v4620
        %v4680 = vunpack.c.l.b16 %v4621
        %v4681 = vunpack.c.l.b16 %v4622
        %v4682 = vunpack.c.l.b16 %v4623
        %v4683 = vunpack.c.l.b16 %v4624
        %v4684 = vunpack.c.l.b16 %v4625
        %v4685 = vunpack.c.l.b16 %v4626
        %v4686 = vunpack.c.l.b16 %v4627
        %v4687 = vpack.c.b16 %v4672, %v4671
        %v4688 = vpack.c.b16 %v4674, %v4673
        %v4689 = vpack.c.b16 %v4676, %v4675
        %v4690 = vpack.c.b16 %v4678, %v4677
        %v4691 = vpack.c.b16 %v4680, %v4679
        %v4692 = vpack.c.b16 %v4682, %v4681
        %v4693 = vpack.c.b16 %v4684, %v4683
        %v4694 = vpack.c.b16 %v4686, %v4685
        %4703 = vmatprep.subr.bf16.mxu0 0
        %4704 = vmatpush1.bf16.msra.mxu0 %v4694
        %4705 = vmatprep.subr.bf16.mxu0 0
        %4706 = vmatpush1.bf16.msra.mxu0 %v4693
        %4707 = vmatprep.subr.bf16.mxu0 0
        %4708 = vmatpush1.bf16.msra.mxu0 %v4692
        %4709 = vmatprep.subr.bf16.mxu0 0
        %4710 = vmatpush1.bf16.msra.mxu0 %v4691
        %4711 = vmatprep.subr.bf16.mxu0 0
        %4712 = vmatpush1.bf16.msra.mxu0 %v4690
        %4713 = vmatprep.subr.bf16.mxu0 0
        %4714 = vmatpush1.bf16.msra.mxu0 %v4689
        %4715 = vmatprep.subr.bf16.mxu0 0
        %4716 = vmatpush1.bf16.msra.mxu0 %v4688
        %4717 = vmatprep.subr.bf16.mxu0 0
        %4718 = vmatpush1.bf16.msra.mxu0 %v4687
        %4719 = vmatprep.subr.bf16.mxu0 0
        %4720 = vmatpush2.bf16.msra.mxu0 0
        %4721 = vmatprep.subr.bf16.mxu0 0
        %4722 = vmatpush2.bf16.msra.mxu0 0
        %4723 = vmatprep.subr.bf16.mxu0 0
        %4724 = vmatpush2.bf16.msra.mxu0 0
        %4725 = vmatprep.subr.bf16.mxu0 0
        %4726 = vmatpush2.bf16.msra.mxu0 0
        %4727 = vmatprep.subr.bf16.mxu0 0
        %4728 = vmatpush2.bf16.msra.mxu0 0
        %4729 = vmatprep.subr.bf16.mxu0 0
        %4730 = vmatpush2.bf16.msra.mxu0 0
        %4731 = vmatprep.subr.bf16.mxu0 0
        %4732 = vmatpush2.bf16.msra.mxu0 0
        %4733 = vmatprep.subr.bf16.mxu0 0
        %4734 = vmatpush2.bf16.msra.mxu0 0
        %4735 = vmatprep.mubr.bf16.mxu0 0
        %4736 = vmatmul.mubr.bf16.gmra.mxu0 %v4651
        %v4737 = vpop.f32.mrf.mxu0
        %v4738 = vadd.f32 0.0, %v4737
        %v4739 = vpop.f32.mrf.mxu0
        %v4740 = vpop.f32.mrf.mxu0
        %v4741 = vadd.f32 0.0, %v4740
        %v4742 = vpop.f32.mrf.mxu0
        %4743 = vmatprep.mubr.bf16.mxu0 0
        %4744 = vmatmul.mubr.bf16.gmra.mxu0 %v4652
        %v4745 = vpop.f32.mrf.mxu0
        %v4746 = vadd.f32 0.0, %v4745
        %v4747 = vpop.f32.mrf.mxu0
        %v4748 = vpop.f32.mrf.mxu0
        %v4749 = vadd.f32 0.0, %v4748
        %v4750 = vpop.f32.mrf.mxu0
        %4751 = vdwg.mxu0
        %v4752 = vadd.f32 %v4606, %v4738
        %v4753 = vadd.f32 %v4607, %v4741
        %v4754 = vadd.f32 %v4608, %v4746
        %v4755 = vadd.f32 %v4609, %v4749
        %s4756 = scalar_lea.vmem [#allocation13], 512
        %v4757 = vld [vmem:[%s4756] sm:$0xf]
        %v4758 = vld [vmem:[%s4756 + $0x4] sm:$0xf]
        %v4759 = vld [vmem:[%s4756 + $0x8] sm:$0xf]
        %v4760 = vld [vmem:[%s4756 + $0xc] sm:$0xf]
        %v4761 = vld [vmem:[%s4756 + $0x10] sm:$0xf]
        %v4762 = vld [vmem:[%s4756 + $0x14] sm:$0xf]
        %v4763 = vld [vmem:[%s4756 + $0x18] sm:$0xf]
        %v4764 = vld [vmem:[%s4756 + $0x1c] sm:$0xf]
        %v4765 = vld [vmem:[%s4756 + $0x20] sm:$0xf]
        %v4766 = vld [vmem:[%s4756 + $0x24] sm:$0xf]
        %v4767 = vld [vmem:[%s4756 + $0x28] sm:$0xf]
        %v4768 = vld [vmem:[%s4756 + $0x2c] sm:$0xf]
        %v4769 = vld [vmem:[%s4756 + $0x30] sm:$0xf]
        %v4770 = vld [vmem:[%s4756 + $0x34] sm:$0xf]
        %v4771 = vld [vmem:[%s4756 + $0x38] sm:$0xf]
        %v4772 = vld [vmem:[%s4756 + $0x3c] sm:$0xf]
        %4773 = vrot.lane.b32.xlu0 %v4635, 120
        %v4774 = vpop.permute.xlu0 %4773
        %4775 = vrot.lane.b32.xlu0 %v4638, 120
        %v4776 = vpop.permute.xlu0 %4775
        %4777 = vrot.lane.b32.xlu0 %v4640, 120
        %v4778 = vpop.permute.xlu0 %4777
        %4779 = vrot.lane.b32.xlu0 %v4642, 120
        %v4780 = vpop.permute.xlu0 %4779
        %v4781 = vsel %vm1469, %v4774, %v4776
        %v4782 = vsel %vm1469, %v4778, %v4780
        %v4801 = vunpack.c.l.b16 %v4757
        %v4802 = vunpack.c.l.b16 %v4758
        %v4803 = vunpack.c.l.b16 %v4759
        %v4804 = vunpack.c.l.b16 %v4760
        %v4805 = vunpack.c.l.b16 %v4761
        %v4806 = vunpack.c.l.b16 %v4762
        %v4807 = vunpack.c.l.b16 %v4763
        %v4808 = vunpack.c.l.b16 %v4764
        %v4809 = vunpack.c.l.b16 %v4765
        %v4810 = vunpack.c.l.b16 %v4766
        %v4811 = vunpack.c.l.b16 %v4767
        %v4812 = vunpack.c.l.b16 %v4768
        %v4813 = vunpack.c.l.b16 %v4769
        %v4814 = vunpack.c.l.b16 %v4770
        %v4815 = vunpack.c.l.b16 %v4771
        %v4816 = vunpack.c.l.b16 %v4772
        %v4817 = vpack.c.b16 %v4802, %v4801
        %v4818 = vpack.c.b16 %v4804, %v4803
        %v4819 = vpack.c.b16 %v4806, %v4805
        %v4820 = vpack.c.b16 %v4808, %v4807
        %v4821 = vpack.c.b16 %v4810, %v4809
        %v4822 = vpack.c.b16 %v4812, %v4811
        %v4823 = vpack.c.b16 %v4814, %v4813
        %v4824 = vpack.c.b16 %v4816, %v4815
        %4833 = vmatprep.subr.bf16.mxu0 0
        %4834 = vmatpush1.bf16.msra.mxu0 %v4824
        %4835 = vmatprep.subr.bf16.mxu0 0
        %4836 = vmatpush1.bf16.msra.mxu0 %v4823
        %4837 = vmatprep.subr.bf16.mxu0 0
        %4838 = vmatpush1.bf16.msra.mxu0 %v4822
        %4839 = vmatprep.subr.bf16.mxu0 0
        %4840 = vmatpush1.bf16.msra.mxu0 %v4821
        %4841 = vmatprep.subr.bf16.mxu0 0
        %4842 = vmatpush1.bf16.msra.mxu0 %v4820
        %4843 = vmatprep.subr.bf16.mxu0 0
        %4844 = vmatpush1.bf16.msra.mxu0 %v4819
        %4845 = vmatprep.subr.bf16.mxu0 0
        %4846 = vmatpush1.bf16.msra.mxu0 %v4818
        %4847 = vmatprep.subr.bf16.mxu0 0
        %4848 = vmatpush1.bf16.msra.mxu0 %v4817
        %4849 = vmatprep.subr.bf16.mxu0 0
        %4850 = vmatpush2.bf16.msra.mxu0 0
        %4851 = vmatprep.subr.bf16.mxu0 0
        %4852 = vmatpush2.bf16.msra.mxu0 0
        %4853 = vmatprep.subr.bf16.mxu0 0
        %4854 = vmatpush2.bf16.msra.mxu0 0
        %4855 = vmatprep.subr.bf16.mxu0 0
        %4856 = vmatpush2.bf16.msra.mxu0 0
        %4857 = vmatprep.subr.bf16.mxu0 0
        %4858 = vmatpush2.bf16.msra.mxu0 0
        %4859 = vmatprep.subr.bf16.mxu0 0
        %4860 = vmatpush2.bf16.msra.mxu0 0
        %4861 = vmatprep.subr.bf16.mxu0 0
        %4862 = vmatpush2.bf16.msra.mxu0 0
        %4863 = vmatprep.subr.bf16.mxu0 0
        %4864 = vmatpush2.bf16.msra.mxu0 0
        %4865 = vmatprep.mubr.bf16.mxu0 0
        %4866 = vmatmul.mubr.bf16.gmra.mxu0 %v4781
        %v4867 = vpop.f32.mrf.mxu0
        %v4868 = vadd.f32 0.0, %v4867
        %v4869 = vpop.f32.mrf.mxu0
        %v4870 = vpop.f32.mrf.mxu0
        %v4871 = vadd.f32 0.0, %v4870
        %v4872 = vpop.f32.mrf.mxu0
        %4873 = vmatprep.mubr.bf16.mxu0 0
        %4874 = vmatmul.mubr.bf16.gmra.mxu0 %v4782
        %v4875 = vpop.f32.mrf.mxu0
        %v4876 = vadd.f32 0.0, %v4875
        %v4877 = vpop.f32.mrf.mxu0
        %v4878 = vpop.f32.mrf.mxu0
        %v4879 = vadd.f32 0.0, %v4878
        %v4880 = vpop.f32.mrf.mxu0
        %4881 = vdwg.mxu0
        %v4882 = vadd.f32 %v4752, %v4868
        %v4883 = vadd.f32 %v4753, %v4871
        %v4884 = vadd.f32 %v4754, %v4876
        %v4885 = vadd.f32 %v4755, %v4879
        %v4886 = vld [vmem:[%s9] sm:$0x1]
        %v4888 = vlaneseq
        %v4889 = vshrl.u32 %v4888, 7
        %v4890 = vsub.s32 0, %v4889
        %v4891 = vrot.slane %v4886, %v4890
        %v4893 = vmul.f32 %v4882, %v4891
        %v4894 = vmul.f32 %v4883, %v4891
        %v4895 = vmul.f32 %v4884, %v4891
        %v4896 = vmul.f32 %v4885, %v4891
        %v4897 = vld [vmem:[%s10] sm:$0x1]
        %v4899 = vlaneseq
        %v4900 = vshrl.u32 %v4899, 7
        %v4901 = vsub.s32 0, %v4900
        %v4902 = vrot.slane %v4897, %v4901
        %v4904 = vadd.f32 %v4893, %v4902
        %v4905 = vadd.f32 %v4894, %v4902
        %v4906 = vadd.f32 %v4895, %v4902
        %v4907 = vadd.f32 %v4896, %v4902
        %v4908 = vmax.f32 %v4904, 0.0
        %v4909 = vmax.f32 %v4905, 0.0
        %v4910 = vmax.f32 %v4906, 0.0
        %v4911 = vmax.f32 %v4907, 0.0
        %4912 = vst [vmem:[%s477] sm:$0xff] %v4908
        %4913 = vst [vmem:[%s477 + $0x8] sm:$0xff] %v4909
        %4914 = vst [vmem:[%s477 + $0x10] sm:$0xff] %v4910
        %4915 = vst [vmem:[%s477 + $0x18] sm:$0xff] %v4911
        %s4916 = sand.u32 %s279, 1
        %s4917 = scalar_lea.sflag [#allocation7], %s4916
        %s4918 = sand.u32 %s279, 1
        %s4919 = smul.addr %s4918, 32
        %s4920 = scalar_lea.vmem [#allocation14], %s4919
        // Predicated region
        $region85: #{tpu_custom_call.1} parent=63 // pred_check
          %p4921 = pneg %p289
        $region86: #{tpu_custom_call.1} parent=63 // pred_check_branch
          %4923 = sbr.rel (%p4921) target = $region88
        $region87: #{tpu_custom_call.1} parent=63 // pred_region
          %s4925 = ssub.s32 512, 512
          %4926 = vsyncadd %s4917, %s4925
          %s4927 = smul.addr %s30, 4
          %s4928 = smul.addr %s4927, 128
          %s4929 = scalar_lea.hbm %s11, %s4928
          %s4930 = sshll.u32 %s4920, 4
          %s4931 = int_to_ptr.vmem [resolvable:$true] %s4930
          %4936 = dma.vmem_to_hbm [thread:$0]  %s4931, 512, %s4929, %s4917, 128, 128, 8
        $region88: #{tpu_custom_call.1} parent=63 // pred_fallthru
          _
      $region64: #{tpu_custom_call.1} parent=5 // pred_fallthru
        _
      %p4937 = scmp.le.s32.totalorder 2, %s25
      // Predicated region
      $region89: #{tpu_custom_call.1} parent=5 // pred_check
        %p4938 = pneg %p4937
      $region90: #{tpu_custom_call.1} parent=5 // pred_check_branch
        %4940 = sbr.rel (%p4938) target = $region92
      $region91: #{tpu_custom_call.1} parent=5 // pred_region
        %s4941 = ssub.s32 %s25, 2
        // Predicated region
        $region93: #{tpu_custom_call.1} parent=91 // pred_check
          %p4942 = pneg %p295
        $region94: #{tpu_custom_call.1} parent=91 // pred_check_branch
          %4944 = sbr.rel (%p4942) target = $region96
        $region95: #{tpu_custom_call.1} parent=91 // pred_region
          %s4945 = sand.u32 %s280, 1
          %s4946 = scalar_lea.sflag [#allocation7], %s4945
          %s4947 = sand.u32 %s280, 1
          %s4948 = smul.addr %s4947, 32
          %s4949 = scalar_lea.vmem [#allocation14], %s4948
          %4950 = dma.done %s4946, 512
        $region96: #{tpu_custom_call.1} parent=91 // pred_fallthru
          _
      $region92: #{tpu_custom_call.1} parent=5 // pred_fallthru
        _
    $region6: #{tpu_custom_call.1} parent=1 // loop_footer
      %s29 = sadd.s32 1, %s25
    $region7: #{tpu_custom_call.1} parent=1 // loop_footer_branch
      %24 = sbr.rel target = $region3
    $region8: #{tpu_custom_call.1} parent=1 // loop_exit
      _
    %4951 = vsyncpa [#allocation6], 1
    %s4952 = scalar_lea.sflag [#allocation6], 1
    %4953 = vsyncpa %s4952, 1
    %4954 = vsyncpa [#allocation9], 1
    %4955 = vsyncpa [#allocation12], 1
    %4956 = vsyncpa [#allocation7], 1
    %s4957 = scalar_lea.sflag [#allocation7], 1
    %4958 = vsyncpa %s4957, 1

</llo_original>
